<compile_context>
chip_gen: v6e
topology: v6e:2x2x1
jax: 0.10.0
libtpu: 0.0.40
codegen_flags: <defaults>
</compile_context>

<pallas_src>
import math

import jax
import jax.numpy as jnp
from jax.experimental import pallas as pl
from jax.experimental.pallas import tpu as pltpu

BN_EPS = 1e-5
VMEM_LIMIT = 64 * 1024 * 1024            # scoped-VMEM cap (tiles budgeted below)
TILE_VMEM_BUDGET = 12 * 1024 * 1024      # double-buffered per-tile working set
ACT_DTYPE = jnp.bfloat16                 # activation storage dtype


# ---------------- tiling helpers ----------------

def _round_up(x, m):
    return ((x + m - 1) // m) * m


def _pad_m(m):
    # Pad M to a multiple of 256 so a lane-dense tile with >= 2 grid steps
    # always exists (v7x has 2 TensorCores; avoid the tm=128 roofline cliff).
    return _round_up(max(int(m), 1), 256)


def _pick_tm(mp, bytes_per_col):
    """Largest tile dividing mp that (a) keeps the double-buffered working set
    under TILE_VMEM_BUDGET and (b) leaves >= 2 parallel grid steps."""
    for tm in (1024, 512, 256, 128):
        if mp % tm:
            continue
        if 2 * tm * bytes_per_col > TILE_VMEM_BUDGET:
            continue
        if mp // tm < 2 and tm > 128:
            continue
        return tm
    return 128


def _cparams(sem):
    return pltpu.CompilerParams(dimension_semantics=sem,
                                vmem_limit_bytes=VMEM_LIMIT)


def _pad_cols(x2d, mp):
    m = x2d.shape[1]
    if mp == m:
        return x2d
    return jnp.pad(x2d, ((0, 0), (0, mp - m)))


def _valid_mask(m, mp):
    return (jnp.arange(mp) < m).astype(jnp.float32).reshape(1, mp)


# ---------------- Pallas kernels ----------------

def _write_stats(st_ref, y_f32):
    # st block is (C, 128): lane 0 = per-tile sum, lane 1 = per-tile sum of
    # squares.  Built in-vreg and written with a single dense (unmasked) store.
    c = y_f32.shape[0]
    s1 = jnp.sum(y_f32, axis=1, keepdims=True)
    s2 = jnp.sum(y_f32 * y_f32, axis=1, keepdims=True)
    lane = jax.lax.broadcasted_iota(jnp.int32, (c, 128), 1)
    st_ref[...] = jnp.where(lane == 0, s1, jnp.where(lane == 1, s2, 0.0))


def _matmul_stats_kernel(x_ref, w_ref, y_ref, st_ref):
    # y = W @ x (lane-dense output) + per-tile BN partial statistics.
    # Used for K1 (conv1) and K2 (conv2 with 27 taps folded into the
    # contraction: x is the (27*Cin, tm) im2col tile, W is (Cout, 27*Cin)).
    acc = jnp.dot(w_ref[...], x_ref[...], preferred_element_type=jnp.float32)
    y_ref[...] = acc.astype(y_ref.dtype)
    _write_stats(st_ref, acc)


def _bnrelu_matmul_stats_kernel(x_ref, w_ref, scale_ref, bias_ref, valid_ref,
                                y_ref, st_ref):
    # Fused BN2+ReLU prologue, conv3 (1x1x1) matmul, BN3 partial statistics.
    h = jnp.maximum(scale_ref[...] * x_ref[...].astype(jnp.float32)
                    + bias_ref[...] * valid_ref[...], 0.0)
    acc = jnp.dot(w_ref[...], h.astype(w_ref.dtype),
                  preferred_element_type=jnp.float32)
    y_ref[...] = acc.astype(y_ref.dtype)
    _write_stats(st_ref, acc)


def _final_add_kernel(y3_ref, sc_ref, scale_ref, bias_ref, valid_ref, o_ref):
    # BN3+ReLU + (identity / pre-reduced maxpool) shortcut + add + final ReLU.
    h = jnp.maximum(scale_ref[...] * y3_ref[...].astype(jnp.float32)
                    + bias_ref[...] * valid_ref[...], 0.0)
    o_ref[...] = jnp.maximum(sc_ref[...].astype(jnp.float32) + h,
                             0.0).astype(o_ref.dtype)


def _final_convsc_kernel(y3_ref, xsc_ref, wsc_ref, scale_ref, bias_ref,
                         valid_ref, o_ref):
    # BN3+ReLU + in-kernel 1x1x1-conv shortcut + add + final ReLU.
    h = jnp.maximum(scale_ref[...] * y3_ref[...].astype(jnp.float32)
                    + bias_ref[...] * valid_ref[...], 0.0)
    sc = jnp.dot(wsc_ref[...], xsc_ref[...], preferred_element_type=jnp.float32)
    o_ref[...] = jnp.maximum(sc + h, 0.0).astype(o_ref.dtype)


# ---------------- Pallas wrappers ----------------

def matmul_stats(x2d, w):
    cin, mp = x2d.shape
    cout = w.shape[0]
    tm = _pick_tm(mp, 2 * (cin + cout))
    nt = mp // tm
    return pl.pallas_call(
        _matmul_stats_kernel,
        out_shape=(jax.ShapeDtypeStruct((cout, mp), ACT_DTYPE),
                   jax.ShapeDtypeStruct((cout, 128 * nt), jnp.float32)),
        grid=(nt,),
        in_specs=[pl.BlockSpec((cin, tm), lambda i: (0, i)),
                  pl.BlockSpec((cout, cin), lambda i: (0, 0))],
        out_specs=(pl.BlockSpec((cout, tm), lambda i: (0, i)),
                   pl.BlockSpec((cout, 128), lambda i: (0, i))),
        compiler_params=_cparams(("parallel",)),
    )(x2d, w)


def bnrelu_matmul_stats(y2, w, scale, bias, valid):
    cin, mp = y2.shape
    cout = w.shape[0]
    tm = _pick_tm(mp, 2 * (cin + cout) + 4)
    nt = mp // tm
    return pl.pallas_call(
        _bnrelu_matmul_stats_kernel,
        out_shape=(jax.ShapeDtypeStruct((cout, mp), ACT_DTYPE),
                   jax.ShapeDtypeStruct((cout, 128 * nt), jnp.float32)),
        grid=(nt,),
        in_specs=[pl.BlockSpec((cin, tm), lambda i: (0, i)),
                  pl.BlockSpec((cout, cin), lambda i: (0, 0)),
                  pl.BlockSpec((cin, 1), lambda i: (0, 0)),
                  pl.BlockSpec((cin, 1), lambda i: (0, 0)),
                  pl.BlockSpec((1, tm), lambda i: (0, i))],
        out_specs=(pl.BlockSpec((cout, tm), lambda i: (0, i)),
                   pl.BlockSpec((cout, 128), lambda i: (0, i))),
        compiler_params=_cparams(("parallel",)),
    )(y2, w, scale, bias, valid)


def final_add(y3, shortcut, scale, bias, valid):
    c, mp = y3.shape
    tm = _pick_tm(mp, 2 * 3 * c + 4)
    nt = mp // tm
    return pl.pallas_call(
        _final_add_kernel,
        out_shape=jax.ShapeDtypeStruct((c, mp), ACT_DTYPE),
        grid=(nt,),
        in_specs=[pl.BlockSpec((c, tm), lambda i: (0, i)),
                  pl.BlockSpec((c, tm), lambda i: (0, i)),
                  pl.BlockSpec((c, 1), lambda i: (0, 0)),
                  pl.BlockSpec((c, 1), lambda i: (0, 0)),
                  pl.BlockSpec((1, tm), lambda i: (0, i))],
        out_specs=pl.BlockSpec((c, tm), lambda i: (0, i)),
        compiler_params=_cparams(("parallel",)),
    )(y3, shortcut, scale, bias, valid)


def final_convsc(y3, xsc, wsc, scale, bias, valid):
    c, mp = y3.shape
    cin = xsc.shape[0]
    tm = _pick_tm(mp, 2 * (2 * c + cin) + 4)
    nt = mp // tm
    return pl.pallas_call(
        _final_convsc_kernel,
        out_shape=jax.ShapeDtypeStruct((c, mp), ACT_DTYPE),
        grid=(nt,),
        in_specs=[pl.BlockSpec((c, tm), lambda i: (0, i)),
                  pl.BlockSpec((cin, tm), lambda i: (0, i)),
                  pl.BlockSpec((c, cin), lambda i: (0, 0)),
                  pl.BlockSpec((c, 1), lambda i: (0, 0)),
                  pl.BlockSpec((c, 1), lambda i: (0, 0)),
                  pl.BlockSpec((1, tm), lambda i: (0, i))],
        out_specs=pl.BlockSpec((c, tm), lambda i: (0, i)),
        compiler_params=_cparams(("parallel",)),
    )(y3, xsc, wsc, scale, bias, valid)


# ---------------- tiny per-channel glue + JAX-side layout plumbing ----------

def _bn_scale_bias(st, count, gamma, beta):
    # st: (C, 128 * n_tiles), lane 0/1 of each 128-block = per-tile sum/sumsq.
    s1 = jnp.sum(st[:, 0::128], axis=1)
    s2 = jnp.sum(st[:, 1::128], axis=1)
    mean = s1 / count
    var = jnp.maximum(s2 / count - mean * mean, 0.0)   # biased var, clamped
    scale = gamma * jax.lax.rsqrt(var + BN_EPS)
    bias = beta - mean * scale
    return scale.reshape(-1, 1), bias.reshape(-1, 1)


def _conv_out_dhw(d, h, w, stride):
    return ((d - 1) // stride + 1, (h - 1) // stride + 1, (w - 1) // stride + 1)


def _conv2_input(y1, scale1, bias1, spatial, stride, mp_out):
    # BN1 + ReLU applied ONCE to conv1's raw output, then im2col: the 27 taps
    # are concatenated along the channel axis -> (27*Cin, Mo) bf16, so conv2
    # becomes a single deep matmul.  Zero halo / zero M padding stays zero.
    bc = y1.shape[0]
    n, d, h, w = spatial
    do, ho, wo = _conv_out_dhw(d, h, w, stride)
    m_in = n * d * h * w
    act = jnp.maximum(scale1 * y1[:, :m_in].astype(jnp.float32) + bias1, 0.0)
    act = act.astype(ACT_DTYPE).reshape(bc, n, d, h, w)
    actp = jnp.pad(act, ((0, 0), (0, 0), (1, 1), (1, 1), (1, 1)))
    slabs = []
    for kd in range(3):
        for kh in range(3):
            for kw in range(3):
                s = actp[:, :,
                         kd:kd + (do - 1) * stride + 1:stride,
                         kh:kh + (ho - 1) * stride + 1:stride,
                         kw:kw + (wo - 1) * stride + 1:stride]
                slabs.append(s.reshape(bc, -1))
    sl = jnp.concatenate(slabs, axis=0)               # (27*bc, Mo)
    mo = n * do * ho * wo
    if mp_out > mo:
        sl = jnp.pad(sl, ((0, 0), (0, mp_out - mo)))
    return sl


def _maxpool_shortcut(x2d, spatial, stride, out_dhw, mp_out):
    # nn.MaxPool3d(kernel=stride, stride=stride), floor mode, pre-reduced to a
    # single (C, Mo) array so K4 stays a 2-input elementwise kernel.
    c = x2d.shape[0]
    n, d, h, w = spatial
    do, ho, wo = out_dhw
    assert (d // stride, h // stride, w // stride) == (do, ho, wo), \
        "maxpool shortcut shape would not match the conv path (PyTorch would fail too)"
    xsp = x2d[:, :n * d * h * w].reshape(c, n, d, h, w)
    xsp = xsp[:, :, :do * stride, :ho * stride, :wo * stride]
    xsp = xsp.reshape(c, n, do, stride, ho, stride, wo, stride)
    sc = jnp.max(xsp, axis=(3, 5, 7)).reshape(c, -1)
    mo = n * do * ho * wo
    if mp_out > mo:
        sc = jnp.pad(sc, ((0, 0), (0, mp_out - mo)))
    return sc


def _strided_x(x2d, spatial, stride, mp_out):
    c = x2d.shape[0]
    n, d, h, w = spatial
    xsp = x2d[:, :n * d * h * w].reshape(c, n, d, h, w)
    xs = xsp[:, :, ::stride, ::stride, ::stride].reshape(c, -1)
    if mp_out > xs.shape[1]:
        xs = jnp.pad(xs, ((0, 0), (0, mp_out - xs.shape[1])))
    return xs


# ---------------- Parameters ----------------

def xavier_uniform(key, shape, fan_in, fan_out):
    bound = math.sqrt(6.0 / (fan_in + fan_out))
    return jax.random.uniform(key, shape, jnp.float32, -bound, bound)


def init_unit(key, last_channel, channel, stride):
    assert channel % 4 == 0
    bc = channel // 4
    keys = jax.random.split(key, 4)
    p = {"stride": stride}
    if last_channel == channel:
        p["shortcut"] = "identity" if stride == 1 else "maxpool"
        p["w_sc"] = None
    else:
        p["shortcut"] = "conv"
        p["w_sc"] = xavier_uniform(keys[0], (channel, last_channel),
                                   last_channel, channel).astype(ACT_DTYPE)
    p["w1"] = xavier_uniform(keys[1], (bc, last_channel),
                             last_channel, bc).astype(ACT_DTYPE)
    w2 = xavier_uniform(keys[2], (bc, bc, 3, 3, 3), bc * 27, bc * 27)
    # Fold taps into the contraction: (Cout, 27*Cin), column = tap*Cin + cin.
    p["w2"] = jnp.transpose(w2, (0, 2, 3, 4, 1)).reshape(bc, 27 * bc).astype(ACT_DTYPE)
    p["w3"] = xavier_uniform(keys[3], (channel, bc), bc, channel).astype(ACT_DTYPE)
    p["g1"], p["b1"] = jnp.ones((bc,), jnp.float32), jnp.zeros((bc,), jnp.float32)
    p["g2"], p["b2"] = jnp.ones((bc,), jnp.float32), jnp.zeros((bc,), jnp.float32)
    p["g3"], p["b3"] = (jnp.ones((channel,), jnp.float32),
                        jnp.zeros((channel,), jnp.float32))
    return p


def init_block(key, last_channel, channel, stride, unit):
    assert channel % 4 == 0
    if unit == 1:
        triples = [(last_channel, channel, stride)]
    else:
        assert unit >= 2
        triples = ([(last_channel, channel, 1)] +
                   [(channel, channel, 1)] * (unit - 2) +
                   [(channel, channel, stride)])
    keys = jax.random.split(key, len(triples))
    return [init_unit(k, c1, c2, s) for k, (c1, c2, s) in zip(keys, triples)]


# ---------------- Forward ----------------

def unit_forward(x2d, spatial, p):
    n, d, h, w = spatial
    stride = p["stride"]
    m_in = n * d * h * w
    do, ho, wo = _conv_out_dhw(d, h, w, stride)
    m_out = n * do * ho * wo
    mp_out = _pad_m(m_out)

    # --- Pallas call 1: conv1 (1x1x1) + BN1 partial stats
    y1, st1 = matmul_stats(x2d, p["w1"])
    scale1, bias1 = _bn_scale_bias(st1, m_in, p["g1"], p["b1"])

    # BN1+ReLU applied once while building conv2's folded im2col input.
    slabs = _conv2_input(y1, scale1, bias1, spatial, stride, mp_out)

    # --- Pallas call 2: conv2 (3x3x3) as one (27*Cin)-deep matmul + BN2 stats
    y2, st2 = matmul_stats(slabs, p["w2"])
    scale2, bias2 = _bn_scale_bias(st2, m_out, p["g2"], p["b2"])

    valid = _valid_mask(m_out, mp_out)

    # --- Pallas call 3: fused BN2+ReLU + conv3 (1x1x1) + BN3 stats
    y3, st3 = bnrelu_matmul_stats(y2, p["w3"], scale2, bias2, valid)
    scale3, bias3 = _bn_scale_bias(st3, m_out, p["g3"], p["b3"])

    # --- Pallas call 4: fused BN3+ReLU + shortcut + residual add + ReLU
    if p["shortcut"] == "identity":
        out = final_add(y3, x2d, scale3, bias3, valid)
    elif p["shortcut"] == "maxpool":
        sc = _maxpool_shortcut(x2d, spatial, stride, (do, ho, wo), mp_out)
        out = final_add(y3, sc, scale3, bias3, valid)
    else:  # 1x1x1 conv shortcut (no bias, no BN), fused into the final kernel
        xsc = _strided_x(x2d, spatial, stride, mp_out)
        out = final_convsc(y3, xsc, p["w_sc"], scale3, bias3, valid)

    return out, (n, do, ho, wo)


def block_forward(x_ncdhw, units_params):
    n, c, d, h, w = x_ncdhw.shape
    x2d = jnp.transpose(x_ncdhw, (1, 0, 2, 3, 4)).reshape(c, -1)
    x2d = _pad_cols(x2d, _pad_m(x2d.shape[1])).astype(ACT_DTYPE)
    spatial = (n, d, h, w)
    for p in units_params:
        x2d, spatial = unit_forward(x2d, spatial, p)
    n, do, ho, wo = spatial
    cout = x2d.shape[0]
    out = x2d[:, :n * do * ho * wo].reshape(cout, n, do, ho, wo)
    # NCDHW f32, like the PyTorch module.
    return jnp.transpose(out, (1, 0, 2, 3, 4)).astype(jnp.float32)


if __name__ == "__main__":
    key = jax.random.PRNGKey(0)
    kx, kp = jax.random.split(key)

    LAST_C, CHANNEL, STRIDE, UNIT = 4, 16, 2, 3
    N, D, H, W = 2, 8, 8, 8

    # PyTorch input layout NCDHW.
    x = jax.random.normal(kx, (N, LAST_C, D, H, W), jnp.float32)
    params = init_block(kp, LAST_C, CHANNEL, STRIDE, UNIT)

    fwd = jax.jit(lambda xx: block_forward(xx, params))
    y = fwd(x)
    jax.block_until_ready(y)

    assert y.shape == (N, CHANNEL, D // STRIDE, H // STRIDE, W // STRIDE), y.shape
    assert bool(jnp.all(jnp.isfinite(y)))
    print("KERNEL_OK")
</pallas_src>

<mosaic_0001>
module attributes {stable_mosaic.version = 11 : i64} {
  func.func @_matmul_stats_kernel(%arg0: i32, %arg1: memref<4x512xbf16, #tpu.memory_space<vmem>>, %arg2: memref<4x4xbf16, #tpu.memory_space<vmem>>, %arg3: memref<4x512xbf16, #tpu.memory_space<vmem>>, %arg4: memref<4x128xf32, #tpu.memory_space<vmem>>) attributes {dimension_semantics = [#tpu.dimension_semantics<parallel>], iteration_bounds = array<i64: 2>, scalar_prefetch = 0 : i64, scratch_operands = 0 : i64, tpu.core_type = #tpu.core_type<tc>, window_params = [{transform_indices = @transform_0, window_bounds = array<i64: 4, 512>}, {pipeline_mode = #tpu.pipeline_mode<synchronous>, transform_indices = @transform_1, window_bounds = array<i64: 4, 4>}, {transform_indices = @transform_2, window_bounds = array<i64: 4, 512>}, {transform_indices = @transform_3, window_bounds = array<i64: 4, 128>}]} {
    %c0 = arith.constant 0 : index
    %c0_0 = arith.constant 0 : index
    %0 = vector.load %arg2[%c0, %c0_0] : memref<4x4xbf16, #tpu.memory_space<vmem>>, vector<4x4xbf16>
    %c0_1 = arith.constant 0 : index
    %c0_2 = arith.constant 0 : index
    %1 = vector.load %arg1[%c0_1, %c0_2] : memref<4x512xbf16, #tpu.memory_space<vmem>>, vector<4x512xbf16>
    %cst = arith.constant dense<0.000000e+00> : vector<4x512xf32>
    %2 = tpu.matmul %0, %1, %cst {dimension_numbers = #tpu.dot_dimension_numbers<[1], [0], [0], [1], [0, 0, 1, 1], [], []>} : vector<4x4xbf16>, vector<4x512xbf16>, vector<4x512xf32> -> vector<4x512xf32>
    %3 = arith.truncf %2 : vector<4x512xf32> to vector<4x512xbf16>
    %c0_3 = arith.constant 0 : index
    %c0_4 = arith.constant 0 : index
    %4 = vector.load %arg3[%c0_3, %c0_4] : memref<4x512xbf16, #tpu.memory_space<vmem>>, vector<4x512xbf16>
    tpu.vector_store %arg3[%c0_3, %c0_4], %3 {strides = array<i32>} : memref<4x512xbf16, #tpu.memory_space<vmem>>, vector<4x512xbf16>,
    %cst_5 = arith.constant dense<0.000000e+00> : vector<4xf32>
    %5 = vector.multi_reduction <add>, %2, %cst_5 [1] : vector<4x512xf32> to vector<4xf32>
    %6 = vector.shape_cast %5 : vector<4xf32> to vector<4x1xf32>
    %7 = arith.mulf %2, %2 : vector<4x512xf32>
    %cst_6 = arith.constant dense<0.000000e+00> : vector<4xf32>
    %8 = vector.multi_reduction <add>, %7, %cst_6 [1] : vector<4x512xf32> to vector<4xf32>
    %9 = vector.shape_cast %8 : vector<4xf32> to vector<4x1xf32>
    %10 = tpu.iota {dimensions = array<i32: 1>} : vector<4x128xi32>
    %c0_i32 = arith.constant 0 : i32
    %11 = vector.broadcast %c0_i32 : i32 to vector<4x128xi32>
    %12 = arith.cmpi eq, %10, %11 : vector<4x128xi32>
    %c1_i32 = arith.constant 1 : i32
    %13 = vector.broadcast %c1_i32 : i32 to vector<4x128xi32>
    %14 = arith.cmpi eq, %10, %13 : vector<4x128xi32>
    %cst_7 = arith.constant 0.000000e+00 : f32
    %15 = vector.shape_cast %9 : vector<4x1xf32> to vector<4x1xf32>
    %16 = vector.broadcast %15 : vector<4x1xf32> to vector<4x128xf32>
    %17 = vector.broadcast %cst_7 : f32 to vector<4x128xf32>
    %18 = arith.select %14, %16, %17 : vector<4x128xi1>, vector<4x128xf32>
    %19 = vector.shape_cast %6 : vector<4x1xf32> to vector<4x1xf32>
    %20 = vector.broadcast %19 : vector<4x1xf32> to vector<4x128xf32>
    %21 = arith.select %12, %20, %18 : vector<4x128xi1>, vector<4x128xf32>
    %c0_8 = arith.constant 0 : index
    %c0_9 = arith.constant 0 : index
    %22 = vector.load %arg4[%c0_8, %c0_9] : memref<4x128xf32, #tpu.memory_space<vmem>>, vector<4x128xf32>
    tpu.vector_store %arg4[%c0_8, %c0_9], %21 {strides = array<i32>} : memref<4x128xf32, #tpu.memory_space<vmem>>, vector<4x128xf32>,
    return
  }
  func.func @transform_0(%arg0: i32) -> (i32, i32) {
    %c0_i32 = arith.constant 0 : i32
    %c0_i32_0 = arith.constant 0 : i32
    return %c0_i32, %arg0 : i32, i32
  }
  func.func @transform_1(%arg0: i32) -> (i32, i32) {
    %c0_i32 = arith.constant 0 : i32
    %c0_i32_0 = arith.constant 0 : i32
    %c0_i32_1 = arith.constant 0 : i32
    return %c0_i32, %c0_i32_0 : i32, i32
  }
  func.func @transform_2(%arg0: i32) -> (i32, i32) {
    %c0_i32 = arith.constant 0 : i32
    %c0_i32_0 = arith.constant 0 : i32
    return %c0_i32, %arg0 : i32, i32
  }
  func.func @transform_3(%arg0: i32) -> (i32, i32) {
    %c0_i32 = arith.constant 0 : i32
    %c0_i32_0 = arith.constant 0 : i32
    return %c0_i32, %arg0 : i32, i32
  }
}

module attributes {stable_mosaic.version = 11 : i64} {
  func.func @_matmul_stats_kernel(%arg0: i32, %arg1: memref<108x512xbf16, #tpu.memory_space<vmem>>, %arg2: memref<4x108xbf16, #tpu.memory_space<vmem>>, %arg3: memref<4x512xbf16, #tpu.memory_space<vmem>>, %arg4: memref<4x128xf32, #tpu.memory_space<vmem>>) attributes {dimension_semantics = [#tpu.dimension_semantics<parallel>], iteration_bounds = array<i64: 2>, scalar_prefetch = 0 : i64, scratch_operands = 0 : i64, tpu.core_type = #tpu.core_type<tc>, window_params = [{transform_indices = @transform_0, window_bounds = array<i64: 108, 512>}, {pipeline_mode = #tpu.pipeline_mode<synchronous>, transform_indices = @transform_1, window_bounds = array<i64: 4, 108>}, {transform_indices = @transform_2, window_bounds = array<i64: 4, 512>}, {transform_indices = @transform_3, window_bounds = array<i64: 4, 128>}]} {
    %c0 = arith.constant 0 : index
    %c0_0 = arith.constant 0 : index
    %0 = vector.load %arg2[%c0, %c0_0] : memref<4x108xbf16, #tpu.memory_space<vmem>>, vector<4x108xbf16>
    %c0_1 = arith.constant 0 : index
    %c0_2 = arith.constant 0 : index
    %1 = vector.load %arg1[%c0_1, %c0_2] : memref<108x512xbf16, #tpu.memory_space<vmem>>, vector<108x512xbf16>
    %cst = arith.constant dense<0.000000e+00> : vector<4x512xf32>
    %2 = tpu.matmul %0, %1, %cst {dimension_numbers = #tpu.dot_dimension_numbers<[1], [0], [0], [1], [0, 0, 1, 1], [], []>} : vector<4x108xbf16>, vector<108x512xbf16>, vector<4x512xf32> -> vector<4x512xf32>
    %3 = arith.truncf %2 : vector<4x512xf32> to vector<4x512xbf16>
    %c0_3 = arith.constant 0 : index
    %c0_4 = arith.constant 0 : index
    %4 = vector.load %arg3[%c0_3, %c0_4] : memref<4x512xbf16, #tpu.memory_space<vmem>>, vector<4x512xbf16>
    tpu.vector_store %arg3[%c0_3, %c0_4], %3 {strides = array<i32>} : memref<4x512xbf16, #tpu.memory_space<vmem>>, vector<4x512xbf16>,
    %cst_5 = arith.constant dense<0.000000e+00> : vector<4xf32>
    %5 = vector.multi_reduction <add>, %2, %cst_5 [1] : vector<4x512xf32> to vector<4xf32>
    %6 = vector.shape_cast %5 : vector<4xf32> to vector<4x1xf32>
    %7 = arith.mulf %2, %2 : vector<4x512xf32>
    %cst_6 = arith.constant dense<0.000000e+00> : vector<4xf32>
    %8 = vector.multi_reduction <add>, %7, %cst_6 [1] : vector<4x512xf32> to vector<4xf32>
    %9 = vector.shape_cast %8 : vector<4xf32> to vector<4x1xf32>
    %10 = tpu.iota {dimensions = array<i32: 1>} : vector<4x128xi32>
    %c0_i32 = arith.constant 0 : i32
    %11 = vector.broadcast %c0_i32 : i32 to vector<4x128xi32>
    %12 = arith.cmpi eq, %10, %11 : vector<4x128xi32>
    %c1_i32 = arith.constant 1 : i32
    %13 = vector.broadcast %c1_i32 : i32 to vector<4x128xi32>
    %14 = arith.cmpi eq, %10, %13 : vector<4x128xi32>
    %cst_7 = arith.constant 0.000000e+00 : f32
    %15 = vector.shape_cast %9 : vector<4x1xf32> to vector<4x1xf32>
    %16 = vector.broadcast %15 : vector<4x1xf32> to vector<4x128xf32>
    %17 = vector.broadcast %cst_7 : f32 to vector<4x128xf32>
    %18 = arith.select %14, %16, %17 : vector<4x128xi1>, vector<4x128xf32>
    %19 = vector.shape_cast %6 : vector<4x1xf32> to vector<4x1xf32>
    %20 = vector.broadcast %19 : vector<4x1xf32> to vector<4x128xf32>
    %21 = arith.select %12, %20, %18 : vector<4x128xi1>, vector<4x128xf32>
    %c0_8 = arith.constant 0 : index
    %c0_9 = arith.constant 0 : index
    %22 = vector.load %arg4[%c0_8, %c0_9] : memref<4x128xf32, #tpu.memory_space<vmem>>, vector<4x128xf32>
    tpu.vector_store %arg4[%c0_8, %c0_9], %21 {strides = array<i32>} : memref<4x128xf32, #tpu.memory_space<vmem>>, vector<4x128xf32>,
    return
  }
  func.func @transform_0(%arg0: i32) -> (i32, i32) {
    %c0_i32 = arith.constant 0 : i32
    %c0_i32_0 = arith.constant 0 : i32
    return %c0_i32, %arg0 : i32, i32
  }
  func.func @transform_1(%arg0: i32) -> (i32, i32) {
    %c0_i32 = arith.constant 0 : i32
    %c0_i32_0 = arith.constant 0 : i32
    %c0_i32_1 = arith.constant 0 : i32
    return %c0_i32, %c0_i32_0 : i32, i32
  }
  func.func @transform_2(%arg0: i32) -> (i32, i32) {
    %c0_i32 = arith.constant 0 : i32
    %c0_i32_0 = arith.constant 0 : i32
    return %c0_i32, %arg0 : i32, i32
  }
  func.func @transform_3(%arg0: i32) -> (i32, i32) {
    %c0_i32 = arith.constant 0 : i32
    %c0_i32_0 = arith.constant 0 : i32
    return %c0_i32, %arg0 : i32, i32
  }
}

module attributes {stable_mosaic.version = 11 : i64} {
  func.func @_bnrelu_matmul_stats_kernel(%arg0: i32, %arg1: memref<4x512xbf16, #tpu.memory_space<vmem>>, %arg2: memref<16x4xbf16, #tpu.memory_space<vmem>>, %arg3: memref<4x1xf32, #tpu.memory_space<vmem>>, %arg4: memref<4x1xf32, #tpu.memory_space<vmem>>, %arg5: memref<1x512xf32, #tpu.memory_space<vmem>>, %arg6: memref<16x512xbf16, #tpu.memory_space<vmem>>, %arg7: memref<16x128xf32, #tpu.memory_space<vmem>>) attributes {dimension_semantics = [#tpu.dimension_semantics<parallel>], iteration_bounds = array<i64: 2>, scalar_prefetch = 0 : i64, scratch_operands = 0 : i64, tpu.core_type = #tpu.core_type<tc>, window_params = [{transform_indices = @transform_0, window_bounds = array<i64: 4, 512>}, {pipeline_mode = #tpu.pipeline_mode<synchronous>, transform_indices = @transform_1, window_bounds = array<i64: 16, 4>}, {pipeline_mode = #tpu.pipeline_mode<synchronous>, transform_indices = @transform_2, window_bounds = array<i64: 4, 1>}, {pipeline_mode = #tpu.pipeline_mode<synchronous>, transform_indices = @transform_3, window_bounds = array<i64: 4, 1>}, {transform_indices = @transform_4, window_bounds = array<i64: 1, 512>}, {transform_indices = @transform_5, window_bounds = array<i64: 16, 512>}, {transform_indices = @transform_6, window_bounds = array<i64: 16, 128>}]} {
    %c0 = arith.constant 0 : index
    %c0_0 = arith.constant 0 : index
    %0 = vector.load %arg3[%c0, %c0_0] : memref<4x1xf32, #tpu.memory_space<vmem>>, vector<4x1xf32>
    %c0_1 = arith.constant 0 : index
    %c0_2 = arith.constant 0 : index
    %1 = vector.load %arg1[%c0_1, %c0_2] : memref<4x512xbf16, #tpu.memory_space<vmem>>, vector<4x512xbf16>
    %2 = arith.extf %1 : vector<4x512xbf16> to vector<4x512xf32>
    %3 = vector.broadcast %0 : vector<4x1xf32> to vector<4x512xf32>
    %4 = arith.mulf %3, %2 : vector<4x512xf32>
    %c0_3 = arith.constant 0 : index
    %c0_4 = arith.constant 0 : index
    %5 = vector.load %arg4[%c0_3, %c0_4] : memref<4x1xf32, #tpu.memory_space<vmem>>, vector<4x1xf32>
    %c0_5 = arith.constant 0 : index
    %c0_6 = arith.constant 0 : index
    %6 = vector.load %arg5[%c0_5, %c0_6] : memref<1x512xf32, #tpu.memory_space<vmem>>, vector<1x512xf32>
    %7 = vector.broadcast %5 : vector<4x1xf32> to vector<4x512xf32>
    %8 = vector.broadcast %6 : vector<1x512xf32> to vector<4x512xf32>
    %9 = arith.mulf %7, %8 : vector<4x512xf32>
    %10 = arith.addf %4, %9 : vector<4x512xf32>
    %cst = arith.constant 0.000000e+00 : f32
    %11 = vector.broadcast %cst : f32 to vector<4x512xf32>
    %12 = arith.maximumf %10, %11 : vector<4x512xf32>
    %c0_7 = arith.constant 0 : index
    %c0_8 = arith.constant 0 : index
    %13 = vector.load %arg2[%c0_7, %c0_8] : memref<16x4xbf16, #tpu.memory_space<vmem>>, vector<16x4xbf16>
    %14 = arith.truncf %12 : vector<4x512xf32> to vector<4x512xbf16>
    %cst_9 = arith.constant dense<0.000000e+00> : vector<16x512xf32>
    %15 = tpu.matmul %13, %14, %cst_9 {dimension_numbers = #tpu.dot_dimension_numbers<[1], [0], [0], [1], [0, 0, 1, 1], [], []>} : vector<16x4xbf16>, vector<4x512xbf16>, vector<16x512xf32> -> vector<16x512xf32>
    %16 = arith.truncf %15 : vector<16x512xf32> to vector<16x512xbf16>
    %c0_10 = arith.constant 0 : index
    %c0_11 = arith.constant 0 : index
    %17 = vector.load %arg6[%c0_10, %c0_11] : memref<16x512xbf16, #tpu.memory_space<vmem>>, vector<16x512xbf16>
    tpu.vector_store %arg6[%c0_10, %c0_11], %16 {strides = array<i32>} : memref<16x512xbf16, #tpu.memory_space<vmem>>, vector<16x512xbf16>,
    %cst_12 = arith.constant dense<0.000000e+00> : vector<16xf32>
    %18 = vector.multi_reduction <add>, %15, %cst_12 [1] : vector<16x512xf32> to vector<16xf32>
    %19 = vector.shape_cast %18 : vector<16xf32> to vector<16x1xf32>
    %20 = arith.mulf %15, %15 : vector<16x512xf32>
    %cst_13 = arith.constant dense<0.000000e+00> : vector<16xf32>
    %21 = vector.multi_reduction <add>, %20, %cst_13 [1] : vector<16x512xf32> to vector<16xf32>
    %22 = vector.shape_cast %21 : vector<16xf32> to vector<16x1xf32>
    %23 = tpu.iota {dimensions = array<i32: 1>} : vector<16x128xi32>
    %c0_i32 = arith.constant 0 : i32
    %24 = vector.broadcast %c0_i32 : i32 to vector<16x128xi32>
    %25 = arith.cmpi eq, %23, %24 : vector<16x128xi32>
    %c1_i32 = arith.constant 1 : i32
    %26 = vector.broadcast %c1_i32 : i32 to vector<16x128xi32>
    %27 = arith.cmpi eq, %23, %26 : vector<16x128xi32>
    %cst_14 = arith.constant 0.000000e+00 : f32
    %28 = vector.shape_cast %22 : vector<16x1xf32> to vector<16x1xf32>
    %29 = vector.broadcast %28 : vector<16x1xf32> to vector<16x128xf32>
    %30 = vector.broadcast %cst_14 : f32 to vector<16x128xf32>
    %31 = arith.select %27, %29, %30 : vector<16x128xi1>, vector<16x128xf32>
    %32 = vector.shape_cast %19 : vector<16x1xf32> to vector<16x1xf32>
    %33 = vector.broadcast %32 : vector<16x1xf32> to vector<16x128xf32>
    %34 = arith.select %25, %33, %31 : vector<16x128xi1>, vector<16x128xf32>
    %c0_15 = arith.constant 0 : index
    %c0_16 = arith.constant 0 : index
    %35 = vector.load %arg7[%c0_15, %c0_16] : memref<16x128xf32, #tpu.memory_space<vmem>>, vector<16x128xf32>
    tpu.vector_store %arg7[%c0_15, %c0_16], %34 {strides = array<i32>} : memref<16x128xf32, #tpu.memory_space<vmem>>, vector<16x128xf32>,
    return
  }
  func.func @transform_0(%arg0: i32) -> (i32, i32) {
    %c0_i32 = arith.constant 0 : i32
    %c0_i32_0 = arith.constant 0 : i32
    return %c0_i32, %arg0 : i32, i32
  }
  func.func @transform_1(%arg0: i32) -> (i32, i32) {
    %c0_i32 = arith.constant 0 : i32
    %c0_i32_0 = arith.constant 0 : i32
    %c0_i32_1 = arith.constant 0 : i32
    return %c0_i32, %c0_i32_0 : i32, i32
  }
  func.func @transform_2(%arg0: i32) -> (i32, i32) {
    %c0_i32 = arith.constant 0 : i32
    %c0_i32_0 = arith.constant 0 : i32
    %c0_i32_1 = arith.constant 0 : i32
    return %c0_i32, %c0_i32_0 : i32, i32
  }
  func.func @transform_3(%arg0: i32) -> (i32, i32) {
    %c0_i32 = arith.constant 0 : i32
    %c0_i32_0 = arith.constant 0 : i32
    %c0_i32_1 = arith.constant 0 : i32
    return %c0_i32, %c0_i32_0 : i32, i32
  }
  func.func @transform_4(%arg0: i32) -> (i32, i32) {
    %c0_i32 = arith.constant 0 : i32
    %c0_i32_0 = arith.constant 0 : i32
    return %c0_i32, %arg0 : i32, i32
  }
  func.func @transform_5(%arg0: i32) -> (i32, i32) {
    %c0_i32 = arith.constant 0 : i32
    %c0_i32_0 = arith.constant 0 : i32
    return %c0_i32, %arg0 : i32, i32
  }
  func.func @transform_6(%arg0: i32) -> (i32, i32) {
    %c0_i32 = arith.constant 0 : i32
    %c0_i32_0 = arith.constant 0 : i32
    return %c0_i32, %arg0 : i32, i32
  }
}

module attributes {stable_mosaic.version = 11 : i64} {
  func.func @_final_convsc_kernel(%arg0: i32, %arg1: memref<16x512xbf16, #tpu.memory_space<vmem>>, %arg2: memref<4x512xbf16, #tpu.memory_space<vmem>>, %arg3: memref<16x4xbf16, #tpu.memory_space<vmem>>, %arg4: memref<16x1xf32, #tpu.memory_space<vmem>>, %arg5: memref<16x1xf32, #tpu.memory_space<vmem>>, %arg6: memref<1x512xf32, #tpu.memory_space<vmem>>, %arg7: memref<16x512xbf16, #tpu.memory_space<vmem>>) attributes {dimension_semantics = [#tpu.dimension_semantics<parallel>], iteration_bounds = array<i64: 2>, scalar_prefetch = 0 : i64, scratch_operands = 0 : i64, tpu.core_type = #tpu.core_type<tc>, window_params = [{transform_indices = @transform_0, window_bounds = array<i64: 16, 512>}, {transform_indices = @transform_1, window_bounds = array<i64: 4, 512>}, {pipeline_mode = #tpu.pipeline_mode<synchronous>, transform_indices = @transform_2, window_bounds = array<i64: 16, 4>}, {pipeline_mode = #tpu.pipeline_mode<synchronous>, transform_indices = @transform_3, window_bounds = array<i64: 16, 1>}, {pipeline_mode = #tpu.pipeline_mode<synchronous>, transform_indices = @transform_4, window_bounds = array<i64: 16, 1>}, {transform_indices = @transform_5, window_bounds = array<i64: 1, 512>}, {transform_indices = @transform_6, window_bounds = array<i64: 16, 512>}]} {
    %c0 = arith.constant 0 : index
    %c0_0 = arith.constant 0 : index
    %0 = vector.load %arg4[%c0, %c0_0] : memref<16x1xf32, #tpu.memory_space<vmem>>, vector<16x1xf32>
    %c0_1 = arith.constant 0 : index
    %c0_2 = arith.constant 0 : index
    %1 = vector.load %arg1[%c0_1, %c0_2] : memref<16x512xbf16, #tpu.memory_space<vmem>>, vector<16x512xbf16>
    %2 = arith.extf %1 : vector<16x512xbf16> to vector<16x512xf32>
    %3 = vector.broadcast %0 : vector<16x1xf32> to vector<16x512xf32>
    %4 = arith.mulf %3, %2 : vector<16x512xf32>
    %c0_3 = arith.constant 0 : index
    %c0_4 = arith.constant 0 : index
    %5 = vector.load %arg5[%c0_3, %c0_4] : memref<16x1xf32, #tpu.memory_space<vmem>>, vector<16x1xf32>
    %c0_5 = arith.constant 0 : index
    %c0_6 = arith.constant 0 : index
    %6 = vector.load %arg6[%c0_5, %c0_6] : memref<1x512xf32, #tpu.memory_space<vmem>>, vector<1x512xf32>
    %7 = vector.broadcast %5 : vector<16x1xf32> to vector<16x512xf32>
    %8 = vector.broadcast %6 : vector<1x512xf32> to vector<16x512xf32>
    %9 = arith.mulf %7, %8 : vector<16x512xf32>
    %10 = arith.addf %4, %9 : vector<16x512xf32>
    %cst = arith.constant 0.000000e+00 : f32
    %11 = vector.broadcast %cst : f32 to vector<16x512xf32>
    %12 = arith.maximumf %10, %11 : vector<16x512xf32>
    %c0_7 = arith.constant 0 : index
    %c0_8 = arith.constant 0 : index
    %13 = vector.load %arg3[%c0_7, %c0_8] : memref<16x4xbf16, #tpu.memory_space<vmem>>, vector<16x4xbf16>
    %c0_9 = arith.constant 0 : index
    %c0_10 = arith.constant 0 : index
    %14 = vector.load %arg2[%c0_9, %c0_10] : memref<4x512xbf16, #tpu.memory_space<vmem>>, vector<4x512xbf16>
    %cst_11 = arith.constant dense<0.000000e+00> : vector<16x512xf32>
    %15 = tpu.matmul %13, %14, %cst_11 {dimension_numbers = #tpu.dot_dimension_numbers<[1], [0], [0], [1], [0, 0, 1, 1], [], []>} : vector<16x4xbf16>, vector<4x512xbf16>, vector<16x512xf32> -> vector<16x512xf32>
    %16 = arith.addf %15, %12 : vector<16x512xf32>
    %cst_12 = arith.constant 0.000000e+00 : f32
    %17 = vector.broadcast %cst_12 : f32 to vector<16x512xf32>
    %18 = arith.maximumf %16, %17 : vector<16x512xf32>
    %19 = arith.truncf %18 : vector<16x512xf32> to vector<16x512xbf16>
    %c0_13 = arith.constant 0 : index
    %c0_14 = arith.constant 0 : index
    %20 = vector.load %arg7[%c0_13, %c0_14] : memref<16x512xbf16, #tpu.memory_space<vmem>>, vector<16x512xbf16>
    tpu.vector_store %arg7[%c0_13, %c0_14], %19 {strides = array<i32>} : memref<16x512xbf16, #tpu.memory_space<vmem>>, vector<16x512xbf16>,
    return
  }
  func.func @transform_0(%arg0: i32) -> (i32, i32) {
    %c0_i32 = arith.constant 0 : i32
    %c0_i32_0 = arith.constant 0 : i32
    return %c0_i32, %arg0 : i32, i32
  }
  func.func @transform_1(%arg0: i32) -> (i32, i32) {
    %c0_i32 = arith.constant 0 : i32
    %c0_i32_0 = arith.constant 0 : i32
    return %c0_i32, %arg0 : i32, i32
  }
  func.func @transform_2(%arg0: i32) -> (i32, i32) {
    %c0_i32 = arith.constant 0 : i32
    %c0_i32_0 = arith.constant 0 : i32
    %c0_i32_1 = arith.constant 0 : i32
    return %c0_i32, %c0_i32_0 : i32, i32
  }
  func.func @transform_3(%arg0: i32) -> (i32, i32) {
    %c0_i32 = arith.constant 0 : i32
    %c0_i32_0 = arith.constant 0 : i32
    %c0_i32_1 = arith.constant 0 : i32
    return %c0_i32, %c0_i32_0 : i32, i32
  }
  func.func @transform_4(%arg0: i32) -> (i32, i32) {
    %c0_i32 = arith.constant 0 : i32
    %c0_i32_0 = arith.constant 0 : i32
    %c0_i32_1 = arith.constant 0 : i32
    return %c0_i32, %c0_i32_0 : i32, i32
  }
  func.func @transform_5(%arg0: i32) -> (i32, i32) {
    %c0_i32 = arith.constant 0 : i32
    %c0_i32_0 = arith.constant 0 : i32
    return %c0_i32, %arg0 : i32, i32
  }
  func.func @transform_6(%arg0: i32) -> (i32, i32) {
    %c0_i32 = arith.constant 0 : i32
    %c0_i32_0 = arith.constant 0 : i32
    return %c0_i32, %arg0 : i32, i32
  }
}

module attributes {stable_mosaic.version = 11 : i64} {
  func.func @_matmul_stats_kernel(%arg0: i32, %arg1: memref<16x512xbf16, #tpu.memory_space<vmem>>, %arg2: memref<4x16xbf16, #tpu.memory_space<vmem>>, %arg3: memref<4x512xbf16, #tpu.memory_space<vmem>>, %arg4: memref<4x128xf32, #tpu.memory_space<vmem>>) attributes {dimension_semantics = [#tpu.dimension_semantics<parallel>], iteration_bounds = array<i64: 2>, scalar_prefetch = 0 : i64, scratch_operands = 0 : i64, tpu.core_type = #tpu.core_type<tc>, window_params = [{transform_indices = @transform_0, window_bounds = array<i64: 16, 512>}, {pipeline_mode = #tpu.pipeline_mode<synchronous>, transform_indices = @transform_1, window_bounds = array<i64: 4, 16>}, {transform_indices = @transform_2, window_bounds = array<i64: 4, 512>}, {transform_indices = @transform_3, window_bounds = array<i64: 4, 128>}]} {
    %c0 = arith.constant 0 : index
    %c0_0 = arith.constant 0 : index
    %0 = vector.load %arg2[%c0, %c0_0] : memref<4x16xbf16, #tpu.memory_space<vmem>>, vector<4x16xbf16>
    %c0_1 = arith.constant 0 : index
    %c0_2 = arith.constant 0 : index
    %1 = vector.load %arg1[%c0_1, %c0_2] : memref<16x512xbf16, #tpu.memory_space<vmem>>, vector<16x512xbf16>
    %cst = arith.constant dense<0.000000e+00> : vector<4x512xf32>
    %2 = tpu.matmul %0, %1, %cst {dimension_numbers = #tpu.dot_dimension_numbers<[1], [0], [0], [1], [0, 0, 1, 1], [], []>} : vector<4x16xbf16>, vector<16x512xbf16>, vector<4x512xf32> -> vector<4x512xf32>
    %3 = arith.truncf %2 : vector<4x512xf32> to vector<4x512xbf16>
    %c0_3 = arith.constant 0 : index
    %c0_4 = arith.constant 0 : index
    %4 = vector.load %arg3[%c0_3, %c0_4] : memref<4x512xbf16, #tpu.memory_space<vmem>>, vector<4x512xbf16>
    tpu.vector_store %arg3[%c0_3, %c0_4], %3 {strides = array<i32>} : memref<4x512xbf16, #tpu.memory_space<vmem>>, vector<4x512xbf16>,
    %cst_5 = arith.constant dense<0.000000e+00> : vector<4xf32>
    %5 = vector.multi_reduction <add>, %2, %cst_5 [1] : vector<4x512xf32> to vector<4xf32>
    %6 = vector.shape_cast %5 : vector<4xf32> to vector<4x1xf32>
    %7 = arith.mulf %2, %2 : vector<4x512xf32>
    %cst_6 = arith.constant dense<0.000000e+00> : vector<4xf32>
    %8 = vector.multi_reduction <add>, %7, %cst_6 [1] : vector<4x512xf32> to vector<4xf32>
    %9 = vector.shape_cast %8 : vector<4xf32> to vector<4x1xf32>
    %10 = tpu.iota {dimensions = array<i32: 1>} : vector<4x128xi32>
    %c0_i32 = arith.constant 0 : i32
    %11 = vector.broadcast %c0_i32 : i32 to vector<4x128xi32>
    %12 = arith.cmpi eq, %10, %11 : vector<4x128xi32>
    %c1_i32 = arith.constant 1 : i32
    %13 = vector.broadcast %c1_i32 : i32 to vector<4x128xi32>
    %14 = arith.cmpi eq, %10, %13 : vector<4x128xi32>
    %cst_7 = arith.constant 0.000000e+00 : f32
    %15 = vector.shape_cast %9 : vector<4x1xf32> to vector<4x1xf32>
    %16 = vector.broadcast %15 : vector<4x1xf32> to vector<4x128xf32>
    %17 = vector.broadcast %cst_7 : f32 to vector<4x128xf32>
    %18 = arith.select %14, %16, %17 : vector<4x128xi1>, vector<4x128xf32>
    %19 = vector.shape_cast %6 : vector<4x1xf32> to vector<4x1xf32>
    %20 = vector.broadcast %19 : vector<4x1xf32> to vector<4x128xf32>
    %21 = arith.select %12, %20, %18 : vector<4x128xi1>, vector<4x128xf32>
    %c0_8 = arith.constant 0 : index
    %c0_9 = arith.constant 0 : index
    %22 = vector.load %arg4[%c0_8, %c0_9] : memref<4x128xf32, #tpu.memory_space<vmem>>, vector<4x128xf32>
    tpu.vector_store %arg4[%c0_8, %c0_9], %21 {strides = array<i32>} : memref<4x128xf32, #tpu.memory_space<vmem>>, vector<4x128xf32>,
    return
  }
  func.func @transform_0(%arg0: i32) -> (i32, i32) {
    %c0_i32 = arith.constant 0 : i32
    %c0_i32_0 = arith.constant 0 : i32
    return %c0_i32, %arg0 : i32, i32
  }
  func.func @transform_1(%arg0: i32) -> (i32, i32) {
    %c0_i32 = arith.constant 0 : i32
    %c0_i32_0 = arith.constant 0 : i32
    %c0_i32_1 = arith.constant 0 : i32
    return %c0_i32, %c0_i32_0 : i32, i32
  }
  func.func @transform_2(%arg0: i32) -> (i32, i32) {
    %c0_i32 = arith.constant 0 : i32
    %c0_i32_0 = arith.constant 0 : i32
    return %c0_i32, %arg0 : i32, i32
  }
  func.func @transform_3(%arg0: i32) -> (i32, i32) {
    %c0_i32 = arith.constant 0 : i32
    %c0_i32_0 = arith.constant 0 : i32
    return %c0_i32, %arg0 : i32, i32
  }
}

module attributes {stable_mosaic.version = 11 : i64} {
  func.func @_final_add_kernel(%arg0: i32, %arg1: memref<16x512xbf16, #tpu.memory_space<vmem>>, %arg2: memref<16x512xbf16, #tpu.memory_space<vmem>>, %arg3: memref<16x1xf32, #tpu.memory_space<vmem>>, %arg4: memref<16x1xf32, #tpu.memory_space<vmem>>, %arg5: memref<1x512xf32, #tpu.memory_space<vmem>>, %arg6: memref<16x512xbf16, #tpu.memory_space<vmem>>) attributes {dimension_semantics = [#tpu.dimension_semantics<parallel>], iteration_bounds = array<i64: 2>, scalar_prefetch = 0 : i64, scratch_operands = 0 : i64, tpu.core_type = #tpu.core_type<tc>, window_params = [{transform_indices = @transform_0, window_bounds = array<i64: 16, 512>}, {transform_indices = @transform_1, window_bounds = array<i64: 16, 512>}, {pipeline_mode = #tpu.pipeline_mode<synchronous>, transform_indices = @transform_2, window_bounds = array<i64: 16, 1>}, {pipeline_mode = #tpu.pipeline_mode<synchronous>, transform_indices = @transform_3, window_bounds = array<i64: 16, 1>}, {transform_indices = @transform_4, window_bounds = array<i64: 1, 512>}, {transform_indices = @transform_5, window_bounds = array<i64: 16, 512>}]} {
    %c0 = arith.constant 0 : index
    %c0_0 = arith.constant 0 : index
    %0 = vector.load %arg3[%c0, %c0_0] : memref<16x1xf32, #tpu.memory_space<vmem>>, vector<16x1xf32>
    %c0_1 = arith.constant 0 : index
    %c0_2 = arith.constant 0 : index
    %1 = vector.load %arg1[%c0_1, %c0_2] : memref<16x512xbf16, #tpu.memory_space<vmem>>, vector<16x512xbf16>
    %2 = arith.extf %1 : vector<16x512xbf16> to vector<16x512xf32>
    %3 = vector.broadcast %0 : vector<16x1xf32> to vector<16x512xf32>
    %4 = arith.mulf %3, %2 : vector<16x512xf32>
    %c0_3 = arith.constant 0 : index
    %c0_4 = arith.constant 0 : index
    %5 = vector.load %arg4[%c0_3, %c0_4] : memref<16x1xf32, #tpu.memory_space<vmem>>, vector<16x1xf32>
    %c0_5 = arith.constant 0 : index
    %c0_6 = arith.constant 0 : index
    %6 = vector.load %arg5[%c0_5, %c0_6] : memref<1x512xf32, #tpu.memory_space<vmem>>, vector<1x512xf32>
    %7 = vector.broadcast %5 : vector<16x1xf32> to vector<16x512xf32>
    %8 = vector.broadcast %6 : vector<1x512xf32> to vector<16x512xf32>
    %9 = arith.mulf %7, %8 : vector<16x512xf32>
    %10 = arith.addf %4, %9 : vector<16x512xf32>
    %cst = arith.constant 0.000000e+00 : f32
    %11 = vector.broadcast %cst : f32 to vector<16x512xf32>
    %12 = arith.maximumf %10, %11 : vector<16x512xf32>
    %c0_7 = arith.constant 0 : index
    %c0_8 = arith.constant 0 : index
    %13 = vector.load %arg2[%c0_7, %c0_8] : memref<16x512xbf16, #tpu.memory_space<vmem>>, vector<16x512xbf16>
    %14 = arith.extf %13 : vector<16x512xbf16> to vector<16x512xf32>
    %15 = arith.addf %14, %12 : vector<16x512xf32>
    %cst_9 = arith.constant 0.000000e+00 : f32
    %16 = vector.broadcast %cst_9 : f32 to vector<16x512xf32>
    %17 = arith.maximumf %15, %16 : vector<16x512xf32>
    %18 = arith.truncf %17 : vector<16x512xf32> to vector<16x512xbf16>
    %c0_10 = arith.constant 0 : index
    %c0_11 = arith.constant 0 : index
    %19 = vector.load %arg6[%c0_10, %c0_11] : memref<16x512xbf16, #tpu.memory_space<vmem>>, vector<16x512xbf16>
    tpu.vector_store %arg6[%c0_10, %c0_11], %18 {strides = array<i32>} : memref<16x512xbf16, #tpu.memory_space<vmem>>, vector<16x512xbf16>,
    return
  }
  func.func @transform_0(%arg0: i32) -> (i32, i32) {
    %c0_i32 = arith.constant 0 : i32
    %c0_i32_0 = arith.constant 0 : i32
    return %c0_i32, %arg0 : i32, i32
  }
  func.func @transform_1(%arg0: i32) -> (i32, i32) {
    %c0_i32 = arith.constant 0 : i32
    %c0_i32_0 = arith.constant 0 : i32
    return %c0_i32, %arg0 : i32, i32
  }
  func.func @transform_2(%arg0: i32) -> (i32, i32) {
    %c0_i32 = arith.constant 0 : i32
    %c0_i32_0 = arith.constant 0 : i32
    %c0_i32_1 = arith.constant 0 : i32
    return %c0_i32, %c0_i32_0 : i32, i32
  }
  func.func @transform_3(%arg0: i32) -> (i32, i32) {
    %c0_i32 = arith.constant 0 : i32
    %c0_i32_0 = arith.constant 0 : i32
    %c0_i32_1 = arith.constant 0 : i32
    return %c0_i32, %c0_i32_0 : i32, i32
  }
  func.func @transform_4(%arg0: i32) -> (i32, i32) {
    %c0_i32 = arith.constant 0 : i32
    %c0_i32_0 = arith.constant 0 : i32
    return %c0_i32, %arg0 : i32, i32
  }
  func.func @transform_5(%arg0: i32) -> (i32, i32) {
    %c0_i32 = arith.constant 0 : i32
    %c0_i32_0 = arith.constant 0 : i32
    return %c0_i32, %arg0 : i32, i32
  }
}

module attributes {stable_mosaic.version = 11 : i64} {
  func.func @_matmul_stats_kernel(%arg0: i32, %arg1: memref<108x128xbf16, #tpu.memory_space<vmem>>, %arg2: memref<4x108xbf16, #tpu.memory_space<vmem>>, %arg3: memref<4x128xbf16, #tpu.memory_space<vmem>>, %arg4: memref<4x128xf32, #tpu.memory_space<vmem>>) attributes {dimension_semantics = [#tpu.dimension_semantics<parallel>], iteration_bounds = array<i64: 2>, scalar_prefetch = 0 : i64, scratch_operands = 0 : i64, tpu.core_type = #tpu.core_type<tc>, window_params = [{transform_indices = @transform_0, window_bounds = array<i64: 108, 128>}, {pipeline_mode = #tpu.pipeline_mode<synchronous>, transform_indices = @transform_1, window_bounds = array<i64: 4, 108>}, {transform_indices = @transform_2, window_bounds = array<i64: 4, 128>}, {transform_indices = @transform_3, window_bounds = array<i64: 4, 128>}]} {
    %c0 = arith.constant 0 : index
    %c0_0 = arith.constant 0 : index
    %0 = vector.load %arg2[%c0, %c0_0] : memref<4x108xbf16, #tpu.memory_space<vmem>>, vector<4x108xbf16>
    %c0_1 = arith.constant 0 : index
    %c0_2 = arith.constant 0 : index
    %1 = vector.load %arg1[%c0_1, %c0_2] : memref<108x128xbf16, #tpu.memory_space<vmem>>, vector<108x128xbf16>
    %cst = arith.constant dense<0.000000e+00> : vector<4x128xf32>
    %2 = tpu.matmul %0, %1, %cst {dimension_numbers = #tpu.dot_dimension_numbers<[1], [0], [0], [1], [0, 0, 1, 1], [], []>} : vector<4x108xbf16>, vector<108x128xbf16>, vector<4x128xf32> -> vector<4x128xf32>
    %3 = arith.truncf %2 : vector<4x128xf32> to vector<4x128xbf16>
    %c0_3 = arith.constant 0 : index
    %c0_4 = arith.constant 0 : index
    %4 = vector.load %arg3[%c0_3, %c0_4] : memref<4x128xbf16, #tpu.memory_space<vmem>>, vector<4x128xbf16>
    tpu.vector_store %arg3[%c0_3, %c0_4], %3 {strides = array<i32>} : memref<4x128xbf16, #tpu.memory_space<vmem>>, vector<4x128xbf16>,
    %cst_5 = arith.constant dense<0.000000e+00> : vector<4xf32>
    %5 = vector.multi_reduction <add>, %2, %cst_5 [1] : vector<4x128xf32> to vector<4xf32>
    %6 = vector.shape_cast %5 : vector<4xf32> to vector<4x1xf32>
    %7 = arith.mulf %2, %2 : vector<4x128xf32>
    %cst_6 = arith.constant dense<0.000000e+00> : vector<4xf32>
    %8 = vector.multi_reduction <add>, %7, %cst_6 [1] : vector<4x128xf32> to vector<4xf32>
    %9 = vector.shape_cast %8 : vector<4xf32> to vector<4x1xf32>
    %10 = tpu.iota {dimensions = array<i32: 1>} : vector<4x128xi32>
    %c0_i32 = arith.constant 0 : i32
    %11 = vector.broadcast %c0_i32 : i32 to vector<4x128xi32>
    %12 = arith.cmpi eq, %10, %11 : vector<4x128xi32>
    %c1_i32 = arith.constant 1 : i32
    %13 = vector.broadcast %c1_i32 : i32 to vector<4x128xi32>
    %14 = arith.cmpi eq, %10, %13 : vector<4x128xi32>
    %cst_7 = arith.constant 0.000000e+00 : f32
    %15 = vector.shape_cast %9 : vector<4x1xf32> to vector<4x1xf32>
    %16 = vector.broadcast %15 : vector<4x1xf32> to vector<4x128xf32>
    %17 = vector.broadcast %cst_7 : f32 to vector<4x128xf32>
    %18 = arith.select %14, %16, %17 : vector<4x128xi1>, vector<4x128xf32>
    %19 = vector.shape_cast %6 : vector<4x1xf32> to vector<4x1xf32>
    %20 = vector.broadcast %19 : vector<4x1xf32> to vector<4x128xf32>
    %21 = arith.select %12, %20, %18 : vector<4x128xi1>, vector<4x128xf32>
    %c0_8 = arith.constant 0 : index
    %c0_9 = arith.constant 0 : index
    %22 = vector.load %arg4[%c0_8, %c0_9] : memref<4x128xf32, #tpu.memory_space<vmem>>, vector<4x128xf32>
    tpu.vector_store %arg4[%c0_8, %c0_9], %21 {strides = array<i32>} : memref<4x128xf32, #tpu.memory_space<vmem>>, vector<4x128xf32>,
    return
  }
  func.func @transform_0(%arg0: i32) -> (i32, i32) {
    %c0_i32 = arith.constant 0 : i32
    %c0_i32_0 = arith.constant 0 : i32
    return %c0_i32, %arg0 : i32, i32
  }
  func.func @transform_1(%arg0: i32) -> (i32, i32) {
    %c0_i32 = arith.constant 0 : i32
    %c0_i32_0 = arith.constant 0 : i32
    %c0_i32_1 = arith.constant 0 : i32
    return %c0_i32, %c0_i32_0 : i32, i32
  }
  func.func @transform_2(%arg0: i32) -> (i32, i32) {
    %c0_i32 = arith.constant 0 : i32
    %c0_i32_0 = arith.constant 0 : i32
    return %c0_i32, %arg0 : i32, i32
  }
  func.func @transform_3(%arg0: i32) -> (i32, i32) {
    %c0_i32 = arith.constant 0 : i32
    %c0_i32_0 = arith.constant 0 : i32
    return %c0_i32, %arg0 : i32, i32
  }
}

module attributes {stable_mosaic.version = 11 : i64} {
  func.func @_bnrelu_matmul_stats_kernel(%arg0: i32, %arg1: memref<4x128xbf16, #tpu.memory_space<vmem>>, %arg2: memref<16x4xbf16, #tpu.memory_space<vmem>>, %arg3: memref<4x1xf32, #tpu.memory_space<vmem>>, %arg4: memref<4x1xf32, #tpu.memory_space<vmem>>, %arg5: memref<1x128xf32, #tpu.memory_space<vmem>>, %arg6: memref<16x128xbf16, #tpu.memory_space<vmem>>, %arg7: memref<16x128xf32, #tpu.memory_space<vmem>>) attributes {dimension_semantics = [#tpu.dimension_semantics<parallel>], iteration_bounds = array<i64: 2>, scalar_prefetch = 0 : i64, scratch_operands = 0 : i64, tpu.core_type = #tpu.core_type<tc>, window_params = [{transform_indices = @transform_0, window_bounds = array<i64: 4, 128>}, {pipeline_mode = #tpu.pipeline_mode<synchronous>, transform_indices = @transform_1, window_bounds = array<i64: 16, 4>}, {pipeline_mode = #tpu.pipeline_mode<synchronous>, transform_indices = @transform_2, window_bounds = array<i64: 4, 1>}, {pipeline_mode = #tpu.pipeline_mode<synchronous>, transform_indices = @transform_3, window_bounds = array<i64: 4, 1>}, {transform_indices = @transform_4, window_bounds = array<i64: 1, 128>}, {transform_indices = @transform_5, window_bounds = array<i64: 16, 128>}, {transform_indices = @transform_6, window_bounds = array<i64: 16, 128>}]} {
    %c0 = arith.constant 0 : index
    %c0_0 = arith.constant 0 : index
    %0 = vector.load %arg3[%c0, %c0_0] : memref<4x1xf32, #tpu.memory_space<vmem>>, vector<4x1xf32>
    %c0_1 = arith.constant 0 : index
    %c0_2 = arith.constant 0 : index
    %1 = vector.load %arg1[%c0_1, %c0_2] : memref<4x128xbf16, #tpu.memory_space<vmem>>, vector<4x128xbf16>
    %2 = arith.extf %1 : vector<4x128xbf16> to vector<4x128xf32>
    %3 = vector.broadcast %0 : vector<4x1xf32> to vector<4x128xf32>
    %4 = arith.mulf %3, %2 : vector<4x128xf32>
    %c0_3 = arith.constant 0 : index
    %c0_4 = arith.constant 0 : index
    %5 = vector.load %arg4[%c0_3, %c0_4] : memref<4x1xf32, #tpu.memory_space<vmem>>, vector<4x1xf32>
    %c0_5 = arith.constant 0 : index
    %c0_6 = arith.constant 0 : index
    %6 = vector.load %arg5[%c0_5, %c0_6] : memref<1x128xf32, #tpu.memory_space<vmem>>, vector<1x128xf32>
    %7 = vector.broadcast %5 : vector<4x1xf32> to vector<4x128xf32>
    %8 = vector.broadcast %6 : vector<1x128xf32> to vector<4x128xf32>
    %9 = arith.mulf %7, %8 : vector<4x128xf32>
    %10 = arith.addf %4, %9 : vector<4x128xf32>
    %cst = arith.constant 0.000000e+00 : f32
    %11 = vector.broadcast %cst : f32 to vector<4x128xf32>
    %12 = arith.maximumf %10, %11 : vector<4x128xf32>
    %c0_7 = arith.constant 0 : index
    %c0_8 = arith.constant 0 : index
    %13 = vector.load %arg2[%c0_7, %c0_8] : memref<16x4xbf16, #tpu.memory_space<vmem>>, vector<16x4xbf16>
    %14 = arith.truncf %12 : vector<4x128xf32> to vector<4x128xbf16>
    %cst_9 = arith.constant dense<0.000000e+00> : vector<16x128xf32>
    %15 = tpu.matmul %13, %14, %cst_9 {dimension_numbers = #tpu.dot_dimension_numbers<[1], [0], [0], [1], [0, 0, 1, 1], [], []>} : vector<16x4xbf16>, vector<4x128xbf16>, vector<16x128xf32> -> vector<16x128xf32>
    %16 = arith.truncf %15 : vector<16x128xf32> to vector<16x128xbf16>
    %c0_10 = arith.constant 0 : index
    %c0_11 = arith.constant 0 : index
    %17 = vector.load %arg6[%c0_10, %c0_11] : memref<16x128xbf16, #tpu.memory_space<vmem>>, vector<16x128xbf16>
    tpu.vector_store %arg6[%c0_10, %c0_11], %16 {strides = array<i32>} : memref<16x128xbf16, #tpu.memory_space<vmem>>, vector<16x128xbf16>,
    %cst_12 = arith.constant dense<0.000000e+00> : vector<16xf32>
    %18 = vector.multi_reduction <add>, %15, %cst_12 [1] : vector<16x128xf32> to vector<16xf32>
    %19 = vector.shape_cast %18 : vector<16xf32> to vector<16x1xf32>
    %20 = arith.mulf %15, %15 : vector<16x128xf32>
    %cst_13 = arith.constant dense<0.000000e+00> : vector<16xf32>
    %21 = vector.multi_reduction <add>, %20, %cst_13 [1] : vector<16x128xf32> to vector<16xf32>
    %22 = vector.shape_cast %21 : vector<16xf32> to vector<16x1xf32>
    %23 = tpu.iota {dimensions = array<i32: 1>} : vector<16x128xi32>
    %c0_i32 = arith.constant 0 : i32
    %24 = vector.broadcast %c0_i32 : i32 to vector<16x128xi32>
    %25 = arith.cmpi eq, %23, %24 : vector<16x128xi32>
    %c1_i32 = arith.constant 1 : i32
    %26 = vector.broadcast %c1_i32 : i32 to vector<16x128xi32>
    %27 = arith.cmpi eq, %23, %26 : vector<16x128xi32>
    %cst_14 = arith.constant 0.000000e+00 : f32
    %28 = vector.shape_cast %22 : vector<16x1xf32> to vector<16x1xf32>
    %29 = vector.broadcast %28 : vector<16x1xf32> to vector<16x128xf32>
    %30 = vector.broadcast %cst_14 : f32 to vector<16x128xf32>
    %31 = arith.select %27, %29, %30 : vector<16x128xi1>, vector<16x128xf32>
    %32 = vector.shape_cast %19 : vector<16x1xf32> to vector<16x1xf32>
    %33 = vector.broadcast %32 : vector<16x1xf32> to vector<16x128xf32>
    %34 = arith.select %25, %33, %31 : vector<16x128xi1>, vector<16x128xf32>
    %c0_15 = arith.constant 0 : index
    %c0_16 = arith.constant 0 : index
    %35 = vector.load %arg7[%c0_15, %c0_16] : memref<16x128xf32, #tpu.memory_space<vmem>>, vector<16x128xf32>
    tpu.vector_store %arg7[%c0_15, %c0_16], %34 {strides = array<i32>} : memref<16x128xf32, #tpu.memory_space<vmem>>, vector<16x128xf32>,
    return
  }
  func.func @transform_0(%arg0: i32) -> (i32, i32) {
    %c0_i32 = arith.constant 0 : i32
    %c0_i32_0 = arith.constant 0 : i32
    return %c0_i32, %arg0 : i32, i32
  }
  func.func @transform_1(%arg0: i32) -> (i32, i32) {
    %c0_i32 = arith.constant 0 : i32
    %c0_i32_0 = arith.constant 0 : i32
    %c0_i32_1 = arith.constant 0 : i32
    return %c0_i32, %c0_i32_0 : i32, i32
  }
  func.func @transform_2(%arg0: i32) -> (i32, i32) {
    %c0_i32 = arith.constant 0 : i32
    %c0_i32_0 = arith.constant 0 : i32
    %c0_i32_1 = arith.constant 0 : i32
    return %c0_i32, %c0_i32_0 : i32, i32
  }
  func.func @transform_3(%arg0: i32) -> (i32, i32) {
    %c0_i32 = arith.constant 0 : i32
    %c0_i32_0 = arith.constant 0 : i32
    %c0_i32_1 = arith.constant 0 : i32
    return %c0_i32, %c0_i32_0 : i32, i32
  }
  func.func @transform_4(%arg0: i32) -> (i32, i32) {
    %c0_i32 = arith.constant 0 : i32
    %c0_i32_0 = arith.constant 0 : i32
    return %c0_i32, %arg0 : i32, i32
  }
  func.func @transform_5(%arg0: i32) -> (i32, i32) {
    %c0_i32 = arith.constant 0 : i32
    %c0_i32_0 = arith.constant 0 : i32
    return %c0_i32, %arg0 : i32, i32
  }
  func.func @transform_6(%arg0: i32) -> (i32, i32) {
    %c0_i32 = arith.constant 0 : i32
    %c0_i32_0 = arith.constant 0 : i32
    return %c0_i32, %arg0 : i32, i32
  }
}

module attributes {stable_mosaic.version = 11 : i64} {
  func.func @_final_add_kernel(%arg0: i32, %arg1: memref<16x128xbf16, #tpu.memory_space<vmem>>, %arg2: memref<16x128xbf16, #tpu.memory_space<vmem>>, %arg3: memref<16x1xf32, #tpu.memory_space<vmem>>, %arg4: memref<16x1xf32, #tpu.memory_space<vmem>>, %arg5: memref<1x128xf32, #tpu.memory_space<vmem>>, %arg6: memref<16x128xbf16, #tpu.memory_space<vmem>>) attributes {dimension_semantics = [#tpu.dimension_semantics<parallel>], iteration_bounds = array<i64: 2>, scalar_prefetch = 0 : i64, scratch_operands = 0 : i64, tpu.core_type = #tpu.core_type<tc>, window_params = [{transform_indices = @transform_0, window_bounds = array<i64: 16, 128>}, {transform_indices = @transform_1, window_bounds = array<i64: 16, 128>}, {pipeline_mode = #tpu.pipeline_mode<synchronous>, transform_indices = @transform_2, window_bounds = array<i64: 16, 1>}, {pipeline_mode = #tpu.pipeline_mode<synchronous>, transform_indices = @transform_3, window_bounds = array<i64: 16, 1>}, {transform_indices = @transform_4, window_bounds = array<i64: 1, 128>}, {transform_indices = @transform_5, window_bounds = array<i64: 16, 128>}]} {
    %c0 = arith.constant 0 : index
    %c0_0 = arith.constant 0 : index
    %0 = vector.load %arg3[%c0, %c0_0] : memref<16x1xf32, #tpu.memory_space<vmem>>, vector<16x1xf32>
    %c0_1 = arith.constant 0 : index
    %c0_2 = arith.constant 0 : index
    %1 = vector.load %arg1[%c0_1, %c0_2] : memref<16x128xbf16, #tpu.memory_space<vmem>>, vector<16x128xbf16>
    %2 = arith.extf %1 : vector<16x128xbf16> to vector<16x128xf32>
    %3 = vector.broadcast %0 : vector<16x1xf32> to vector<16x128xf32>
    %4 = arith.mulf %3, %2 : vector<16x128xf32>
    %c0_3 = arith.constant 0 : index
    %c0_4 = arith.constant 0 : index
    %5 = vector.load %arg4[%c0_3, %c0_4] : memref<16x1xf32, #tpu.memory_space<vmem>>, vector<16x1xf32>
    %c0_5 = arith.constant 0 : index
    %c0_6 = arith.constant 0 : index
    %6 = vector.load %arg5[%c0_5, %c0_6] : memref<1x128xf32, #tpu.memory_space<vmem>>, vector<1x128xf32>
    %7 = vector.broadcast %5 : vector<16x1xf32> to vector<16x128xf32>
    %8 = vector.broadcast %6 : vector<1x128xf32> to vector<16x128xf32>
    %9 = arith.mulf %7, %8 : vector<16x128xf32>
    %10 = arith.addf %4, %9 : vector<16x128xf32>
    %cst = arith.constant 0.000000e+00 : f32
    %11 = vector.broadcast %cst : f32 to vector<16x128xf32>
    %12 = arith.maximumf %10, %11 : vector<16x128xf32>
    %c0_7 = arith.constant 0 : index
    %c0_8 = arith.constant 0 : index
    %13 = vector.load %arg2[%c0_7, %c0_8] : memref<16x128xbf16, #tpu.memory_space<vmem>>, vector<16x128xbf16>
    %14 = arith.extf %13 : vector<16x128xbf16> to vector<16x128xf32>
    %15 = arith.addf %14, %12 : vector<16x128xf32>
    %cst_9 = arith.constant 0.000000e+00 : f32
    %16 = vector.broadcast %cst_9 : f32 to vector<16x128xf32>
    %17 = arith.maximumf %15, %16 : vector<16x128xf32>
    %18 = arith.truncf %17 : vector<16x128xf32> to vector<16x128xbf16>
    %c0_10 = arith.constant 0 : index
    %c0_11 = arith.constant 0 : index
    %19 = vector.load %arg6[%c0_10, %c0_11] : memref<16x128xbf16, #tpu.memory_space<vmem>>, vector<16x128xbf16>
    tpu.vector_store %arg6[%c0_10, %c0_11], %18 {strides = array<i32>} : memref<16x128xbf16, #tpu.memory_space<vmem>>, vector<16x128xbf16>,
    return
  }
  func.func @transform_0(%arg0: i32) -> (i32, i32) {
    %c0_i32 = arith.constant 0 : i32
    %c0_i32_0 = arith.constant 0 : i32
    return %c0_i32, %arg0 : i32, i32
  }
  func.func @transform_1(%arg0: i32) -> (i32, i32) {
    %c0_i32 = arith.constant 0 : i32
    %c0_i32_0 = arith.constant 0 : i32
    return %c0_i32, %arg0 : i32, i32
  }
  func.func @transform_2(%arg0: i32) -> (i32, i32) {
    %c0_i32 = arith.constant 0 : i32
    %c0_i32_0 = arith.constant 0 : i32
    %c0_i32_1 = arith.constant 0 : i32
    return %c0_i32, %c0_i32_0 : i32, i32
  }
  func.func @transform_3(%arg0: i32) -> (i32, i32) {
    %c0_i32 = arith.constant 0 : i32
    %c0_i32_0 = arith.constant 0 : i32
    %c0_i32_1 = arith.constant 0 : i32
    return %c0_i32, %c0_i32_0 : i32, i32
  }
  func.func @transform_4(%arg0: i32) -> (i32, i32) {
    %c0_i32 = arith.constant 0 : i32
    %c0_i32_0 = arith.constant 0 : i32
    return %c0_i32, %arg0 : i32, i32
  }
  func.func @transform_5(%arg0: i32) -> (i32, i32) {
    %c0_i32 = arith.constant 0 : i32
    %c0_i32_0 = arith.constant 0 : i32
    return %c0_i32, %arg0 : i32, i32
  }
}

</mosaic_0001>

<llo_original>
// kernel: _lambda_.12
$region0: #{_lambda_.12}
  #allocation0 [shape = 'u32[]', space=smem, size = 0x4, offset = 0x4, fixed_abs, tag = 'smem constant byte address 0x4 - core index']
  #allocation1 [shape = 'u32[144,128]{1,0:T(1,128)}', space=vmem, size = 0x12000, scoped, tag = 'internal scratch']
  %s0 = inlined_call_operand.vmem [shape: bf16[4,1024], index: 0, kind: input, shape index: {}]
  %s1 = inlined_call_operand.vmem [shape: bf16[4,4], index: 1, kind: input, shape index: {}]
  %s2 = inlined_call_operand.vmem [shape: bf16[4,1024], index: 2, kind: output, shape index: {0}]
  %s3 = inlined_call_operand.vmem [shape: f32[4,256], index: 3, kind: output, shape index: {1}]
  %4 = xla_tuple %s2, %s3
  %s5 = sld [smem:[#allocation0]]
  $region49: #{_lambda_.12} parent=0
    _
  %s7 = ssub.s32 1, %s5
  %s8 = scalar_select 0, %s7, %s5
  loop: start=0, step=1, limit=4
  $region2: #{_lambda_.12} parent=0 // loop_pre_header
    _
  $region3: #{_lambda_.12} parent=0 // loop_header
    %s10 = sphi 0, %s14
    %p11 = scmp.ge.s32.totalorder %s10, 4
    %s20 = sphi 0, %s22
    %s23 = sphi 0, %s20
    %s24 = sphi 0, %s23
    %s40 = sphi 0, %s24
    %s44 = sphi 0, %s44
    %s46 = sphi 0, %s44
    %s47 = sphi 0, %s46
    %s61 = sphi 0, %s47
    %s67 = sphi 0, %s69
    %s70 = sphi 0, %s67
    %s71 = sphi 0, %s70
    %s87 = sphi 0, %s71
    %s93 = sphi 0, %s95
    %s96 = sphi 0, %s93
    %s97 = sphi 0, %s96
    %s113 = sphi 0, %s97
  $region4: #{_lambda_.12} parent=0 // loop_header_branch
    %13 = sbr.rel (%p11) target = $region8
  $region5: #{_lambda_.12} parent=0 // loop_body
    %s15 = ssub.s32 %s10, 1
    %s16 = ssub.s32 %s10, 2
    %s17 = sadd.s32 %s10, 1
    %s18 = ssub.s32 %s10, %s17
    %p19 = scmp.eq.s32.totalorder %s18, 0
    %s21 = sadd.s32 %s20, 1
    %s22 = scalar_select %p19, %s20, %s21
    %p25 = pneg %p19
    %p26 = scmp.eq.s32.totalorder %s10, 1
    %p27 = por %p25, %p26
    %p28 = scmp.ne.s32.totalorder %s20, %s23
    %p29 = scmp.eq.s32.totalorder %s10, 0
    %p30 = por %p28, %p29
    %p31 = scmp.ne.s32.totalorder %s20, %s23
    %p32 = scmp.eq.s32.totalorder %s15, 1
    %p33 = por %p31, %p32
    %p34 = scmp.ne.s32.totalorder %s23, %s24
    %p35 = scmp.eq.s32.totalorder %s15, 0
    %p36 = por %p34, %p35
    %p37 = scmp.ne.s32.totalorder %s23, %s24
    %p38 = scmp.eq.s32.totalorder %s16, 1
    %p39 = por %p37, %p38
    %p41 = scmp.ne.s32.totalorder %s24, %s40
    %p42 = scmp.eq.s32.totalorder %s16, 0
    %p43 = por %p41, %p42
    %s45 = sadd.s32 %s44, 1
    %p48 = scmp.eq.s32.totalorder %s10, 1
    %p49 = scmp.ne.s32.totalorder %s44, %s46
    %p50 = scmp.eq.s32.totalorder %s10, 0
    %p51 = por %p49, %p50
    %p52 = scmp.ne.s32.totalorder %s44, %s46
    %p53 = scmp.eq.s32.totalorder %s15, 1
    %p54 = por %p52, %p53
    %p55 = scmp.ne.s32.totalorder %s46, %s47
    %p56 = scmp.eq.s32.totalorder %s15, 0
    %p57 = por %p55, %p56
    %p58 = scmp.ne.s32.totalorder %s46, %s47
    %p59 = scmp.eq.s32.totalorder %s16, 1
    %p60 = por %p58, %p59
    %p62 = scmp.ne.s32.totalorder %s47, %s61
    %p63 = scmp.eq.s32.totalorder %s16, 0
    %p64 = por %p62, %p63
    %s65 = ssub.s32 %s10, %s17
    %p66 = scmp.eq.s32.totalorder %s65, 0
    %s68 = sadd.s32 %s67, 1
    %s69 = scalar_select %p66, %s67, %s68
    %p72 = pneg %p66
    %p73 = scmp.eq.s32.totalorder %s10, 1
    %p74 = por %p72, %p73
    %p75 = scmp.ne.s32.totalorder %s67, %s70
    %p76 = scmp.eq.s32.totalorder %s10, 0
    %p77 = por %p75, %p76
    %p78 = scmp.ne.s32.totalorder %s67, %s70
    %p79 = scmp.eq.s32.totalorder %s15, 1
    %p80 = por %p78, %p79
    %p81 = scmp.ne.s32.totalorder %s70, %s71
    %p82 = scmp.eq.s32.totalorder %s15, 0
    %p83 = por %p81, %p82
    %p84 = scmp.ne.s32.totalorder %s70, %s71
    %p85 = scmp.eq.s32.totalorder %s16, 1
    %p86 = por %p84, %p85
    %p88 = scmp.ne.s32.totalorder %s71, %s87
    %p89 = scmp.eq.s32.totalorder %s16, 0
    %p90 = por %p88, %p89
    %s91 = ssub.s32 %s10, %s17
    %p92 = scmp.eq.s32.totalorder %s91, 0
    %s94 = sadd.s32 %s93, 1
    %s95 = scalar_select %p92, %s93, %s94
    %p98 = pneg %p92
    %p99 = scmp.eq.s32.totalorder %s10, 1
    %p100 = por %p98, %p99
    %p101 = scmp.ne.s32.totalorder %s93, %s96
    %p102 = scmp.eq.s32.totalorder %s10, 0
    %p103 = por %p101, %p102
    %p104 = scmp.ne.s32.totalorder %s93, %s96
    %p105 = scmp.eq.s32.totalorder %s15, 1
    %p106 = por %p104, %p105
    %p107 = scmp.ne.s32.totalorder %s96, %s97
    %p108 = scmp.eq.s32.totalorder %s15, 0
    %p109 = por %p107, %p108
    %p110 = scmp.ne.s32.totalorder %s96, %s97
    %p111 = scmp.eq.s32.totalorder %s16, 1
    %p112 = por %p110, %p111
    %p114 = scmp.ne.s32.totalorder %s97, %s113
    %p115 = scmp.eq.s32.totalorder %s16, 0
    %p116 = por %p114, %p115
    %p117 = scmp.le.s32.totalorder 1, %s10
    %p118 = scmp.lt.s32.totalorder %s10, 3
    %p119 = pnand %p117, %p118
    %p120 = pneg %p119
    // Predicated region
    $region9: #{_lambda_.12} parent=5 // pred_check
      _
    $region10: #{_lambda_.12} parent=5 // pred_check_branch
      %122 = sbr.rel (%p119) target = $region12
    $region11: #{_lambda_.12} parent=5 // pred_region
      %s123 = ssub.s32 %s10, 1
      // Predicated region
      $region13: #{_lambda_.12} parent=11 // pred_check
        %p124 = pneg %p57
      $region14: #{_lambda_.12} parent=11 // pred_check_branch
        %126 = sbr.rel (%p124) target = $region16
      $region15: #{_lambda_.12} parent=11 // pred_region
        _
      $region16: #{_lambda_.12} parent=11 // pred_fallthru
        _
    $region12: #{_lambda_.12} parent=5 // pred_fallthru
      _
    %p127 = scmp.lt.s32.totalorder %s10, 2
    // Predicated region
    $region17: #{_lambda_.12} parent=5 // pred_check
      %p128 = pneg %p127
    $region18: #{_lambda_.12} parent=5 // pred_check_branch
      %130 = sbr.rel (%p128) target = $region20
    $region19: #{_lambda_.12} parent=5 // pred_region
      // Predicated region
      $region21: #{_lambda_.12} parent=19 // pred_check
        %p131 = pneg %p30
      $region22: #{_lambda_.12} parent=19 // pred_check_branch
        %133 = sbr.rel (%p131) target = $region24
      $region23: #{_lambda_.12} parent=19 // pred_region
        %s134 = smul.u32 4, %s10
        %p135 = scmp.lt.s32.totalorder %s134, 7
        %s136 = scalar_select %p135, %s134, 7
        %s137 = smul.addr %s136, 2
        %s138 = scalar_lea.vmem %s0, %s137
        %s139 = smul.u32 4, %s10
      $region24: #{_lambda_.12} parent=19 // pred_fallthru
        _
    $region20: #{_lambda_.12} parent=5 // pred_fallthru
      _
    %p140 = scmp.le.s32.totalorder 1, %s10
    %p141 = scmp.lt.s32.totalorder %s10, 3
    %p142 = pnand %p140, %p141
    %p143 = pneg %p142
    // Predicated region
    $region25: #{_lambda_.12} parent=5 // pred_check
      _
    $region26: #{_lambda_.12} parent=5 // pred_check_branch
      %145 = sbr.rel (%p142) target = $region28
    $region27: #{_lambda_.12} parent=5 // pred_region
      %s146 = ssub.s32 %s10, 1
      %s147 = smul.u32 4, %s15
      %p148 = scmp.lt.s32.totalorder %s147, 7
      %s149 = scalar_select %p148, %s147, 7
      %s150 = smul.addr %s149, 2
      %s151 = scalar_lea.vmem %s0, %s150
      %p152 = pneg %p36
      %p153 = pneg %p33
      %p154 = pneg %p57
      %p155 = pneg %p54
      %p156 = pneg %p83
      %p157 = pneg %p80
      %s158 = smul.u32 4, %s15
      %p159 = scmp.lt.s32.totalorder %s158, 7
      %s160 = scalar_select %p159, %s158, 7
      %s161 = smul.addr %s160, 2
      %s162 = scalar_lea.vmem %s2, %s161
      %p163 = pneg %p109
      %p164 = pneg %p106
      %p165 = scmp.lt.s32.totalorder %s15, 1
      %s166 = scalar_select %p165, %s15, 1
      %s167 = smul.addr %s166, 4
      %s168 = scalar_lea.vmem %s3, %s167
      %s169 = smul.u32 4, %s15
      %p170 = scmp.lt.s32.totalorder %s169, 7
      %s171 = scalar_select %p170, %s169, 7
      %s172 = smul.addr %s171, 2
      %s173 = scalar_lea.vmem %s0, %s172
      %s174 = smul.u32 4, %s15
      %s175 = smul.u32 4, %s15
      %p176 = scmp.lt.s32.totalorder %s175, 7
      %s177 = scalar_select %p176, %s175, 7
      %s178 = smul.addr %s177, 2
      %s179 = scalar_lea.vmem %s2, %s178
      %s180 = smul.u32 4, %s15
      %p181 = scmp.lt.s32.totalorder %s15, 1
      %s182 = scalar_select %p181, %s15, 1
      %s183 = smul.addr %s182, 4
      %s184 = scalar_lea.vmem %s3, %s183
      %v186 = vld [vmem:[%s1] sm:$0x3]
      %v187 = vld [vmem:[%s173] sm:$0xff]
      %v189 = vcombine.high %v187, %v187
      %v191 = vunpack.c.l.s4 1983009808
      %v192 = vunpack.c.0.s8 %v191
      %v193 = vlaneseq
      %v194 = vshrl.u32 %v193, 7
      %v195 = vsub.s32 %v192, %v194
      %v196 = vrot.slane %v187, %v195
      %v198 = vunpack.c.l.s4 1983009808
      %v199 = vunpack.c.0.s8 %v198
      %v200 = vlaneseq
      %v201 = vshrl.u32 %v200, 7
      %v202 = vsub.s32 %v199, %v201
      %v203 = vrot.slane %v189, %v202
      %v204 = vcombine.high %v196, %v196
      %v205 = vcombine.high %v203, %v203
      %vm206 = vcmask 31744
      %v208 = vsel %vm206, %v186, 0
      %vm210 = vcmask 1041408
      %v212 = vsel %vm210, %v196, 0
      %v215 = vsel %vm210, %v204, 0
      %v218 = vsel %vm210, %v203, 0
      %v221 = vsel %vm210, %v205, 0
      %223 = vmatprep.subr.bf16.mxu0 0
      %224 = vmatpush1.bf16.msra.mxu0 0
      %225 = vmatprep.subr.bf16.mxu0 0
      %226 = vmatpush1.bf16.msra.mxu0 0
      %227 = vmatprep.subr.bf16.mxu0 0
      %228 = vmatpush1.bf16.msra.mxu0 0
      %229 = vmatprep.subr.bf16.mxu0 0
      %230 = vmatpush1.bf16.msra.mxu0 0
      %231 = vmatprep.subr.bf16.mxu0 0
      %232 = vmatpush1.bf16.msra.mxu0 0
      %233 = vmatprep.subr.bf16.mxu0 0
      %234 = vmatpush1.bf16.msra.mxu0 0
      %235 = vmatprep.subr.bf16.mxu0 0
      %236 = vmatpush1.bf16.msra.mxu0 0
      %237 = vmatprep.subr.bf16.mxu0 %v215
      %238 = vmatpush1.bf16.msra.mxu0 %v212
      %239 = vmatprep.subr.bf16.mxu0 0
      %240 = vmatpush2.bf16.msra.mxu0 0
      %241 = vmatprep.subr.bf16.mxu0 0
      %242 = vmatpush2.bf16.msra.mxu0 0
      %243 = vmatprep.subr.bf16.mxu0 0
      %244 = vmatpush2.bf16.msra.mxu0 0
      %245 = vmatprep.subr.bf16.mxu0 0
      %246 = vmatpush2.bf16.msra.mxu0 0
      %247 = vmatprep.subr.bf16.mxu0 0
      %248 = vmatpush2.bf16.msra.mxu0 0
      %249 = vmatprep.subr.bf16.mxu0 0
      %250 = vmatpush2.bf16.msra.mxu0 0
      %251 = vmatprep.subr.bf16.mxu0 0
      %252 = vmatpush2.bf16.msra.mxu0 0
      %253 = vmatprep.subr.bf16.mxu0 0
      %254 = vmatpush2.bf16.msra.mxu0 0
      %255 = vmatprep.mubr.bf16.mxu0 0
      %256 = vmatmul.mubr.bf16.gmra.mxu0 %v208
      %v257 = vpop.f32.mrf.mxu0
      %v258 = vadd.f32 0.0, %v257
      %v259 = vpop.f32.mrf.mxu0
      %v260 = vadd.f32 0.0, %v259
      %v261 = vpop.f32.mrf.mxu0
      %v262 = vpop.f32.mrf.mxu0
      %263 = vdwg.mxu0
      %264 = vmatprep.subr.bf16.mxu0 0
      %265 = vmatpush1.bf16.msra.mxu0 0
      %266 = vmatprep.subr.bf16.mxu0 0
      %267 = vmatpush1.bf16.msra.mxu0 0
      %268 = vmatprep.subr.bf16.mxu0 0
      %269 = vmatpush1.bf16.msra.mxu0 0
      %270 = vmatprep.subr.bf16.mxu0 0
      %271 = vmatpush1.bf16.msra.mxu0 0
      %272 = vmatprep.subr.bf16.mxu0 0
      %273 = vmatpush1.bf16.msra.mxu0 0
      %274 = vmatprep.subr.bf16.mxu0 0
      %275 = vmatpush1.bf16.msra.mxu0 0
      %276 = vmatprep.subr.bf16.mxu0 0
      %277 = vmatpush1.bf16.msra.mxu0 0
      %278 = vmatprep.subr.bf16.mxu0 %v221
      %279 = vmatpush1.bf16.msra.mxu0 %v218
      %280 = vmatprep.subr.bf16.mxu0 0
      %281 = vmatpush2.bf16.msra.mxu0 0
      %282 = vmatprep.subr.bf16.mxu0 0
      %283 = vmatpush2.bf16.msra.mxu0 0
      %284 = vmatprep.subr.bf16.mxu0 0
      %285 = vmatpush2.bf16.msra.mxu0 0
      %286 = vmatprep.subr.bf16.mxu0 0
      %287 = vmatpush2.bf16.msra.mxu0 0
      %288 = vmatprep.subr.bf16.mxu0 0
      %289 = vmatpush2.bf16.msra.mxu0 0
      %290 = vmatprep.subr.bf16.mxu0 0
      %291 = vmatpush2.bf16.msra.mxu0 0
      %292 = vmatprep.subr.bf16.mxu0 0
      %293 = vmatpush2.bf16.msra.mxu0 0
      %294 = vmatprep.subr.bf16.mxu0 0
      %295 = vmatpush2.bf16.msra.mxu0 0
      %296 = vmatprep.mubr.bf16.mxu0 0
      %297 = vmatmul.mubr.bf16.gmra.mxu0 %v208
      %v298 = vpop.f32.mrf.mxu0
      %v299 = vadd.f32 0.0, %v298
      %v300 = vpop.f32.mrf.mxu0
      %v301 = vadd.f32 0.0, %v300
      %v302 = vpop.f32.mrf.mxu0
      %v303 = vpop.f32.mrf.mxu0
      %304 = vdwg.mxu0
      %v305 = vpack.c.bf16 %v258, %v258
      %v306 = vpack.c.bf16 %v260, %v260
      %v307 = vpack.c.bf16 %v299, %v299
      %v308 = vpack.c.bf16 %v301, %v301
      %v313 = vcombine.low %v305, %v306
      %v314 = vcombine.low %v307, %v308
      %v316 = vunpack.c.l.s4 1983009808
      %v317 = vunpack.c.0.s8 %v316
      %v318 = vlaneseq
      %v319 = vshrl.u32 %v318, 7
      %v320 = vsub.s32 %v317, %v319
      %v321 = vrot.slane %v313, %v320
      %v323 = vunpack.c.l.s4 1983009808
      %v324 = vunpack.c.0.s8 %v323
      %v325 = vlaneseq
      %v326 = vshrl.u32 %v325, 7
      %v327 = vsub.s32 %v324, %v326
      %v328 = vrot.slane %v314, %v327
      %v329 = vcombine.low %v321, %v328
      %331 = vst [vmem:[%s179] sm:$0xff] %v329
      %vm332 = vcmask 1043456
      %v333 = vsel %vm332, %v258, 0.0
      %v334 = vsel %vm332, %v260, 0.0
      %v335 = vadd.f32 %v333, %v334
      %v336 = vsel %vm332, %v299, 0.0
      %v337 = vadd.f32 %v335, %v336
      %v338 = vsel %vm332, %v301, 0.0
      %v339 = vadd.f32 %v337, %v338
      %340 = vadd.xlane.f32.xlu0 %v339
      %v341 = vpop.xlane.xlu0 %340
      %v342 = vmul.f32 %v258, %v258
      %v343 = vmul.f32 %v260, %v260
      %v344 = vmul.f32 %v299, %v299
      %v345 = vmul.f32 %v301, %v301
      %v346 = vsel %vm332, %v342, 0.0
      %v347 = vsel %vm332, %v343, 0.0
      %v348 = vadd.f32 %v346, %v347
      %v349 = vsel %vm332, %v344, 0.0
      %v350 = vadd.f32 %v348, %v349
      %v351 = vsel %vm332, %v345, 0.0
      %v352 = vadd.f32 %v350, %v351
      %353 = vadd.xlane.f32.xlu0 %v352
      %v354 = vpop.xlane.xlu0 %353
      %v355 = vlaneseq
      %v356 = vand.u32 %v355, 127
      %vm357 = vcmp.eq.s32.totalorder %v356, 0
      %vm358 = vcmp.eq.s32.totalorder %v356, 1
      %v359 = vsel %vm358, %v354, 0.0
      %v360 = vsel %vm357, %v341, %v359
      %361 = vst [vmem:[%s184] sm:$0xf] %v360
      %s362 = smul.u32 4, %s15
      %p363 = scmp.lt.s32.totalorder %s362, 7
      %s364 = scalar_select %p363, %s362, 7
      %s365 = smul.addr %s364, 2
      %s366 = scalar_lea.vmem %s2, %s365
      %p367 = scmp.lt.s32.totalorder %s15, 1
      %s368 = scalar_select %p367, %s15, 1
      %s369 = smul.addr %s368, 4
      %s370 = scalar_lea.vmem %s3, %s369
      // Predicated region
      $region29: #{_lambda_.12} parent=27 // pred_check
        %p371 = pneg %p80
      $region30: #{_lambda_.12} parent=27 // pred_check_branch
        %373 = sbr.rel (%p371) target = $region32
      $region31: #{_lambda_.12} parent=27 // pred_region
        %s374 = smul.u32 4, %s15
      $region32: #{_lambda_.12} parent=27 // pred_fallthru
        _
      // Predicated region
      $region33: #{_lambda_.12} parent=27 // pred_check
        %p375 = pneg %p106
      $region34: #{_lambda_.12} parent=27 // pred_check_branch
        %377 = sbr.rel (%p375) target = $region36
      $region35: #{_lambda_.12} parent=27 // pred_region
        _
      $region36: #{_lambda_.12} parent=27 // pred_fallthru
        _
    $region28: #{_lambda_.12} parent=5 // pred_fallthru
      _
    %p378 = scmp.le.s32.totalorder 2, %s10
    // Predicated region
    $region37: #{_lambda_.12} parent=5 // pred_check
      %p379 = pneg %p378
    $region38: #{_lambda_.12} parent=5 // pred_check_branch
      %381 = sbr.rel (%p379) target = $region40
    $region39: #{_lambda_.12} parent=5 // pred_region
      %s382 = ssub.s32 %s10, 2
      // Predicated region
      $region41: #{_lambda_.12} parent=39 // pred_check
        %p383 = pneg %p86
      $region42: #{_lambda_.12} parent=39 // pred_check_branch
        %385 = sbr.rel (%p383) target = $region44
      $region43: #{_lambda_.12} parent=39 // pred_region
        %s386 = smul.u32 4, %s16
        %p387 = scmp.lt.s32.totalorder %s386, 7
        %s388 = scalar_select %p387, %s386, 7
        %s389 = smul.addr %s388, 2
        %s390 = scalar_lea.vmem %s2, %s389
      $region44: #{_lambda_.12} parent=39 // pred_fallthru
        _
      // Predicated region
      $region45: #{_lambda_.12} parent=39 // pred_check
        %p391 = pneg %p112
      $region46: #{_lambda_.12} parent=39 // pred_check_branch
        %393 = sbr.rel (%p391) target = $region48
      $region47: #{_lambda_.12} parent=39 // pred_region
        %p394 = scmp.lt.s32.totalorder %s16, 1
        %s395 = scalar_select %p394, %s16, 1
        %s396 = smul.addr %s395, 4
        %s397 = scalar_lea.vmem %s3, %s396
      $region48: #{_lambda_.12} parent=39 // pred_fallthru
        _
    $region40: #{_lambda_.12} parent=5 // pred_fallthru
      _
  $region6: #{_lambda_.12} parent=0 // loop_footer
    %s14 = sadd.s32 1, %s10
  $region7: #{_lambda_.12} parent=0 // loop_footer_branch
    %9 = sbr.rel target = $region3
  $region8: #{_lambda_.12} parent=0 // loop_exit
    _

// kernel: _lambda_.13
$region0: #{_lambda_.13}
  #allocation0 [shape = 'u32[]', space=smem, size = 0x4, offset = 0x4, fixed_abs, tag = 'smem constant byte address 0x4 - core index']
  #allocation1 [shape = 'u32[144,128]{1,0:T(1,128)}', space=vmem, size = 0x12000, scoped, tag = 'internal scratch']
  %s0 = inlined_call_operand.vmem [shape: bf16[108,1024], index: 0, kind: input, shape index: {}]
  %s1 = inlined_call_operand.vmem [shape: bf16[4,108], index: 1, kind: input, shape index: {}]
  %s2 = inlined_call_operand.vmem [shape: bf16[4,1024], index: 2, kind: output, shape index: {0}]
  %s3 = inlined_call_operand.vmem [shape: f32[4,256], index: 3, kind: output, shape index: {1}]
  %4 = xla_tuple %s2, %s3
  %s5 = sld [smem:[#allocation0]]
  $region72: #{_lambda_.13} parent=0
    _
  %s7 = ssub.s32 1, %s5
  %s8 = scalar_select 0, %s7, %s5
  $region1: #{_lambda_.13} parent=0
    #allocation2 [shape = 'u8[229376]{0}', space=vmem, size = 0x38000, scoped, tag = 'input window, operand 0']
    loop: start=0, step=1, limit=4
    $region2: #{_lambda_.13} parent=1 // loop_pre_header
      _
    $region3: #{_lambda_.13} parent=1 // loop_header
      %s10 = sphi 0, %s14
      %p11 = scmp.ge.s32.totalorder %s10, 4
      %s20 = sphi 0, %s22
      %s23 = sphi 0, %s20
      %s24 = sphi 0, %s23
      %s40 = sphi 0, %s24
      %s44 = sphi 0, %s44
      %s46 = sphi 0, %s44
      %s47 = sphi 0, %s46
      %s61 = sphi 0, %s47
      %s67 = sphi 0, %s69
      %s70 = sphi 0, %s67
      %s71 = sphi 0, %s70
      %s87 = sphi 0, %s71
      %s93 = sphi 0, %s95
      %s96 = sphi 0, %s93
      %s97 = sphi 0, %s96
      %s113 = sphi 0, %s97
    $region4: #{_lambda_.13} parent=1 // loop_header_branch
      %13 = sbr.rel (%p11) target = $region8
    $region5: #{_lambda_.13} parent=1 // loop_body
      %s15 = ssub.s32 %s10, 1
      %s16 = ssub.s32 %s10, 2
      %s17 = sadd.s32 %s10, 1
      %s18 = ssub.s32 %s10, %s17
      %p19 = scmp.eq.s32.totalorder %s18, 0
      %s21 = sadd.s32 %s20, 1
      %s22 = scalar_select %p19, %s20, %s21
      %p25 = pneg %p19
      %p26 = scmp.eq.s32.totalorder %s10, 1
      %p27 = por %p25, %p26
      %p28 = scmp.ne.s32.totalorder %s20, %s23
      %p29 = scmp.eq.s32.totalorder %s10, 0
      %p30 = por %p28, %p29
      %p31 = scmp.ne.s32.totalorder %s20, %s23
      %p32 = scmp.eq.s32.totalorder %s15, 1
      %p33 = por %p31, %p32
      %p34 = scmp.ne.s32.totalorder %s23, %s24
      %p35 = scmp.eq.s32.totalorder %s15, 0
      %p36 = por %p34, %p35
      %p37 = scmp.ne.s32.totalorder %s23, %s24
      %p38 = scmp.eq.s32.totalorder %s16, 1
      %p39 = por %p37, %p38
      %p41 = scmp.ne.s32.totalorder %s24, %s40
      %p42 = scmp.eq.s32.totalorder %s16, 0
      %p43 = por %p41, %p42
      %s45 = sadd.s32 %s44, 1
      %p48 = scmp.eq.s32.totalorder %s10, 1
      %p49 = scmp.ne.s32.totalorder %s44, %s46
      %p50 = scmp.eq.s32.totalorder %s10, 0
      %p51 = por %p49, %p50
      %p52 = scmp.ne.s32.totalorder %s44, %s46
      %p53 = scmp.eq.s32.totalorder %s15, 1
      %p54 = por %p52, %p53
      %p55 = scmp.ne.s32.totalorder %s46, %s47
      %p56 = scmp.eq.s32.totalorder %s15, 0
      %p57 = por %p55, %p56
      %p58 = scmp.ne.s32.totalorder %s46, %s47
      %p59 = scmp.eq.s32.totalorder %s16, 1
      %p60 = por %p58, %p59
      %p62 = scmp.ne.s32.totalorder %s47, %s61
      %p63 = scmp.eq.s32.totalorder %s16, 0
      %p64 = por %p62, %p63
      %s65 = ssub.s32 %s10, %s17
      %p66 = scmp.eq.s32.totalorder %s65, 0
      %s68 = sadd.s32 %s67, 1
      %s69 = scalar_select %p66, %s67, %s68
      %p72 = pneg %p66
      %p73 = scmp.eq.s32.totalorder %s10, 1
      %p74 = por %p72, %p73
      %p75 = scmp.ne.s32.totalorder %s67, %s70
      %p76 = scmp.eq.s32.totalorder %s10, 0
      %p77 = por %p75, %p76
      %p78 = scmp.ne.s32.totalorder %s67, %s70
      %p79 = scmp.eq.s32.totalorder %s15, 1
      %p80 = por %p78, %p79
      %p81 = scmp.ne.s32.totalorder %s70, %s71
      %p82 = scmp.eq.s32.totalorder %s15, 0
      %p83 = por %p81, %p82
      %p84 = scmp.ne.s32.totalorder %s70, %s71
      %p85 = scmp.eq.s32.totalorder %s16, 1
      %p86 = por %p84, %p85
      %p88 = scmp.ne.s32.totalorder %s71, %s87
      %p89 = scmp.eq.s32.totalorder %s16, 0
      %p90 = por %p88, %p89
      %s91 = ssub.s32 %s10, %s17
      %p92 = scmp.eq.s32.totalorder %s91, 0
      %s94 = sadd.s32 %s93, 1
      %s95 = scalar_select %p92, %s93, %s94
      %p98 = pneg %p92
      %p99 = scmp.eq.s32.totalorder %s10, 1
      %p100 = por %p98, %p99
      %p101 = scmp.ne.s32.totalorder %s93, %s96
      %p102 = scmp.eq.s32.totalorder %s10, 0
      %p103 = por %p101, %p102
      %p104 = scmp.ne.s32.totalorder %s93, %s96
      %p105 = scmp.eq.s32.totalorder %s15, 1
      %p106 = por %p104, %p105
      %p107 = scmp.ne.s32.totalorder %s96, %s97
      %p108 = scmp.eq.s32.totalorder %s15, 0
      %p109 = por %p107, %p108
      %p110 = scmp.ne.s32.totalorder %s96, %s97
      %p111 = scmp.eq.s32.totalorder %s16, 1
      %p112 = por %p110, %p111
      %p114 = scmp.ne.s32.totalorder %s97, %s113
      %p115 = scmp.eq.s32.totalorder %s16, 0
      %p116 = por %p114, %p115
      %p117 = scmp.le.s32.totalorder 1, %s10
      %p118 = scmp.lt.s32.totalorder %s10, 3
      %p119 = pnand %p117, %p118
      %p120 = pneg %p119
      // Predicated region
      $region9: #{_lambda_.13} parent=5 // pred_check
        _
      $region10: #{_lambda_.13} parent=5 // pred_check_branch
        %122 = sbr.rel (%p119) target = $region12
      $region11: #{_lambda_.13} parent=5 // pred_region
        %s123 = ssub.s32 %s10, 1
        // Predicated region
        $region13: #{_lambda_.13} parent=11 // pred_check
          %p124 = pneg %p57
        $region14: #{_lambda_.13} parent=11 // pred_check_branch
          %126 = sbr.rel (%p124) target = $region16
        $region15: #{_lambda_.13} parent=11 // pred_region
          _
        $region16: #{_lambda_.13} parent=11 // pred_fallthru
          _
      $region12: #{_lambda_.13} parent=5 // pred_fallthru
        _
      %p127 = scmp.lt.s32.totalorder %s10, 2
      // Predicated region
      $region17: #{_lambda_.13} parent=5 // pred_check
        %p128 = pneg %p127
      $region18: #{_lambda_.13} parent=5 // pred_check_branch
        %130 = sbr.rel (%p128) target = $region20
      $region19: #{_lambda_.13} parent=5 // pred_region
        // Predicated region
        $region21: #{_lambda_.13} parent=19 // pred_check
          %p131 = pneg %p30
        $region22: #{_lambda_.13} parent=19 // pred_check_branch
          %133 = sbr.rel (%p131) target = $region24
        $region23: #{_lambda_.13} parent=19 // pred_region
          %s134 = sand.u32 %s20, 1
          %s135 = sand.u32 %s20, 1
          %s136 = smul.addr %s135, 224
          %s137 = scalar_lea.vmem [#allocation2], %s136
          %s138 = smul.u32 4, %s10
          %s139 = smul.addr %s138, 4
          %s140 = scalar_lea.vmem %s0, %s139
          // Predicated region
          $region25: #{_lambda_.13} parent=23 // pred_check
            _
          $region26: #{_lambda_.13} parent=23 // pred_check_branch
            %142 = sbr.rel (0) target = $region28
          $region27: #{_lambda_.13} parent=23 // pred_region
            // Predicated region
            $region29: #{_lambda_.13} parent=27 // pred_check
              _
            $region30: #{_lambda_.13} parent=27 // pred_check_branch
              %144 = sbr.rel (0) target = $region32
            $region31: #{_lambda_.13} parent=27 // pred_region
              loop: start=0, step=1, limit=1
              $region33: #{_lambda_.13} parent=31 // loop_pre_header
                _
              $region34: #{_lambda_.13} parent=31 // loop_header
                %s146 = sphi 0, %s150
                %p147 = scmp.ge.s32.totalorder %s146, 1
                %s151 = sphi %s140, %s140
                %s152 = sphi %s137, %s137
              $region35: #{_lambda_.13} parent=31 // loop_header_branch
                %149 = sbr.rel (%p147) target = $region39
              $region36: #{_lambda_.13} parent=31 // loop_body
                %v153 = vld [vmem:[%s151] sm:$0xff]
                %154 = vst [vmem:[%s152] sm:$0xff] %v153
                %v155 = vld [vmem:[%s151 + $0x8] sm:$0xff]
                %156 = vst [vmem:[%s152 + $0x8] sm:$0xff] %v155
                %v157 = vld [vmem:[%s151 + $0x20] sm:$0xff]
                %158 = vst [vmem:[%s152 + $0x10] sm:$0xff] %v157
                %v159 = vld [vmem:[%s151 + $0x28] sm:$0xff]
                %160 = vst [vmem:[%s152 + $0x18] sm:$0xff] %v159
                %v161 = vld [vmem:[%s151 + $0x40] sm:$0xff]
                %162 = vst [vmem:[%s152 + $0x20] sm:$0xff] %v161
                %v163 = vld [vmem:[%s151 + $0x48] sm:$0xff]
                %164 = vst [vmem:[%s152 + $0x28] sm:$0xff] %v163
                %v165 = vld [vmem:[%s151 + $0x60] sm:$0xff]
                %166 = vst [vmem:[%s152 + $0x30] sm:$0xff] %v165
                %v167 = vld [vmem:[%s151 + $0x68] sm:$0xff]
                %168 = vst [vmem:[%s152 + $0x38] sm:$0xff] %v167
                %v169 = vld [vmem:[%s151 + $0x80] sm:$0xff]
                %170 = vst [vmem:[%s152 + $0x40] sm:$0xff] %v169
                %v171 = vld [vmem:[%s151 + $0x88] sm:$0xff]
                %172 = vst [vmem:[%s152 + $0x48] sm:$0xff] %v171
                %v173 = vld [vmem:[%s151 + $0xa0] sm:$0xff]
                %174 = vst [vmem:[%s152 + $0x50] sm:$0xff] %v173
                %v175 = vld [vmem:[%s151 + $0xa8] sm:$0xff]
                %176 = vst [vmem:[%s152 + $0x58] sm:$0xff] %v175
                %v177 = vld [vmem:[%s151 + $0xc0] sm:$0xff]
                %178 = vst [vmem:[%s152 + $0x60] sm:$0xff] %v177
                %v179 = vld [vmem:[%s151 + $0xc8] sm:$0xff]
                %180 = vst [vmem:[%s152 + $0x68] sm:$0xff] %v179
                %v181 = vld [vmem:[%s151 + $0xe0] sm:$0xff]
                %182 = vst [vmem:[%s152 + $0x70] sm:$0xff] %v181
                %v183 = vld [vmem:[%s151 + $0xe8] sm:$0xff]
                %184 = vst [vmem:[%s152 + $0x78] sm:$0xff] %v183
                %v185 = vld [vmem:[%s151 + $0x100] sm:$0xff]
                %186 = vst [vmem:[%s152 + $0x80] sm:$0xff] %v185
                %v187 = vld [vmem:[%s151 + $0x108] sm:$0xff]
                %188 = vst [vmem:[%s152 + $0x88] sm:$0xff] %v187
                %v189 = vld [vmem:[%s151 + $0x120] sm:$0xff]
                %190 = vst [vmem:[%s152 + $0x90] sm:$0xff] %v189
                %v191 = vld [vmem:[%s151 + $0x128] sm:$0xff]
                %192 = vst [vmem:[%s152 + $0x98] sm:$0xff] %v191
                %v193 = vld [vmem:[%s151 + $0x140] sm:$0xff]
                %194 = vst [vmem:[%s152 + $0xa0] sm:$0xff] %v193
                %v195 = vld [vmem:[%s151 + $0x148] sm:$0xff]
                %196 = vst [vmem:[%s152 + $0xa8] sm:$0xff] %v195
                %v197 = vld [vmem:[%s151 + $0x160] sm:$0xff]
                %198 = vst [vmem:[%s152 + $0xb0] sm:$0xff] %v197
                %v199 = vld [vmem:[%s151 + $0x168] sm:$0xff]
                %200 = vst [vmem:[%s152 + $0xb8] sm:$0xff] %v199
                %v201 = vld [vmem:[%s151 + $0x180] sm:$0xff]
                %202 = vst [vmem:[%s152 + $0xc0] sm:$0xff] %v201
                %v203 = vld [vmem:[%s151 + $0x188] sm:$0xff]
                %204 = vst [vmem:[%s152 + $0xc8] sm:$0xff] %v203
                %v205 = vld [vmem:[%s151 + $0x1a0] sm:$0xff]
                %206 = vst [vmem:[%s152 + $0xd0] sm:$0xff] %v205
                %v207 = vld [vmem:[%s151 + $0x1a8] sm:$0xff]
                %208 = vst [vmem:[%s152 + $0xd8] sm:$0xff] %v207
              $region37: #{_lambda_.13} parent=31 // loop_footer
                %s150 = sadd.s32 1, %s146
              $region38: #{_lambda_.13} parent=31 // loop_footer_branch
                %145 = sbr.rel target = $region34
              $region39: #{_lambda_.13} parent=31 // loop_exit
                _
            $region32: #{_lambda_.13} parent=27 // pred_fallthru
              _
            // Predicated region
            $region40: #{_lambda_.13} parent=27 // pred_check
              _
            $region41: #{_lambda_.13} parent=27 // pred_check_branch
              %210 = sbr.rel target = $region43
            $region42: #{_lambda_.13} parent=27 // pred_region
              _
            $region43: #{_lambda_.13} parent=27 // pred_fallthru
              _
          $region28: #{_lambda_.13} parent=23 // pred_fallthru
            _
          %211 = vnop
        $region24: #{_lambda_.13} parent=19 // pred_fallthru
          _
      $region20: #{_lambda_.13} parent=5 // pred_fallthru
        _
      %p212 = scmp.le.s32.totalorder 1, %s10
      %p213 = scmp.lt.s32.totalorder %s10, 3
      %p214 = pnand %p212, %p213
      %p215 = pneg %p214
      // Predicated region
      $region44: #{_lambda_.13} parent=5 // pred_check
        _
      $region45: #{_lambda_.13} parent=5 // pred_check_branch
        %217 = sbr.rel (%p214) target = $region47
      $region46: #{_lambda_.13} parent=5 // pred_region
        %s218 = ssub.s32 %s10, 1
        %s219 = sand.u32 %s23, 1
        %s220 = sand.u32 %s23, 1
        %s221 = smul.addr %s220, 224
        %s222 = scalar_lea.vmem [#allocation2], %s221
        // Predicated region
        $region48: #{_lambda_.13} parent=46 // pred_check
          %p223 = pneg %p36
        $region49: #{_lambda_.13} parent=46 // pred_check_branch
          %225 = sbr.rel (%p223) target = $region51
        $region50: #{_lambda_.13} parent=46 // pred_region
          _
        $region51: #{_lambda_.13} parent=46 // pred_fallthru
          _
        %s226 = sand.u32 %s23, 1
        %s227 = sand.u32 %s23, 1
        %s228 = smul.addr %s227, 224
        %s229 = scalar_lea.vmem [#allocation2], %s228
        %p230 = pneg %p36
        %p231 = pneg %p33
        %p232 = pneg %p57
        %p233 = pneg %p54
        %p234 = pneg %p83
        %p235 = pneg %p80
        %s236 = smul.u32 4, %s15
        %p237 = scmp.lt.s32.totalorder %s236, 7
        %s238 = scalar_select %p237, %s236, 7
        %s239 = smul.addr %s238, 2
        %s240 = scalar_lea.vmem %s2, %s239
        %p241 = pneg %p109
        %p242 = pneg %p106
        %p243 = scmp.lt.s32.totalorder %s15, 1
        %s244 = scalar_select %p243, %s15, 1
        %s245 = smul.addr %s244, 4
        %s246 = scalar_lea.vmem %s3, %s245
        %s247 = smul.u32 4, %s15
        %s248 = smul.u32 4, %s15
        %p249 = scmp.lt.s32.totalorder %s248, 7
        %s250 = scalar_select %p249, %s248, 7
        %s251 = smul.addr %s250, 2
        %s252 = scalar_lea.vmem %s2, %s251
        %s253 = smul.u32 4, %s15
        %p254 = scmp.lt.s32.totalorder %s15, 1
        %s255 = scalar_select %p254, %s15, 1
        %s256 = smul.addr %s255, 4
        %s257 = scalar_lea.vmem %s3, %s256
        %v259 = vld [vmem:[%s1] sm:$0x3]
        %v260 = vld [vmem:[%s222] sm:$0xff]
        %v261 = vld [vmem:[%s222 + $0x8] sm:$0xff]
        %v262 = vld [vmem:[%s222 + $0x10] sm:$0xff]
        %v263 = vld [vmem:[%s222 + $0x18] sm:$0xff]
        %v264 = vld [vmem:[%s222 + $0x20] sm:$0xff]
        %v265 = vld [vmem:[%s222 + $0x28] sm:$0xff]
        %v266 = vld [vmem:[%s222 + $0x30] sm:$0xff]
        %v267 = vld [vmem:[%s222 + $0x38] sm:$0xff]
        %v268 = vld [vmem:[%s222 + $0x40] sm:$0xff]
        %v269 = vld [vmem:[%s222 + $0x48] sm:$0xff]
        %v270 = vld [vmem:[%s222 + $0x50] sm:$0xff]
        %v271 = vld [vmem:[%s222 + $0x58] sm:$0xff]
        %v272 = vld [vmem:[%s222 + $0x60] sm:$0xff]
        %v273 = vld [vmem:[%s222 + $0x68] sm:$0xff]
        %v274 = vld [vmem:[%s222 + $0x70] sm:$0xff]
        %v275 = vld [vmem:[%s222 + $0x78] sm:$0xff]
        %v276 = vld [vmem:[%s222 + $0x80] sm:$0xff]
        %v277 = vld [vmem:[%s222 + $0x88] sm:$0xff]
        %v278 = vld [vmem:[%s222 + $0x90] sm:$0xff]
        %v279 = vld [vmem:[%s222 + $0x98] sm:$0xff]
        %v280 = vld [vmem:[%s222 + $0xa0] sm:$0xff]
        %v281 = vld [vmem:[%s222 + $0xa8] sm:$0xff]
        %v282 = vld [vmem:[%s222 + $0xb0] sm:$0xff]
        %v283 = vld [vmem:[%s222 + $0xb8] sm:$0xff]
        %v284 = vld [vmem:[%s222 + $0xc0] sm:$0xff]
        %v285 = vld [vmem:[%s222 + $0xc8] sm:$0xff]
        %v286 = vld [vmem:[%s222 + $0xd0] sm:$0x33]
        %v287 = vld [vmem:[%s222 + $0xd8] sm:$0x33]
        %v316 = vunpack.c.l.b16 %v260
        %v317 = vunpack.c.h.b16 %v260
        %v318 = vunpack.c.l.b16 %v261
        %v319 = vunpack.c.h.b16 %v261
        %v320 = vunpack.c.l.b16 %v262
        %v321 = vunpack.c.h.b16 %v262
        %v322 = vunpack.c.l.b16 %v263
        %v323 = vunpack.c.h.b16 %v263
        %v324 = vunpack.c.l.b16 %v264
        %v325 = vunpack.c.h.b16 %v264
        %v326 = vunpack.c.l.b16 %v265
        %v327 = vunpack.c.h.b16 %v265
        %v328 = vunpack.c.l.b16 %v266
        %v329 = vunpack.c.h.b16 %v266
        %v330 = vunpack.c.l.b16 %v267
        %v331 = vunpack.c.h.b16 %v267
        %v332 = vunpack.c.l.b16 %v268
        %v333 = vunpack.c.h.b16 %v268
        %v334 = vunpack.c.l.b16 %v269
        %v335 = vunpack.c.h.b16 %v269
        %v336 = vunpack.c.l.b16 %v270
        %v337 = vunpack.c.h.b16 %v270
        %v338 = vunpack.c.l.b16 %v271
        %v339 = vunpack.c.h.b16 %v271
        %v340 = vunpack.c.l.b16 %v272
        %v341 = vunpack.c.h.b16 %v272
        %v342 = vunpack.c.l.b16 %v273
        %v343 = vunpack.c.h.b16 %v273
        %v344 = vunpack.c.l.b16 %v274
        %v345 = vunpack.c.h.b16 %v274
        %v346 = vunpack.c.l.b16 %v275
        %v347 = vunpack.c.h.b16 %v275
        %v348 = vunpack.c.l.b16 %v276
        %v349 = vunpack.c.h.b16 %v276
        %v350 = vunpack.c.l.b16 %v277
        %v351 = vunpack.c.h.b16 %v277
        %v352 = vunpack.c.l.b16 %v278
        %v353 = vunpack.c.h.b16 %v278
        %v354 = vunpack.c.l.b16 %v279
        %v355 = vunpack.c.h.b16 %v279
        %v356 = vunpack.c.l.b16 %v280
        %v357 = vunpack.c.h.b16 %v280
        %v358 = vunpack.c.l.b16 %v281
        %v359 = vunpack.c.h.b16 %v281
        %v360 = vunpack.c.l.b16 %v282
        %v361 = vunpack.c.h.b16 %v282
        %v362 = vunpack.c.l.b16 %v283
        %v363 = vunpack.c.h.b16 %v283
        %v364 = vunpack.c.l.b16 %v284
        %v365 = vunpack.c.h.b16 %v284
        %v366 = vunpack.c.l.b16 %v285
        %v367 = vunpack.c.h.b16 %v285
        %v368 = vunpack.c.l.b16 %v286
        %v369 = vunpack.c.h.b16 %v286
        %v370 = vunpack.c.l.b16 %v287
        %v371 = vunpack.c.h.b16 %v287
        %v372 = vpack.c.b16 %v320, %v316
        %v373 = vpack.c.b16 %v321, %v317
        %v374 = vpack.c.b16 %v322, %v318
        %v375 = vpack.c.b16 %v323, %v319
        %v376 = vpack.c.b16 %v328, %v324
        %v377 = vpack.c.b16 %v329, %v325
        %v378 = vpack.c.b16 %v330, %v326
        %v379 = vpack.c.b16 %v331, %v327
        %v380 = vpack.c.b16 %v336, %v332
        %v381 = vpack.c.b16 %v337, %v333
        %v382 = vpack.c.b16 %v338, %v334
        %v383 = vpack.c.b16 %v339, %v335
        %v384 = vpack.c.b16 %v344, %v340
        %v385 = vpack.c.b16 %v345, %v341
        %v386 = vpack.c.b16 %v346, %v342
        %v387 = vpack.c.b16 %v347, %v343
        %v388 = vpack.c.b16 %v352, %v348
        %v389 = vpack.c.b16 %v353, %v349
        %v390 = vpack.c.b16 %v354, %v350
        %v391 = vpack.c.b16 %v355, %v351
        %v392 = vpack.c.b16 %v360, %v356
        %v393 = vpack.c.b16 %v361, %v357
        %v394 = vpack.c.b16 %v362, %v358
        %v395 = vpack.c.b16 %v363, %v359
        %v396 = vpack.c.b16 %v368, %v364
        %v397 = vpack.c.b16 %v369, %v365
        %v398 = vpack.c.b16 %v370, %v366
        %v399 = vpack.c.b16 %v371, %v367
        %vm424 = vcmask 883712
        %v426 = vsel %vm424, %v259, 0
        %vm428 = vcmask 1045504
        %v430 = vsel %vm428, %v396, 0
        %v433 = vsel %vm428, %v397, 0
        %v436 = vsel %vm428, %v398, 0
        %v439 = vsel %vm428, %v399, 0
        %441 = vmatprep.subr.bf16.mxu0 0
        %442 = vmatpush1.bf16.msra.mxu0 0
        %443 = vmatprep.subr.bf16.mxu0 %v433
        %444 = vmatpush1.bf16.msra.mxu0 %v430
        %445 = vmatprep.subr.bf16.mxu0 %v393
        %446 = vmatpush1.bf16.msra.mxu0 %v392
        %447 = vmatprep.subr.bf16.mxu0 %v389
        %448 = vmatpush1.bf16.msra.mxu0 %v388
        %449 = vmatprep.subr.bf16.mxu0 %v385
        %450 = vmatpush1.bf16.msra.mxu0 %v384
        %451 = vmatprep.subr.bf16.mxu0 %v381
        %452 = vmatpush1.bf16.msra.mxu0 %v380
        %453 = vmatprep.subr.bf16.mxu0 %v377
        %454 = vmatpush1.bf16.msra.mxu0 %v376
        %455 = vmatprep.subr.bf16.mxu0 %v373
        %456 = vmatpush1.bf16.msra.mxu0 %v372
        %457 = vmatprep.subr.bf16.mxu0 0
        %458 = vmatpush2.bf16.msra.mxu0 0
        %459 = vmatprep.subr.bf16.mxu0 0
        %460 = vmatpush2.bf16.msra.mxu0 0
        %461 = vmatprep.subr.bf16.mxu0 0
        %462 = vmatpush2.bf16.msra.mxu0 0
        %463 = vmatprep.subr.bf16.mxu0 0
        %464 = vmatpush2.bf16.msra.mxu0 0
        %465 = vmatprep.subr.bf16.mxu0 0
        %466 = vmatpush2.bf16.msra.mxu0 0
        %467 = vmatprep.subr.bf16.mxu0 0
        %468 = vmatpush2.bf16.msra.mxu0 0
        %469 = vmatprep.subr.bf16.mxu0 0
        %470 = vmatpush2.bf16.msra.mxu0 0
        %471 = vmatprep.subr.bf16.mxu0 0
        %472 = vmatpush2.bf16.msra.mxu0 0
        %473 = vmatprep.mubr.bf16.mxu0 0
        %474 = vmatmul.mubr.bf16.gmra.mxu0 %v426
        %v475 = vpop.f32.mrf.mxu0
        %v476 = vadd.f32 0.0, %v475
        %v477 = vpop.f32.mrf.mxu0
        %v478 = vadd.f32 0.0, %v477
        %v479 = vpop.f32.mrf.mxu0
        %v480 = vpop.f32.mrf.mxu0
        %481 = vdwg.mxu0
        %482 = vmatprep.subr.bf16.mxu0 0
        %483 = vmatpush1.bf16.msra.mxu0 0
        %484 = vmatprep.subr.bf16.mxu0 %v439
        %485 = vmatpush1.bf16.msra.mxu0 %v436
        %486 = vmatprep.subr.bf16.mxu0 %v395
        %487 = vmatpush1.bf16.msra.mxu0 %v394
        %488 = vmatprep.subr.bf16.mxu0 %v391
        %489 = vmatpush1.bf16.msra.mxu0 %v390
        %490 = vmatprep.subr.bf16.mxu0 %v387
        %491 = vmatpush1.bf16.msra.mxu0 %v386
        %492 = vmatprep.subr.bf16.mxu0 %v383
        %493 = vmatpush1.bf16.msra.mxu0 %v382
        %494 = vmatprep.subr.bf16.mxu0 %v379
        %495 = vmatpush1.bf16.msra.mxu0 %v378
        %496 = vmatprep.subr.bf16.mxu0 %v375
        %497 = vmatpush1.bf16.msra.mxu0 %v374
        %498 = vmatprep.subr.bf16.mxu0 0
        %499 = vmatpush2.bf16.msra.mxu0 0
        %500 = vmatprep.subr.bf16.mxu0 0
        %501 = vmatpush2.bf16.msra.mxu0 0
        %502 = vmatprep.subr.bf16.mxu0 0
        %503 = vmatpush2.bf16.msra.mxu0 0
        %504 = vmatprep.subr.bf16.mxu0 0
        %505 = vmatpush2.bf16.msra.mxu0 0
        %506 = vmatprep.subr.bf16.mxu0 0
        %507 = vmatpush2.bf16.msra.mxu0 0
        %508 = vmatprep.subr.bf16.mxu0 0
        %509 = vmatpush2.bf16.msra.mxu0 0
        %510 = vmatprep.subr.bf16.mxu0 0
        %511 = vmatpush2.bf16.msra.mxu0 0
        %512 = vmatprep.subr.bf16.mxu0 0
        %513 = vmatpush2.bf16.msra.mxu0 0
        %514 = vmatprep.mubr.bf16.mxu0 0
        %515 = vmatmul.mubr.bf16.gmra.mxu0 %v426
        %v516 = vpop.f32.mrf.mxu0
        %v517 = vadd.f32 0.0, %v516
        %v518 = vpop.f32.mrf.mxu0
        %v519 = vadd.f32 0.0, %v518
        %v520 = vpop.f32.mrf.mxu0
        %v521 = vpop.f32.mrf.mxu0
        %522 = vdwg.mxu0
        %v523 = vpack.c.bf16 %v476, %v476
        %v524 = vpack.c.bf16 %v478, %v478
        %v525 = vpack.c.bf16 %v517, %v517
        %v526 = vpack.c.bf16 %v519, %v519
        %v531 = vcombine.low %v523, %v524
        %v532 = vcombine.low %v525, %v526
        %v534 = vunpack.c.l.s4 1983009808
        %v535 = vunpack.c.0.s8 %v534
        %v536 = vlaneseq
        %v537 = vshrl.u32 %v536, 7
        %v538 = vsub.s32 %v535, %v537
        %v539 = vrot.slane %v531, %v538
        %v541 = vunpack.c.l.s4 1983009808
        %v542 = vunpack.c.0.s8 %v541
        %v543 = vlaneseq
        %v544 = vshrl.u32 %v543, 7
        %v545 = vsub.s32 %v542, %v544
        %v546 = vrot.slane %v532, %v545
        %v547 = vcombine.low %v539, %v546
        %549 = vst [vmem:[%s252] sm:$0xff] %v547
        %vm550 = vcmask 1043456
        %v551 = vsel %vm550, %v476, 0.0
        %v552 = vsel %vm550, %v478, 0.0
        %v553 = vadd.f32 %v551, %v552
        %v554 = vsel %vm550, %v517, 0.0
        %v555 = vadd.f32 %v553, %v554
        %v556 = vsel %vm550, %v519, 0.0
        %v557 = vadd.f32 %v555, %v556
        %558 = vadd.xlane.f32.xlu0 %v557
        %v559 = vpop.xlane.xlu0 %558
        %v560 = vmul.f32 %v476, %v476
        %v561 = vmul.f32 %v478, %v478
        %v562 = vmul.f32 %v517, %v517
        %v563 = vmul.f32 %v519, %v519
        %v564 = vsel %vm550, %v560, 0.0
        %v565 = vsel %vm550, %v561, 0.0
        %v566 = vadd.f32 %v564, %v565
        %v567 = vsel %vm550, %v562, 0.0
        %v568 = vadd.f32 %v566, %v567
        %v569 = vsel %vm550, %v563, 0.0
        %v570 = vadd.f32 %v568, %v569
        %571 = vadd.xlane.f32.xlu0 %v570
        %v572 = vpop.xlane.xlu0 %571
        %v573 = vlaneseq
        %v574 = vand.u32 %v573, 127
        %vm575 = vcmp.eq.s32.totalorder %v574, 0
        %vm576 = vcmp.eq.s32.totalorder %v574, 1
        %v577 = vsel %vm576, %v572, 0.0
        %v578 = vsel %vm575, %v559, %v577
        %579 = vst [vmem:[%s257] sm:$0xf] %v578
        %s580 = smul.u32 4, %s15
        %p581 = scmp.lt.s32.totalorder %s580, 7
        %s582 = scalar_select %p581, %s580, 7
        %s583 = smul.addr %s582, 2
        %s584 = scalar_lea.vmem %s2, %s583
        %p585 = scmp.lt.s32.totalorder %s15, 1
        %s586 = scalar_select %p585, %s15, 1
        %s587 = smul.addr %s586, 4
        %s588 = scalar_lea.vmem %s3, %s587
        // Predicated region
        $region52: #{_lambda_.13} parent=46 // pred_check
          %p589 = pneg %p80
        $region53: #{_lambda_.13} parent=46 // pred_check_branch
          %591 = sbr.rel (%p589) target = $region55
        $region54: #{_lambda_.13} parent=46 // pred_region
          %s592 = smul.u32 4, %s15
        $region55: #{_lambda_.13} parent=46 // pred_fallthru
          _
        // Predicated region
        $region56: #{_lambda_.13} parent=46 // pred_check
          %p593 = pneg %p106
        $region57: #{_lambda_.13} parent=46 // pred_check_branch
          %595 = sbr.rel (%p593) target = $region59
        $region58: #{_lambda_.13} parent=46 // pred_region
          _
        $region59: #{_lambda_.13} parent=46 // pred_fallthru
          _
      $region47: #{_lambda_.13} parent=5 // pred_fallthru
        _
      %p596 = scmp.le.s32.totalorder 2, %s10
      // Predicated region
      $region60: #{_lambda_.13} parent=5 // pred_check
        %p597 = pneg %p596
      $region61: #{_lambda_.13} parent=5 // pred_check_branch
        %599 = sbr.rel (%p597) target = $region63
      $region62: #{_lambda_.13} parent=5 // pred_region
        %s600 = ssub.s32 %s10, 2
        // Predicated region
        $region64: #{_lambda_.13} parent=62 // pred_check
          %p601 = pneg %p86
        $region65: #{_lambda_.13} parent=62 // pred_check_branch
          %603 = sbr.rel (%p601) target = $region67
        $region66: #{_lambda_.13} parent=62 // pred_region
          %s604 = smul.u32 4, %s16
          %p605 = scmp.lt.s32.totalorder %s604, 7
          %s606 = scalar_select %p605, %s604, 7
          %s607 = smul.addr %s606, 2
          %s608 = scalar_lea.vmem %s2, %s607
        $region67: #{_lambda_.13} parent=62 // pred_fallthru
          _
        // Predicated region
        $region68: #{_lambda_.13} parent=62 // pred_check
          %p609 = pneg %p112
        $region69: #{_lambda_.13} parent=62 // pred_check_branch
          %611 = sbr.rel (%p609) target = $region71
        $region70: #{_lambda_.13} parent=62 // pred_region
          %p612 = scmp.lt.s32.totalorder %s16, 1
          %s613 = scalar_select %p612, %s16, 1
          %s614 = smul.addr %s613, 4
          %s615 = scalar_lea.vmem %s3, %s614
        $region71: #{_lambda_.13} parent=62 // pred_fallthru
          _
      $region63: #{_lambda_.13} parent=5 // pred_fallthru
        _
    $region6: #{_lambda_.13} parent=1 // loop_footer
      %s14 = sadd.s32 1, %s10
    $region7: #{_lambda_.13} parent=1 // loop_footer_branch
      %9 = sbr.rel target = $region3
    $region8: #{_lambda_.13} parent=1 // loop_exit
      _

// kernel: _lambda_.14
$region0: #{_lambda_.14}
  #allocation0 [shape = 'u32[]', space=smem, size = 0x4, offset = 0x4, fixed_abs, tag = 'smem constant byte address 0x4 - core index']
  #allocation1 [shape = 'u32[144,128]{1,0:T(1,128)}', space=vmem, size = 0x12000, scoped, tag = 'internal scratch']
  %s0 = inlined_call_operand.vmem [shape: bf16[4,1024], index: 0, kind: input, shape index: {}]
  %s1 = inlined_call_operand.vmem [shape: bf16[16,4], index: 1, kind: input, shape index: {}]
  %s2 = inlined_call_operand.vmem [shape: f32[4,1], index: 2, kind: input, shape index: {}]
  %s3 = inlined_call_operand.vmem [shape: f32[4,1], index: 3, kind: input, shape index: {}]
  %s4 = inlined_call_operand.vmem [shape: f32[1,1024], index: 4, kind: input, shape index: {}]
  %s5 = inlined_call_operand.vmem [shape: bf16[16,1024], index: 5, kind: output, shape index: {0}]
  %s6 = inlined_call_operand.vmem [shape: f32[16,256], index: 6, kind: output, shape index: {1}]
  %7 = xla_tuple %s5, %s6
  %s8 = sld [smem:[#allocation0]]
  $region114: #{_lambda_.14} parent=0
    _
  %s10 = ssub.s32 1, %s8
  %s11 = scalar_select 0, %s10, %s8
  $region1: #{_lambda_.14} parent=0
    #allocation2 [shape = 'u8[32768]{0}', space=vmem, size = 0x8000, scoped, tag = 'output window, operand 0']
    #allocation3 [shape = 'u8[16384]{0}', space=vmem, size = 0x4000, scoped, tag = 'output window, operand 1']
    loop: start=0, step=1, limit=4
    $region2: #{_lambda_.14} parent=1 // loop_pre_header
      _
    $region3: #{_lambda_.14} parent=1 // loop_header
      %s13 = sphi 0, %s17
      %p14 = scmp.ge.s32.totalorder %s13, 4
      %s23 = sphi 0, %s25
      %s26 = sphi 0, %s23
      %s27 = sphi 0, %s26
      %s43 = sphi 0, %s27
      %s47 = sphi 0, %s47
      %s49 = sphi 0, %s47
      %s50 = sphi 0, %s49
      %s64 = sphi 0, %s50
      %s68 = sphi 0, %s68
      %s70 = sphi 0, %s68
      %s71 = sphi 0, %s70
      %s85 = sphi 0, %s71
      %s89 = sphi 0, %s89
      %s91 = sphi 0, %s89
      %s92 = sphi 0, %s91
      %s106 = sphi 0, %s92
      %s112 = sphi 0, %s114
      %s115 = sphi 0, %s112
      %s116 = sphi 0, %s115
      %s132 = sphi 0, %s116
      %s138 = sphi 0, %s140
      %s141 = sphi 0, %s138
      %s142 = sphi 0, %s141
      %s158 = sphi 0, %s142
      %s164 = sphi 0, %s166
      %s167 = sphi 0, %s164
      %s168 = sphi 0, %s167
      %s184 = sphi 0, %s168
    $region4: #{_lambda_.14} parent=1 // loop_header_branch
      %16 = sbr.rel (%p14) target = $region8
    $region5: #{_lambda_.14} parent=1 // loop_body
      %s18 = ssub.s32 %s13, 1
      %s19 = ssub.s32 %s13, 2
      %s20 = sadd.s32 %s13, 1
      %s21 = ssub.s32 %s13, %s20
      %p22 = scmp.eq.s32.totalorder %s21, 0
      %s24 = sadd.s32 %s23, 1
      %s25 = scalar_select %p22, %s23, %s24
      %p28 = pneg %p22
      %p29 = scmp.eq.s32.totalorder %s13, 1
      %p30 = por %p28, %p29
      %p31 = scmp.ne.s32.totalorder %s23, %s26
      %p32 = scmp.eq.s32.totalorder %s13, 0
      %p33 = por %p31, %p32
      %p34 = scmp.ne.s32.totalorder %s23, %s26
      %p35 = scmp.eq.s32.totalorder %s18, 1
      %p36 = por %p34, %p35
      %p37 = scmp.ne.s32.totalorder %s26, %s27
      %p38 = scmp.eq.s32.totalorder %s18, 0
      %p39 = por %p37, %p38
      %p40 = scmp.ne.s32.totalorder %s26, %s27
      %p41 = scmp.eq.s32.totalorder %s19, 1
      %p42 = por %p40, %p41
      %p44 = scmp.ne.s32.totalorder %s27, %s43
      %p45 = scmp.eq.s32.totalorder %s19, 0
      %p46 = por %p44, %p45
      %s48 = sadd.s32 %s47, 1
      %p51 = scmp.eq.s32.totalorder %s13, 1
      %p52 = scmp.ne.s32.totalorder %s47, %s49
      %p53 = scmp.eq.s32.totalorder %s13, 0
      %p54 = por %p52, %p53
      %p55 = scmp.ne.s32.totalorder %s47, %s49
      %p56 = scmp.eq.s32.totalorder %s18, 1
      %p57 = por %p55, %p56
      %p58 = scmp.ne.s32.totalorder %s49, %s50
      %p59 = scmp.eq.s32.totalorder %s18, 0
      %p60 = por %p58, %p59
      %p61 = scmp.ne.s32.totalorder %s49, %s50
      %p62 = scmp.eq.s32.totalorder %s19, 1
      %p63 = por %p61, %p62
      %p65 = scmp.ne.s32.totalorder %s50, %s64
      %p66 = scmp.eq.s32.totalorder %s19, 0
      %p67 = por %p65, %p66
      %s69 = sadd.s32 %s68, 1
      %p72 = scmp.eq.s32.totalorder %s13, 1
      %p73 = scmp.ne.s32.totalorder %s68, %s70
      %p74 = scmp.eq.s32.totalorder %s13, 0
      %p75 = por %p73, %p74
      %p76 = scmp.ne.s32.totalorder %s68, %s70
      %p77 = scmp.eq.s32.totalorder %s18, 1
      %p78 = por %p76, %p77
      %p79 = scmp.ne.s32.totalorder %s70, %s71
      %p80 = scmp.eq.s32.totalorder %s18, 0
      %p81 = por %p79, %p80
      %p82 = scmp.ne.s32.totalorder %s70, %s71
      %p83 = scmp.eq.s32.totalorder %s19, 1
      %p84 = por %p82, %p83
      %p86 = scmp.ne.s32.totalorder %s71, %s85
      %p87 = scmp.eq.s32.totalorder %s19, 0
      %p88 = por %p86, %p87
      %s90 = sadd.s32 %s89, 1
      %p93 = scmp.eq.s32.totalorder %s13, 1
      %p94 = scmp.ne.s32.totalorder %s89, %s91
      %p95 = scmp.eq.s32.totalorder %s13, 0
      %p96 = por %p94, %p95
      %p97 = scmp.ne.s32.totalorder %s89, %s91
      %p98 = scmp.eq.s32.totalorder %s18, 1
      %p99 = por %p97, %p98
      %p100 = scmp.ne.s32.totalorder %s91, %s92
      %p101 = scmp.eq.s32.totalorder %s18, 0
      %p102 = por %p100, %p101
      %p103 = scmp.ne.s32.totalorder %s91, %s92
      %p104 = scmp.eq.s32.totalorder %s19, 1
      %p105 = por %p103, %p104
      %p107 = scmp.ne.s32.totalorder %s92, %s106
      %p108 = scmp.eq.s32.totalorder %s19, 0
      %p109 = por %p107, %p108
      %s110 = ssub.s32 %s13, %s20
      %p111 = scmp.eq.s32.totalorder %s110, 0
      %s113 = sadd.s32 %s112, 1
      %s114 = scalar_select %p111, %s112, %s113
      %p117 = pneg %p111
      %p118 = scmp.eq.s32.totalorder %s13, 1
      %p119 = por %p117, %p118
      %p120 = scmp.ne.s32.totalorder %s112, %s115
      %p121 = scmp.eq.s32.totalorder %s13, 0
      %p122 = por %p120, %p121
      %p123 = scmp.ne.s32.totalorder %s112, %s115
      %p124 = scmp.eq.s32.totalorder %s18, 1
      %p125 = por %p123, %p124
      %p126 = scmp.ne.s32.totalorder %s115, %s116
      %p127 = scmp.eq.s32.totalorder %s18, 0
      %p128 = por %p126, %p127
      %p129 = scmp.ne.s32.totalorder %s115, %s116
      %p130 = scmp.eq.s32.totalorder %s19, 1
      %p131 = por %p129, %p130
      %p133 = scmp.ne.s32.totalorder %s116, %s132
      %p134 = scmp.eq.s32.totalorder %s19, 0
      %p135 = por %p133, %p134
      %s136 = ssub.s32 %s13, %s20
      %p137 = scmp.eq.s32.totalorder %s136, 0
      %s139 = sadd.s32 %s138, 1
      %s140 = scalar_select %p137, %s138, %s139
      %p143 = pneg %p137
      %p144 = scmp.eq.s32.totalorder %s13, 1
      %p145 = por %p143, %p144
      %p146 = scmp.ne.s32.totalorder %s138, %s141
      %p147 = scmp.eq.s32.totalorder %s13, 0
      %p148 = por %p146, %p147
      %p149 = scmp.ne.s32.totalorder %s138, %s141
      %p150 = scmp.eq.s32.totalorder %s18, 1
      %p151 = por %p149, %p150
      %p152 = scmp.ne.s32.totalorder %s141, %s142
      %p153 = scmp.eq.s32.totalorder %s18, 0
      %p154 = por %p152, %p153
      %p155 = scmp.ne.s32.totalorder %s141, %s142
      %p156 = scmp.eq.s32.totalorder %s19, 1
      %p157 = por %p155, %p156
      %p159 = scmp.ne.s32.totalorder %s142, %s158
      %p160 = scmp.eq.s32.totalorder %s19, 0
      %p161 = por %p159, %p160
      %s162 = ssub.s32 %s13, %s20
      %p163 = scmp.eq.s32.totalorder %s162, 0
      %s165 = sadd.s32 %s164, 1
      %s166 = scalar_select %p163, %s164, %s165
      %p169 = pneg %p163
      %p170 = scmp.eq.s32.totalorder %s13, 1
      %p171 = por %p169, %p170
      %p172 = scmp.ne.s32.totalorder %s164, %s167
      %p173 = scmp.eq.s32.totalorder %s13, 0
      %p174 = por %p172, %p173
      %p175 = scmp.ne.s32.totalorder %s164, %s167
      %p176 = scmp.eq.s32.totalorder %s18, 1
      %p177 = por %p175, %p176
      %p178 = scmp.ne.s32.totalorder %s167, %s168
      %p179 = scmp.eq.s32.totalorder %s18, 0
      %p180 = por %p178, %p179
      %p181 = scmp.ne.s32.totalorder %s167, %s168
      %p182 = scmp.eq.s32.totalorder %s19, 1
      %p183 = por %p181, %p182
      %p185 = scmp.ne.s32.totalorder %s168, %s184
      %p186 = scmp.eq.s32.totalorder %s19, 0
      %p187 = por %p185, %p186
      %p188 = scmp.le.s32.totalorder 1, %s13
      %p189 = scmp.lt.s32.totalorder %s13, 3
      %p190 = pnand %p188, %p189
      %p191 = pneg %p190
      // Predicated region
      $region9: #{_lambda_.14} parent=5 // pred_check
        _
      $region10: #{_lambda_.14} parent=5 // pred_check_branch
        %193 = sbr.rel (%p190) target = $region12
      $region11: #{_lambda_.14} parent=5 // pred_region
        %s194 = ssub.s32 %s13, 1
        // Predicated region
        $region13: #{_lambda_.14} parent=11 // pred_check
          %p195 = pneg %p60
        $region14: #{_lambda_.14} parent=11 // pred_check_branch
          %197 = sbr.rel (%p195) target = $region16
        $region15: #{_lambda_.14} parent=11 // pred_region
          _
        $region16: #{_lambda_.14} parent=11 // pred_fallthru
          _
        // Predicated region
        $region17: #{_lambda_.14} parent=11 // pred_check
          %p198 = pneg %p81
        $region18: #{_lambda_.14} parent=11 // pred_check_branch
          %200 = sbr.rel (%p198) target = $region20
        $region19: #{_lambda_.14} parent=11 // pred_region
          _
        $region20: #{_lambda_.14} parent=11 // pred_fallthru
          _
        // Predicated region
        $region21: #{_lambda_.14} parent=11 // pred_check
          %p201 = pneg %p102
        $region22: #{_lambda_.14} parent=11 // pred_check_branch
          %203 = sbr.rel (%p201) target = $region24
        $region23: #{_lambda_.14} parent=11 // pred_region
          _
        $region24: #{_lambda_.14} parent=11 // pred_fallthru
          _
      $region12: #{_lambda_.14} parent=5 // pred_fallthru
        _
      %p204 = scmp.lt.s32.totalorder %s13, 2
      // Predicated region
      $region25: #{_lambda_.14} parent=5 // pred_check
        %p205 = pneg %p204
      $region26: #{_lambda_.14} parent=5 // pred_check_branch
        %207 = sbr.rel (%p205) target = $region28
      $region27: #{_lambda_.14} parent=5 // pred_region
        // Predicated region
        $region29: #{_lambda_.14} parent=27 // pred_check
          %p208 = pneg %p33
        $region30: #{_lambda_.14} parent=27 // pred_check_branch
          %210 = sbr.rel (%p208) target = $region32
        $region31: #{_lambda_.14} parent=27 // pred_region
          %s211 = smul.u32 4, %s13
          %p212 = scmp.lt.s32.totalorder %s211, 7
          %s213 = scalar_select %p212, %s211, 7
          %s214 = smul.addr %s213, 2
          %s215 = scalar_lea.vmem %s0, %s214
          %s216 = smul.u32 4, %s13
        $region32: #{_lambda_.14} parent=27 // pred_fallthru
          _
        // Predicated region
        $region33: #{_lambda_.14} parent=27 // pred_check
          %p217 = pneg %p122
        $region34: #{_lambda_.14} parent=27 // pred_check_branch
          %219 = sbr.rel (%p217) target = $region36
        $region35: #{_lambda_.14} parent=27 // pred_region
          %s220 = smul.u32 4, %s13
          %p221 = scmp.lt.s32.totalorder %s220, 7
          %s222 = scalar_select %p221, %s220, 7
          %s223 = scalar_lea.vmem %s4, %s222
          %s224 = smul.u32 4, %s13
        $region36: #{_lambda_.14} parent=27 // pred_fallthru
          _
      $region28: #{_lambda_.14} parent=5 // pred_fallthru
        _
      %p225 = scmp.le.s32.totalorder 1, %s13
      %p226 = scmp.lt.s32.totalorder %s13, 3
      %p227 = pnand %p225, %p226
      %p228 = pneg %p227
      // Predicated region
      $region37: #{_lambda_.14} parent=5 // pred_check
        _
      $region38: #{_lambda_.14} parent=5 // pred_check_branch
        %230 = sbr.rel (%p227) target = $region40
      $region39: #{_lambda_.14} parent=5 // pred_region
        %s231 = ssub.s32 %s13, 1
        %s232 = smul.u32 4, %s18
        %p233 = scmp.lt.s32.totalorder %s232, 7
        %s234 = scalar_select %p233, %s232, 7
        %s235 = smul.addr %s234, 2
        %s236 = scalar_lea.vmem %s0, %s235
        %p237 = pneg %p39
        %p238 = pneg %p36
        %p239 = pneg %p60
        %p240 = pneg %p57
        %p241 = pneg %p81
        %p242 = pneg %p78
        %p243 = pneg %p102
        %p244 = pneg %p99
        %s245 = smul.u32 4, %s18
        %p246 = scmp.lt.s32.totalorder %s245, 7
        %s247 = scalar_select %p246, %s245, 7
        %s248 = scalar_lea.vmem %s4, %s247
        %p249 = pneg %p128
        %p250 = pneg %p125
        %p251 = pneg %p154
        %p252 = pneg %p151
        %s253 = sand.u32 %s141, 1
        %s254 = sand.u32 %s141, 1
        %s255 = smul.addr %s254, 32
        %s256 = scalar_lea.vmem [#allocation2], %s255
        %p257 = pneg %p180
        %p258 = pneg %p177
        %s259 = sand.u32 %s167, 1
        %s260 = sand.u32 %s167, 1
        %s261 = smul.addr %s260, 16
        %s262 = scalar_lea.vmem [#allocation3], %s261
        %s263 = smul.u32 4, %s18
        %p264 = scmp.lt.s32.totalorder %s263, 7
        %s265 = scalar_select %p264, %s263, 7
        %s266 = smul.addr %s265, 2
        %s267 = scalar_lea.vmem %s0, %s266
        %s268 = smul.u32 4, %s18
        %s269 = smul.u32 4, %s18
        %p270 = scmp.lt.s32.totalorder %s269, 7
        %s271 = scalar_select %p270, %s269, 7
        %s272 = scalar_lea.vmem %s4, %s271
        %s273 = smul.u32 4, %s18
        %s274 = smul.u32 4, %s18
        %v276 = vld [vmem:[%s2] sm:$0xf]
        %v277 = vld [vmem:[%s267] sm:$0xff]
        %v278 = vunpack.c.l.bf16 %v277
        %v279 = vunpack.c.h.bf16 %v277
        %281 = vset.pattern.permute.xlu0 0
        %282 = vperm.xlu0 %281, %v276
        %v283 = vpop.permute.xlu0 %282
        %v287 = vcombine.high %v278, %v278
        %v288 = vcombine.high %v279, %v279
        %v291 = vmul.f32 %v283, %v278
        %v292 = vmul.f32 %v283, %v287
        %v293 = vmul.f32 %v283, %v279
        %v294 = vmul.f32 %v283, %v288
        %v295 = vld [vmem:[%s3] sm:$0xf]
        %v296 = vld [vmem:[%s272] sm:$0xf]
        %298 = vset.pattern.permute.xlu0 0
        %299 = vperm.xlu0 %298, %v295
        %v300 = vpop.permute.xlu0 %299
        %v303 = vlaneseq
        %v304 = vshrl.u32 %v303, 7
        %v305 = vsub.s32 0, %v304
        %v306 = vrot.slane %v296, %v305
        %v307 = vlaneseq
        %v308 = vshrl.u32 %v307, 7
        %v309 = vsub.s32 1, %v308
        %v310 = vrot.slane %v296, %v309
        %v311 = vlaneseq
        %v312 = vshrl.u32 %v311, 7
        %v313 = vsub.s32 2, %v312
        %v314 = vrot.slane %v296, %v313
        %v315 = vlaneseq
        %v316 = vshrl.u32 %v315, 7
        %v317 = vsub.s32 3, %v316
        %v318 = vrot.slane %v296, %v317
        %v323 = vmul.f32 %v300, %v306
        %v324 = vmul.f32 %v300, %v310
        %v325 = vmul.f32 %v300, %v314
        %v326 = vmul.f32 %v300, %v318
        %v327 = vadd.f32 %v291, %v323
        %v328 = vadd.f32 %v292, %v324
        %v329 = vadd.f32 %v293, %v325
        %v330 = vadd.f32 %v294, %v326
        %v331 = vmax.f32 %v327, 0.0
        %v332 = vmax.f32 %v328, 0.0
        %v333 = vmax.f32 %v329, 0.0
        %v334 = vmax.f32 %v330, 0.0
        %v335 = vld [vmem:[%s1] sm:$0xf]
        %v336 = vld [vmem:[%s1 + $0x4] sm:$0xf]
        %v337 = vpack.c.bf16 %v331, %v331
        %v338 = vpack.c.bf16 %v332, %v332
        %v339 = vpack.c.bf16 %v333, %v333
        %v340 = vpack.c.bf16 %v334, %v334
        %v343 = vunpack.c.l.b16 %v335
        %v344 = vunpack.c.l.b16 %v336
        %v345 = vpack.c.b16 %v344, %v343
        %vm346 = vcmask 31744
        %v348 = vsel %vm346, %v345, 0
        %vm350 = vcmask 1041408
        %v352 = vsel %vm350, %v337, 0
        %v355 = vsel %vm350, %v338, 0
        %v358 = vsel %vm350, %v339, 0
        %v361 = vsel %vm350, %v340, 0
        %363 = vmatprep.subr.bf16.mxu0 0
        %364 = vmatpush1.bf16.msra.mxu0 0
        %365 = vmatprep.subr.bf16.mxu0 0
        %366 = vmatpush1.bf16.msra.mxu0 0
        %367 = vmatprep.subr.bf16.mxu0 0
        %368 = vmatpush1.bf16.msra.mxu0 0
        %369 = vmatprep.subr.bf16.mxu0 0
        %370 = vmatpush1.bf16.msra.mxu0 0
        %371 = vmatprep.subr.bf16.mxu0 0
        %372 = vmatpush1.bf16.msra.mxu0 0
        %373 = vmatprep.subr.bf16.mxu0 0
        %374 = vmatpush1.bf16.msra.mxu0 0
        %375 = vmatprep.subr.bf16.mxu0 0
        %376 = vmatpush1.bf16.msra.mxu0 0
        %377 = vmatprep.subr.bf16.mxu0 %v355
        %378 = vmatpush1.bf16.msra.mxu0 %v352
        %379 = vmatprep.subr.bf16.mxu0 0
        %380 = vmatpush2.bf16.msra.mxu0 0
        %381 = vmatprep.subr.bf16.mxu0 0
        %382 = vmatpush2.bf16.msra.mxu0 0
        %383 = vmatprep.subr.bf16.mxu0 0
        %384 = vmatpush2.bf16.msra.mxu0 0
        %385 = vmatprep.subr.bf16.mxu0 0
        %386 = vmatpush2.bf16.msra.mxu0 0
        %387 = vmatprep.subr.bf16.mxu0 0
        %388 = vmatpush2.bf16.msra.mxu0 0
        %389 = vmatprep.subr.bf16.mxu0 0
        %390 = vmatpush2.bf16.msra.mxu0 0
        %391 = vmatprep.subr.bf16.mxu0 0
        %392 = vmatpush2.bf16.msra.mxu0 0
        %393 = vmatprep.subr.bf16.mxu0 0
        %394 = vmatpush2.bf16.msra.mxu0 0
        %395 = vmatprep.mubr.bf16.mxu0 0
        %396 = vmatmul.mubr.bf16.gmra.mxu0 %v348
        %v397 = vpop.f32.mrf.mxu0
        %v398 = vadd.f32 0.0, %v397
        %v399 = vpop.f32.mrf.mxu0
        %v400 = vadd.f32 0.0, %v399
        %v401 = vpop.f32.mrf.mxu0
        %v402 = vadd.f32 0.0, %v401
        %v403 = vpop.f32.mrf.mxu0
        %v404 = vadd.f32 0.0, %v403
        %405 = vdwg.mxu0
        %406 = vmatprep.subr.bf16.mxu0 0
        %407 = vmatpush1.bf16.msra.mxu0 0
        %408 = vmatprep.subr.bf16.mxu0 0
        %409 = vmatpush1.bf16.msra.mxu0 0
        %410 = vmatprep.subr.bf16.mxu0 0
        %411 = vmatpush1.bf16.msra.mxu0 0
        %412 = vmatprep.subr.bf16.mxu0 0
        %413 = vmatpush1.bf16.msra.mxu0 0
        %414 = vmatprep.subr.bf16.mxu0 0
        %415 = vmatpush1.bf16.msra.mxu0 0
        %416 = vmatprep.subr.bf16.mxu0 0
        %417 = vmatpush1.bf16.msra.mxu0 0
        %418 = vmatprep.subr.bf16.mxu0 0
        %419 = vmatpush1.bf16.msra.mxu0 0
        %420 = vmatprep.subr.bf16.mxu0 %v361
        %421 = vmatpush1.bf16.msra.mxu0 %v358
        %422 = vmatprep.subr.bf16.mxu0 0
        %423 = vmatpush2.bf16.msra.mxu0 0
        %424 = vmatprep.subr.bf16.mxu0 0
        %425 = vmatpush2.bf16.msra.mxu0 0
        %426 = vmatprep.subr.bf16.mxu0 0
        %427 = vmatpush2.bf16.msra.mxu0 0
        %428 = vmatprep.subr.bf16.mxu0 0
        %429 = vmatpush2.bf16.msra.mxu0 0
        %430 = vmatprep.subr.bf16.mxu0 0
        %431 = vmatpush2.bf16.msra.mxu0 0
        %432 = vmatprep.subr.bf16.mxu0 0
        %433 = vmatpush2.bf16.msra.mxu0 0
        %434 = vmatprep.subr.bf16.mxu0 0
        %435 = vmatpush2.bf16.msra.mxu0 0
        %436 = vmatprep.subr.bf16.mxu0 0
        %437 = vmatpush2.bf16.msra.mxu0 0
        %438 = vmatprep.mubr.bf16.mxu0 0
        %439 = vmatmul.mubr.bf16.gmra.mxu0 %v348
        %v440 = vpop.f32.mrf.mxu0
        %v441 = vadd.f32 0.0, %v440
        %v442 = vpop.f32.mrf.mxu0
        %v443 = vadd.f32 0.0, %v442
        %v444 = vpop.f32.mrf.mxu0
        %v445 = vadd.f32 0.0, %v444
        %v446 = vpop.f32.mrf.mxu0
        %v447 = vadd.f32 0.0, %v446
        %448 = vdwg.mxu0
        %v449 = vpack.c.bf16 %v402, %v398
        %v450 = vpack.c.bf16 %v404, %v400
        %v451 = vpack.c.bf16 %v445, %v441
        %v452 = vpack.c.bf16 %v447, %v443
        %v457 = vunpack.c.l.b16 %v449
        %v458 = vunpack.c.l.b16 %v450
        %v459 = vunpack.c.l.b16 %v451
        %v460 = vunpack.c.l.b16 %v452
        %v461 = vunpack.c.h.b16 %v449
        %v462 = vunpack.c.h.b16 %v450
        %v463 = vunpack.c.h.b16 %v451
        %v464 = vunpack.c.h.b16 %v452
        %v465 = vpack.c.b16 %v458, %v457
        %v466 = vpack.c.b16 %v460, %v459
        %v467 = vpack.c.b16 %v462, %v461
        %v468 = vpack.c.b16 %v464, %v463
        %473 = vst [vmem:[%s256] sm:$0xff] %v465
        %474 = vst [vmem:[%s256 + $0x8] sm:$0xff] %v466
        %475 = vst [vmem:[%s256 + $0x10] sm:$0xff] %v467
        %476 = vst [vmem:[%s256 + $0x18] sm:$0xff] %v468
        %v477 = vadd.f32 %v398, %v400
        %v478 = vadd.f32 %v477, %v441
        %v479 = vadd.f32 %v478, %v443
        %480 = vadd.xlane.f32.xlu0 %v479
        %v481 = vpop.xlane.xlu0 %480
        %v482 = vadd.f32 %v402, %v404
        %v483 = vadd.f32 %v482, %v445
        %v484 = vadd.f32 %v483, %v447
        %485 = vadd.xlane.f32.xlu0 %v484
        %v486 = vpop.xlane.xlu0 %485
        %v487 = vmul.f32 %v398, %v398
        %v488 = vmul.f32 %v400, %v400
        %v489 = vmul.f32 %v441, %v441
        %v490 = vmul.f32 %v443, %v443
        %v491 = vmul.f32 %v402, %v402
        %v492 = vmul.f32 %v404, %v404
        %v493 = vmul.f32 %v445, %v445
        %v494 = vmul.f32 %v447, %v447
        %v495 = vadd.f32 %v487, %v488
        %v496 = vadd.f32 %v495, %v489
        %v497 = vadd.f32 %v496, %v490
        %498 = vadd.xlane.f32.xlu0 %v497
        %v499 = vpop.xlane.xlu0 %498
        %v500 = vadd.f32 %v491, %v492
        %v501 = vadd.f32 %v500, %v493
        %v502 = vadd.f32 %v501, %v494
        %503 = vadd.xlane.f32.xlu0 %v502
        %v504 = vpop.xlane.xlu0 %503
        %v505 = vlaneseq
        %v506 = vand.u32 %v505, 127
        %vm507 = vcmp.eq.s32.totalorder %v506, 0
        %vm508 = vcmp.eq.s32.totalorder %v506, 1
        %v509 = vsel %vm508, %v499, 0.0
        %v510 = vsel %vm508, %v504, 0.0
        %v511 = vsel %vm507, %v481, %v509
        %v512 = vsel %vm507, %v486, %v510
        %513 = vst [vmem:[%s262] sm:$0xff] %v511
        %514 = vst [vmem:[%s262 + $0x8] sm:$0xff] %v512
        %s515 = sand.u32 %s141, 1
        %s516 = sand.u32 %s141, 1
        %s517 = smul.addr %s516, 32
        %s518 = scalar_lea.vmem [#allocation2], %s517
        %s519 = sand.u32 %s167, 1
        %s520 = sand.u32 %s167, 1
        %s521 = smul.addr %s520, 16
        %s522 = scalar_lea.vmem [#allocation3], %s521
        // Predicated region
        $region41: #{_lambda_.14} parent=39 // pred_check
          %p523 = pneg %p151
        $region42: #{_lambda_.14} parent=39 // pred_check_branch
          %525 = sbr.rel (%p523) target = $region44
        $region43: #{_lambda_.14} parent=39 // pred_region
          %s526 = smul.u32 4, %s18
          %s527 = smul.addr %s526, 4
          %s528 = scalar_lea.vmem %s5, %s527
          // Predicated region
          $region45: #{_lambda_.14} parent=43 // pred_check
            _
          $region46: #{_lambda_.14} parent=43 // pred_check_branch
            %530 = sbr.rel (0) target = $region48
          $region47: #{_lambda_.14} parent=43 // pred_region
            // Predicated region
            $region49: #{_lambda_.14} parent=47 // pred_check
              _
            $region50: #{_lambda_.14} parent=47 // pred_check_branch
              %532 = sbr.rel (0) target = $region52
            $region51: #{_lambda_.14} parent=47 // pred_region
              loop: start=0, step=1, limit=1
              $region53: #{_lambda_.14} parent=51 // loop_pre_header
                _
              $region54: #{_lambda_.14} parent=51 // loop_header
                %s534 = sphi 0, %s538
                %p535 = scmp.ge.s32.totalorder %s534, 1
                %s539 = sphi %s518, %s518
                %s540 = sphi %s528, %s528
              $region55: #{_lambda_.14} parent=51 // loop_header_branch
                %537 = sbr.rel (%p535) target = $region59
              $region56: #{_lambda_.14} parent=51 // loop_body
                %v541 = vld [vmem:[%s539] sm:$0xff]
                %542 = vst [vmem:[%s540] sm:$0xff] %v541
                %v543 = vld [vmem:[%s539 + $0x8] sm:$0xff]
                %544 = vst [vmem:[%s540 + $0x8] sm:$0xff] %v543
                %v545 = vld [vmem:[%s539 + $0x10] sm:$0xff]
                %546 = vst [vmem:[%s540 + $0x20] sm:$0xff] %v545
                %v547 = vld [vmem:[%s539 + $0x18] sm:$0xff]
                %548 = vst [vmem:[%s540 + $0x28] sm:$0xff] %v547
              $region57: #{_lambda_.14} parent=51 // loop_footer
                %s538 = sadd.s32 1, %s534
              $region58: #{_lambda_.14} parent=51 // loop_footer_branch
                %533 = sbr.rel target = $region54
              $region59: #{_lambda_.14} parent=51 // loop_exit
                _
            $region52: #{_lambda_.14} parent=47 // pred_fallthru
              _
            // Predicated region
            $region60: #{_lambda_.14} parent=47 // pred_check
              _
            $region61: #{_lambda_.14} parent=47 // pred_check_branch
              %550 = sbr.rel target = $region63
            $region62: #{_lambda_.14} parent=47 // pred_region
              _
            $region63: #{_lambda_.14} parent=47 // pred_fallthru
              _
          $region48: #{_lambda_.14} parent=43 // pred_fallthru
            _
          %551 = vnop
        $region44: #{_lambda_.14} parent=39 // pred_fallthru
          _
        // Predicated region
        $region64: #{_lambda_.14} parent=39 // pred_check
          %p552 = pneg %p177
        $region65: #{_lambda_.14} parent=39 // pred_check_branch
          %554 = sbr.rel (%p552) target = $region67
        $region66: #{_lambda_.14} parent=39 // pred_region
          %s555 = smul.addr %s18, 8
          %s556 = scalar_lea.vmem %s6, %s555
          // Predicated region
          $region68: #{_lambda_.14} parent=66 // pred_check
            _
          $region69: #{_lambda_.14} parent=66 // pred_check_branch
            %558 = sbr.rel (0) target = $region71
          $region70: #{_lambda_.14} parent=66 // pred_region
            // Predicated region
            $region72: #{_lambda_.14} parent=70 // pred_check
              _
            $region73: #{_lambda_.14} parent=70 // pred_check_branch
              %560 = sbr.rel (0) target = $region75
            $region74: #{_lambda_.14} parent=70 // pred_region
              // Predicated region
              $region87: #{_lambda_.14} parent=74 // pred_check
                _
              $region88: #{_lambda_.14} parent=74 // pred_check_branch
                %578 = sbr.rel (0) target = $region90
              $region89: #{_lambda_.14} parent=74 // pred_region
                loop: start=0, step=1, limit=1
                $region91: #{_lambda_.14} parent=89 // loop_pre_header
                  _
                $region92: #{_lambda_.14} parent=89 // loop_header
                  %s580 = sphi 0, %s584
                  %p581 = scmp.ge.s32.totalorder %s580, 1
                  %s585 = sphi %s522, %s522
                  %s586 = sphi %s556, %s556
                $region93: #{_lambda_.14} parent=89 // loop_header_branch
                  %583 = sbr.rel (%p581) target = $region97
                $region94: #{_lambda_.14} parent=89 // loop_body
                  %v587 = vld [vmem:[%s585] sm:$0xff]
                  %588 = vst [vmem:[%s586] sm:$0xff] %v587
                  %v589 = vld [vmem:[%s585 + $0x8] sm:$0xff]
                  %590 = vst [vmem:[%s586 + $0x10] sm:$0xff] %v589
                $region95: #{_lambda_.14} parent=89 // loop_footer
                  %s584 = sadd.s32 1, %s580
                $region96: #{_lambda_.14} parent=89 // loop_footer_branch
                  %579 = sbr.rel target = $region92
                $region97: #{_lambda_.14} parent=89 // loop_exit
                  _
              $region90: #{_lambda_.14} parent=74 // pred_fallthru
                _
              // Predicated region
              $region98: #{_lambda_.14} parent=74 // pred_check
                _
              $region99: #{_lambda_.14} parent=74 // pred_check_branch
                %592 = sbr.rel target = $region101
              $region100: #{_lambda_.14} parent=74 // pred_region
                _
              $region101: #{_lambda_.14} parent=74 // pred_fallthru
                _
            $region75: #{_lambda_.14} parent=70 // pred_fallthru
              _
            // Predicated region
            $region76: #{_lambda_.14} parent=70 // pred_check
              _
            $region77: #{_lambda_.14} parent=70 // pred_check_branch
              %562 = sbr.rel target = $region79
            $region78: #{_lambda_.14} parent=70 // pred_region
              %s564 = ssub.s32 256, 1
              loop: start=0, step=1, limit=1
              $region80: #{_lambda_.14} parent=78 // loop_pre_header
                _
              $region81: #{_lambda_.14} parent=78 // loop_header
                %s566 = sphi 0, %s570
                %p567 = scmp.ge.s32.totalorder %s566, 1
                %s571 = sphi %s522, %s522
                %s572 = sphi %s556, %s556
              $region82: #{_lambda_.14} parent=78 // loop_header_branch
                %569 = sbr.rel (%p567) target = $region86
              $region83: #{_lambda_.14} parent=78 // loop_body
                %v573 = vld [vmem:[%s571] sm:%s564]
                %574 = vst [vmem:[%s572] sm:%s564] %v573
                %v575 = vld [vmem:[%s571 + $0x8] sm:%s564]
                %576 = vst [vmem:[%s572 + $0x10] sm:%s564] %v575
              $region84: #{_lambda_.14} parent=78 // loop_footer
                %s570 = sadd.s32 1, %s566
              $region85: #{_lambda_.14} parent=78 // loop_footer_branch
                %565 = sbr.rel target = $region81
              $region86: #{_lambda_.14} parent=78 // loop_exit
                _
            $region79: #{_lambda_.14} parent=70 // pred_fallthru
              _
          $region71: #{_lambda_.14} parent=66 // pred_fallthru
            _
          %593 = vnop
        $region67: #{_lambda_.14} parent=39 // pred_fallthru
          _
      $region40: #{_lambda_.14} parent=5 // pred_fallthru
        _
      %p594 = scmp.le.s32.totalorder 2, %s13
      // Predicated region
      $region102: #{_lambda_.14} parent=5 // pred_check
        %p595 = pneg %p594
      $region103: #{_lambda_.14} parent=5 // pred_check_branch
        %597 = sbr.rel (%p595) target = $region105
      $region104: #{_lambda_.14} parent=5 // pred_region
        %s598 = ssub.s32 %s13, 2
        // Predicated region
        $region106: #{_lambda_.14} parent=104 // pred_check
          %p599 = pneg %p157
        $region107: #{_lambda_.14} parent=104 // pred_check_branch
          %601 = sbr.rel (%p599) target = $region109
        $region108: #{_lambda_.14} parent=104 // pred_region
          %s602 = sand.u32 %s142, 1
          %s603 = sand.u32 %s142, 1
          %s604 = smul.addr %s603, 32
          %s605 = scalar_lea.vmem [#allocation2], %s604
        $region109: #{_lambda_.14} parent=104 // pred_fallthru
          _
        // Predicated region
        $region110: #{_lambda_.14} parent=104 // pred_check
          %p606 = pneg %p183
        $region111: #{_lambda_.14} parent=104 // pred_check_branch
          %608 = sbr.rel (%p606) target = $region113
        $region112: #{_lambda_.14} parent=104 // pred_region
          %s609 = sand.u32 %s168, 1
          %s610 = sand.u32 %s168, 1
          %s611 = smul.addr %s610, 16
          %s612 = scalar_lea.vmem [#allocation3], %s611
        $region113: #{_lambda_.14} parent=104 // pred_fallthru
          _
      $region105: #{_lambda_.14} parent=5 // pred_fallthru
        _
    $region6: #{_lambda_.14} parent=1 // loop_footer
      %s17 = sadd.s32 1, %s13
    $region7: #{_lambda_.14} parent=1 // loop_footer_branch
      %12 = sbr.rel target = $region3
    $region8: #{_lambda_.14} parent=1 // loop_exit
      _

// kernel: _lambda_.15
$region0: #{_lambda_.15}
  #allocation0 [shape = 'u32[]', space=smem, size = 0x4, offset = 0x4, fixed_abs, tag = 'smem constant byte address 0x4 - core index']
  #allocation1 [shape = 'u32[144,128]{1,0:T(1,128)}', space=vmem, size = 0x12000, scoped, tag = 'internal scratch']
  %s0 = inlined_call_operand.vmem [shape: bf16[16,1024], index: 0, kind: input, shape index: {}]
  %s1 = inlined_call_operand.vmem [shape: bf16[4,1024], index: 1, kind: input, shape index: {}]
  %s2 = inlined_call_operand.vmem [shape: bf16[16,4], index: 2, kind: input, shape index: {}]
  %s3 = inlined_call_operand.vmem [shape: f32[16,1], index: 3, kind: input, shape index: {}]
  %s4 = inlined_call_operand.vmem [shape: f32[16,1], index: 4, kind: input, shape index: {}]
  %s5 = inlined_call_operand.vmem [shape: f32[1,1024], index: 5, kind: input, shape index: {}]
  %s6 = inlined_call_operand.vmem [shape: bf16[16,1024], index: 6, kind: output, shape index: {}]
  %s7 = sld [smem:[#allocation0]]
  $region99: #{_lambda_.15} parent=0
    _
  %s9 = ssub.s32 1, %s7
  %s10 = scalar_select 0, %s9, %s7
  $region1: #{_lambda_.15} parent=0
    #allocation2 [shape = 'u8[32768]{0}', space=vmem, size = 0x8000, scoped, tag = 'input window, operand 0']
    #allocation3 [shape = 'u8[32768]{0}', space=vmem, size = 0x8000, scoped, tag = 'output window, operand 0']
    loop: start=0, step=1, limit=4
    $region2: #{_lambda_.15} parent=1 // loop_pre_header
      _
    $region3: #{_lambda_.15} parent=1 // loop_header
      %s12 = sphi 0, %s16
      %p13 = scmp.ge.s32.totalorder %s12, 4
      %s22 = sphi 0, %s24
      %s25 = sphi 0, %s22
      %s26 = sphi 0, %s25
      %s42 = sphi 0, %s26
      %s48 = sphi 0, %s50
      %s51 = sphi 0, %s48
      %s52 = sphi 0, %s51
      %s68 = sphi 0, %s52
      %s72 = sphi 0, %s72
      %s74 = sphi 0, %s72
      %s75 = sphi 0, %s74
      %s89 = sphi 0, %s75
      %s93 = sphi 0, %s93
      %s95 = sphi 0, %s93
      %s96 = sphi 0, %s95
      %s110 = sphi 0, %s96
      %s114 = sphi 0, %s114
      %s116 = sphi 0, %s114
      %s117 = sphi 0, %s116
      %s131 = sphi 0, %s117
      %s137 = sphi 0, %s139
      %s140 = sphi 0, %s137
      %s141 = sphi 0, %s140
      %s157 = sphi 0, %s141
      %s163 = sphi 0, %s165
      %s166 = sphi 0, %s163
      %s167 = sphi 0, %s166
      %s183 = sphi 0, %s167
    $region4: #{_lambda_.15} parent=1 // loop_header_branch
      %15 = sbr.rel (%p13) target = $region8
    $region5: #{_lambda_.15} parent=1 // loop_body
      %s17 = ssub.s32 %s12, 1
      %s18 = ssub.s32 %s12, 2
      %s19 = sadd.s32 %s12, 1
      %s20 = ssub.s32 %s12, %s19
      %p21 = scmp.eq.s32.totalorder %s20, 0
      %s23 = sadd.s32 %s22, 1
      %s24 = scalar_select %p21, %s22, %s23
      %p27 = pneg %p21
      %p28 = scmp.eq.s32.totalorder %s12, 1
      %p29 = por %p27, %p28
      %p30 = scmp.ne.s32.totalorder %s22, %s25
      %p31 = scmp.eq.s32.totalorder %s12, 0
      %p32 = por %p30, %p31
      %p33 = scmp.ne.s32.totalorder %s22, %s25
      %p34 = scmp.eq.s32.totalorder %s17, 1
      %p35 = por %p33, %p34
      %p36 = scmp.ne.s32.totalorder %s25, %s26
      %p37 = scmp.eq.s32.totalorder %s17, 0
      %p38 = por %p36, %p37
      %p39 = scmp.ne.s32.totalorder %s25, %s26
      %p40 = scmp.eq.s32.totalorder %s18, 1
      %p41 = por %p39, %p40
      %p43 = scmp.ne.s32.totalorder %s26, %s42
      %p44 = scmp.eq.s32.totalorder %s18, 0
      %p45 = por %p43, %p44
      %s46 = ssub.s32 %s12, %s19
      %p47 = scmp.eq.s32.totalorder %s46, 0
      %s49 = sadd.s32 %s48, 1
      %s50 = scalar_select %p47, %s48, %s49
      %p53 = pneg %p47
      %p54 = scmp.eq.s32.totalorder %s12, 1
      %p55 = por %p53, %p54
      %p56 = scmp.ne.s32.totalorder %s48, %s51
      %p57 = scmp.eq.s32.totalorder %s12, 0
      %p58 = por %p56, %p57
      %p59 = scmp.ne.s32.totalorder %s48, %s51
      %p60 = scmp.eq.s32.totalorder %s17, 1
      %p61 = por %p59, %p60
      %p62 = scmp.ne.s32.totalorder %s51, %s52
      %p63 = scmp.eq.s32.totalorder %s17, 0
      %p64 = por %p62, %p63
      %p65 = scmp.ne.s32.totalorder %s51, %s52
      %p66 = scmp.eq.s32.totalorder %s18, 1
      %p67 = por %p65, %p66
      %p69 = scmp.ne.s32.totalorder %s52, %s68
      %p70 = scmp.eq.s32.totalorder %s18, 0
      %p71 = por %p69, %p70
      %s73 = sadd.s32 %s72, 1
      %p76 = scmp.eq.s32.totalorder %s12, 1
      %p77 = scmp.ne.s32.totalorder %s72, %s74
      %p78 = scmp.eq.s32.totalorder %s12, 0
      %p79 = por %p77, %p78
      %p80 = scmp.ne.s32.totalorder %s72, %s74
      %p81 = scmp.eq.s32.totalorder %s17, 1
      %p82 = por %p80, %p81
      %p83 = scmp.ne.s32.totalorder %s74, %s75
      %p84 = scmp.eq.s32.totalorder %s17, 0
      %p85 = por %p83, %p84
      %p86 = scmp.ne.s32.totalorder %s74, %s75
      %p87 = scmp.eq.s32.totalorder %s18, 1
      %p88 = por %p86, %p87
      %p90 = scmp.ne.s32.totalorder %s75, %s89
      %p91 = scmp.eq.s32.totalorder %s18, 0
      %p92 = por %p90, %p91
      %s94 = sadd.s32 %s93, 1
      %p97 = scmp.eq.s32.totalorder %s12, 1
      %p98 = scmp.ne.s32.totalorder %s93, %s95
      %p99 = scmp.eq.s32.totalorder %s12, 0
      %p100 = por %p98, %p99
      %p101 = scmp.ne.s32.totalorder %s93, %s95
      %p102 = scmp.eq.s32.totalorder %s17, 1
      %p103 = por %p101, %p102
      %p104 = scmp.ne.s32.totalorder %s95, %s96
      %p105 = scmp.eq.s32.totalorder %s17, 0
      %p106 = por %p104, %p105
      %p107 = scmp.ne.s32.totalorder %s95, %s96
      %p108 = scmp.eq.s32.totalorder %s18, 1
      %p109 = por %p107, %p108
      %p111 = scmp.ne.s32.totalorder %s96, %s110
      %p112 = scmp.eq.s32.totalorder %s18, 0
      %p113 = por %p111, %p112
      %s115 = sadd.s32 %s114, 1
      %p118 = scmp.eq.s32.totalorder %s12, 1
      %p119 = scmp.ne.s32.totalorder %s114, %s116
      %p120 = scmp.eq.s32.totalorder %s12, 0
      %p121 = por %p119, %p120
      %p122 = scmp.ne.s32.totalorder %s114, %s116
      %p123 = scmp.eq.s32.totalorder %s17, 1
      %p124 = por %p122, %p123
      %p125 = scmp.ne.s32.totalorder %s116, %s117
      %p126 = scmp.eq.s32.totalorder %s17, 0
      %p127 = por %p125, %p126
      %p128 = scmp.ne.s32.totalorder %s116, %s117
      %p129 = scmp.eq.s32.totalorder %s18, 1
      %p130 = por %p128, %p129
      %p132 = scmp.ne.s32.totalorder %s117, %s131
      %p133 = scmp.eq.s32.totalorder %s18, 0
      %p134 = por %p132, %p133
      %s135 = ssub.s32 %s12, %s19
      %p136 = scmp.eq.s32.totalorder %s135, 0
      %s138 = sadd.s32 %s137, 1
      %s139 = scalar_select %p136, %s137, %s138
      %p142 = pneg %p136
      %p143 = scmp.eq.s32.totalorder %s12, 1
      %p144 = por %p142, %p143
      %p145 = scmp.ne.s32.totalorder %s137, %s140
      %p146 = scmp.eq.s32.totalorder %s12, 0
      %p147 = por %p145, %p146
      %p148 = scmp.ne.s32.totalorder %s137, %s140
      %p149 = scmp.eq.s32.totalorder %s17, 1
      %p150 = por %p148, %p149
      %p151 = scmp.ne.s32.totalorder %s140, %s141
      %p152 = scmp.eq.s32.totalorder %s17, 0
      %p153 = por %p151, %p152
      %p154 = scmp.ne.s32.totalorder %s140, %s141
      %p155 = scmp.eq.s32.totalorder %s18, 1
      %p156 = por %p154, %p155
      %p158 = scmp.ne.s32.totalorder %s141, %s157
      %p159 = scmp.eq.s32.totalorder %s18, 0
      %p160 = por %p158, %p159
      %s161 = ssub.s32 %s12, %s19
      %p162 = scmp.eq.s32.totalorder %s161, 0
      %s164 = sadd.s32 %s163, 1
      %s165 = scalar_select %p162, %s163, %s164
      %p168 = pneg %p162
      %p169 = scmp.eq.s32.totalorder %s12, 1
      %p170 = por %p168, %p169
      %p171 = scmp.ne.s32.totalorder %s163, %s166
      %p172 = scmp.eq.s32.totalorder %s12, 0
      %p173 = por %p171, %p172
      %p174 = scmp.ne.s32.totalorder %s163, %s166
      %p175 = scmp.eq.s32.totalorder %s17, 1
      %p176 = por %p174, %p175
      %p177 = scmp.ne.s32.totalorder %s166, %s167
      %p178 = scmp.eq.s32.totalorder %s17, 0
      %p179 = por %p177, %p178
      %p180 = scmp.ne.s32.totalorder %s166, %s167
      %p181 = scmp.eq.s32.totalorder %s18, 1
      %p182 = por %p180, %p181
      %p184 = scmp.ne.s32.totalorder %s167, %s183
      %p185 = scmp.eq.s32.totalorder %s18, 0
      %p186 = por %p184, %p185
      %p187 = scmp.le.s32.totalorder 1, %s12
      %p188 = scmp.lt.s32.totalorder %s12, 3
      %p189 = pnand %p187, %p188
      %p190 = pneg %p189
      // Predicated region
      $region9: #{_lambda_.15} parent=5 // pred_check
        _
      $region10: #{_lambda_.15} parent=5 // pred_check_branch
        %192 = sbr.rel (%p189) target = $region12
      $region11: #{_lambda_.15} parent=5 // pred_region
        %s193 = ssub.s32 %s12, 1
        // Predicated region
        $region13: #{_lambda_.15} parent=11 // pred_check
          %p194 = pneg %p85
        $region14: #{_lambda_.15} parent=11 // pred_check_branch
          %196 = sbr.rel (%p194) target = $region16
        $region15: #{_lambda_.15} parent=11 // pred_region
          _
        $region16: #{_lambda_.15} parent=11 // pred_fallthru
          _
        // Predicated region
        $region17: #{_lambda_.15} parent=11 // pred_check
          %p197 = pneg %p106
        $region18: #{_lambda_.15} parent=11 // pred_check_branch
          %199 = sbr.rel (%p197) target = $region20
        $region19: #{_lambda_.15} parent=11 // pred_region
          _
        $region20: #{_lambda_.15} parent=11 // pred_fallthru
          _
        // Predicated region
        $region21: #{_lambda_.15} parent=11 // pred_check
          %p200 = pneg %p127
        $region22: #{_lambda_.15} parent=11 // pred_check_branch
          %202 = sbr.rel (%p200) target = $region24
        $region23: #{_lambda_.15} parent=11 // pred_region
          _
        $region24: #{_lambda_.15} parent=11 // pred_fallthru
          _
      $region12: #{_lambda_.15} parent=5 // pred_fallthru
        _
      %p203 = scmp.lt.s32.totalorder %s12, 2
      // Predicated region
      $region25: #{_lambda_.15} parent=5 // pred_check
        %p204 = pneg %p203
      $region26: #{_lambda_.15} parent=5 // pred_check_branch
        %206 = sbr.rel (%p204) target = $region28
      $region27: #{_lambda_.15} parent=5 // pred_region
        // Predicated region
        $region29: #{_lambda_.15} parent=27 // pred_check
          %p207 = pneg %p32
        $region30: #{_lambda_.15} parent=27 // pred_check_branch
          %209 = sbr.rel (%p207) target = $region32
        $region31: #{_lambda_.15} parent=27 // pred_region
          %s210 = sand.u32 %s22, 1
          %s211 = sand.u32 %s22, 1
          %s212 = smul.addr %s211, 32
          %s213 = scalar_lea.vmem [#allocation2], %s212
          %s214 = smul.u32 4, %s12
          %s215 = smul.addr %s214, 4
          %s216 = scalar_lea.vmem %s0, %s215
          // Predicated region
          $region33: #{_lambda_.15} parent=31 // pred_check
            _
          $region34: #{_lambda_.15} parent=31 // pred_check_branch
            %218 = sbr.rel (0) target = $region36
          $region35: #{_lambda_.15} parent=31 // pred_region
            // Predicated region
            $region37: #{_lambda_.15} parent=35 // pred_check
              _
            $region38: #{_lambda_.15} parent=35 // pred_check_branch
              %220 = sbr.rel (0) target = $region40
            $region39: #{_lambda_.15} parent=35 // pred_region
              loop: start=0, step=1, limit=1
              $region41: #{_lambda_.15} parent=39 // loop_pre_header
                _
              $region42: #{_lambda_.15} parent=39 // loop_header
                %s222 = sphi 0, %s226
                %p223 = scmp.ge.s32.totalorder %s222, 1
                %s227 = sphi %s216, %s216
                %s228 = sphi %s213, %s213
              $region43: #{_lambda_.15} parent=39 // loop_header_branch
                %225 = sbr.rel (%p223) target = $region47
              $region44: #{_lambda_.15} parent=39 // loop_body
                %v229 = vld [vmem:[%s227] sm:$0xff]
                %230 = vst [vmem:[%s228] sm:$0xff] %v229
                %v231 = vld [vmem:[%s227 + $0x8] sm:$0xff]
                %232 = vst [vmem:[%s228 + $0x8] sm:$0xff] %v231
                %v233 = vld [vmem:[%s227 + $0x20] sm:$0xff]
                %234 = vst [vmem:[%s228 + $0x10] sm:$0xff] %v233
                %v235 = vld [vmem:[%s227 + $0x28] sm:$0xff]
                %236 = vst [vmem:[%s228 + $0x18] sm:$0xff] %v235
              $region45: #{_lambda_.15} parent=39 // loop_footer
                %s226 = sadd.s32 1, %s222
              $region46: #{_lambda_.15} parent=39 // loop_footer_branch
                %221 = sbr.rel target = $region42
              $region47: #{_lambda_.15} parent=39 // loop_exit
                _
            $region40: #{_lambda_.15} parent=35 // pred_fallthru
              _
            // Predicated region
            $region48: #{_lambda_.15} parent=35 // pred_check
              _
            $region49: #{_lambda_.15} parent=35 // pred_check_branch
              %238 = sbr.rel target = $region51
            $region50: #{_lambda_.15} parent=35 // pred_region
              _
            $region51: #{_lambda_.15} parent=35 // pred_fallthru
              _
          $region36: #{_lambda_.15} parent=31 // pred_fallthru
            _
          %239 = vnop
        $region32: #{_lambda_.15} parent=27 // pred_fallthru
          _
        // Predicated region
        $region52: #{_lambda_.15} parent=27 // pred_check
          %p240 = pneg %p58
        $region53: #{_lambda_.15} parent=27 // pred_check_branch
          %242 = sbr.rel (%p240) target = $region55
        $region54: #{_lambda_.15} parent=27 // pred_region
          %s243 = smul.u32 4, %s12
          %p244 = scmp.lt.s32.totalorder %s243, 7
          %s245 = scalar_select %p244, %s243, 7
          %s246 = smul.addr %s245, 2
          %s247 = scalar_lea.vmem %s1, %s246
          %s248 = smul.u32 4, %s12
        $region55: #{_lambda_.15} parent=27 // pred_fallthru
          _
        // Predicated region
        $region56: #{_lambda_.15} parent=27 // pred_check
          %p249 = pneg %p147
        $region57: #{_lambda_.15} parent=27 // pred_check_branch
          %251 = sbr.rel (%p249) target = $region59
        $region58: #{_lambda_.15} parent=27 // pred_region
          %s252 = smul.u32 4, %s12
          %p253 = scmp.lt.s32.totalorder %s252, 7
          %s254 = scalar_select %p253, %s252, 7
          %s255 = scalar_lea.vmem %s5, %s254
          %s256 = smul.u32 4, %s12
        $region59: #{_lambda_.15} parent=27 // pred_fallthru
          _
      $region28: #{_lambda_.15} parent=5 // pred_fallthru
        _
      %p257 = scmp.le.s32.totalorder 1, %s12
      %p258 = scmp.lt.s32.totalorder %s12, 3
      %p259 = pnand %p257, %p258
      %p260 = pneg %p259
      // Predicated region
      $region60: #{_lambda_.15} parent=5 // pred_check
        _
      $region61: #{_lambda_.15} parent=5 // pred_check_branch
        %262 = sbr.rel (%p259) target = $region63
      $region62: #{_lambda_.15} parent=5 // pred_region
        %s263 = ssub.s32 %s12, 1
        %s264 = sand.u32 %s25, 1
        %s265 = sand.u32 %s25, 1
        %s266 = smul.addr %s265, 32
        %s267 = scalar_lea.vmem [#allocation2], %s266
        // Predicated region
        $region64: #{_lambda_.15} parent=62 // pred_check
          %p268 = pneg %p38
        $region65: #{_lambda_.15} parent=62 // pred_check_branch
          %270 = sbr.rel (%p268) target = $region67
        $region66: #{_lambda_.15} parent=62 // pred_region
          _
        $region67: #{_lambda_.15} parent=62 // pred_fallthru
          _
        %s271 = sand.u32 %s25, 1
        %s272 = sand.u32 %s25, 1
        %s273 = smul.addr %s272, 32
        %s274 = scalar_lea.vmem [#allocation2], %s273
        %p275 = pneg %p38
        %p276 = pneg %p35
        %s277 = smul.u32 4, %s17
        %p278 = scmp.lt.s32.totalorder %s277, 7
        %s279 = scalar_select %p278, %s277, 7
        %s280 = smul.addr %s279, 2
        %s281 = scalar_lea.vmem %s1, %s280
        %p282 = pneg %p64
        %p283 = pneg %p61
        %p284 = pneg %p85
        %p285 = pneg %p82
        %p286 = pneg %p106
        %p287 = pneg %p103
        %p288 = pneg %p127
        %p289 = pneg %p124
        %s290 = smul.u32 4, %s17
        %p291 = scmp.lt.s32.totalorder %s290, 7
        %s292 = scalar_select %p291, %s290, 7
        %s293 = scalar_lea.vmem %s5, %s292
        %p294 = pneg %p153
        %p295 = pneg %p150
        %p296 = pneg %p179
        %p297 = pneg %p176
        %s298 = sand.u32 %s166, 1
        %s299 = sand.u32 %s166, 1
        %s300 = smul.addr %s299, 32
        %s301 = scalar_lea.vmem [#allocation3], %s300
        %s302 = smul.u32 4, %s17
        %s303 = smul.u32 4, %s17
        %p304 = scmp.lt.s32.totalorder %s303, 7
        %s305 = scalar_select %p304, %s303, 7
        %s306 = smul.addr %s305, 2
        %s307 = scalar_lea.vmem %s1, %s306
        %s308 = smul.u32 4, %s17
        %s309 = smul.u32 4, %s17
        %p310 = scmp.lt.s32.totalorder %s309, 7
        %s311 = scalar_select %p310, %s309, 7
        %s312 = scalar_lea.vmem %s5, %s311
        %s313 = smul.u32 4, %s17
        %s314 = smul.u32 4, %s17
        %v316 = vld [vmem:[%s3] sm:$0xff]
        %v317 = vld [vmem:[%s3 + $0x8] sm:$0xff]
        %v318 = vld [vmem:[%s267] sm:$0xff]
        %v319 = vld [vmem:[%s267 + $0x8] sm:$0xff]
        %v320 = vld [vmem:[%s267 + $0x10] sm:$0xff]
        %v321 = vld [vmem:[%s267 + $0x18] sm:$0xff]
        %v322 = vunpack.c.l.bf16 %v318
        %v323 = vunpack.c.h.bf16 %v318
        %v324 = vunpack.c.l.bf16 %v319
        %v325 = vunpack.c.h.bf16 %v319
        %v326 = vunpack.c.l.bf16 %v320
        %v327 = vunpack.c.h.bf16 %v320
        %v328 = vunpack.c.l.bf16 %v321
        %v329 = vunpack.c.h.bf16 %v321
        %331 = vset.pattern.permute.xlu0 0
        %332 = vperm.xlu0 %331, %v316
        %v333 = vpop.permute.xlu0 %332
        %336 = vset.pattern.permute.xlu0 0
        %337 = vperm.xlu0 %336, %v317
        %v338 = vpop.permute.xlu0 %337
        %v340 = vmul.f32 %v333, %v322
        %v341 = vmul.f32 %v333, %v323
        %v342 = vmul.f32 %v333, %v324
        %v343 = vmul.f32 %v333, %v325
        %v344 = vmul.f32 %v338, %v326
        %v345 = vmul.f32 %v338, %v327
        %v346 = vmul.f32 %v338, %v328
        %v347 = vmul.f32 %v338, %v329
        %v348 = vld [vmem:[%s4] sm:$0xff]
        %v349 = vld [vmem:[%s4 + $0x8] sm:$0xff]
        %v350 = vld [vmem:[%s312] sm:$0xf]
        %352 = vset.pattern.permute.xlu0 0
        %353 = vperm.xlu0 %352, %v348
        %v354 = vpop.permute.xlu0 %353
        %357 = vset.pattern.permute.xlu0 0
        %358 = vperm.xlu0 %357, %v349
        %v359 = vpop.permute.xlu0 %358
        %v362 = vlaneseq
        %v363 = vshrl.u32 %v362, 7
        %v364 = vsub.s32 0, %v363
        %v365 = vrot.slane %v350, %v364
        %v366 = vlaneseq
        %v367 = vshrl.u32 %v366, 7
        %v368 = vsub.s32 1, %v367
        %v369 = vrot.slane %v350, %v368
        %v370 = vlaneseq
        %v371 = vshrl.u32 %v370, 7
        %v372 = vsub.s32 2, %v371
        %v373 = vrot.slane %v350, %v372
        %v374 = vlaneseq
        %v375 = vshrl.u32 %v374, 7
        %v376 = vsub.s32 3, %v375
        %v377 = vrot.slane %v350, %v376
        %v382 = vmul.f32 %v354, %v365
        %v383 = vmul.f32 %v354, %v369
        %v384 = vmul.f32 %v354, %v373
        %v385 = vmul.f32 %v354, %v377
        %v386 = vmul.f32 %v359, %v365
        %v387 = vmul.f32 %v359, %v369
        %v388 = vmul.f32 %v359, %v373
        %v389 = vmul.f32 %v359, %v377
        %v390 = vadd.f32 %v340, %v382
        %v391 = vadd.f32 %v341, %v383
        %v392 = vadd.f32 %v342, %v384
        %v393 = vadd.f32 %v343, %v385
        %v394 = vadd.f32 %v344, %v386
        %v395 = vadd.f32 %v345, %v387
        %v396 = vadd.f32 %v346, %v388
        %v397 = vadd.f32 %v347, %v389
        %v398 = vmax.f32 %v390, 0.0
        %v399 = vmax.f32 %v391, 0.0
        %v400 = vmax.f32 %v392, 0.0
        %v401 = vmax.f32 %v393, 0.0
        %v402 = vmax.f32 %v394, 0.0
        %v403 = vmax.f32 %v395, 0.0
        %v404 = vmax.f32 %v396, 0.0
        %v405 = vmax.f32 %v397, 0.0
        %v406 = vld [vmem:[%s2] sm:$0xf]
        %v407 = vld [vmem:[%s2 + $0x4] sm:$0xf]
        %v408 = vld [vmem:[%s307] sm:$0xff]
        %v411 = vunpack.c.l.b16 %v406
        %v412 = vunpack.c.l.b16 %v407
        %v413 = vpack.c.b16 %v412, %v411
        %v415 = vcombine.high %v408, %v408
        %v417 = vunpack.c.l.s4 1983009808
        %v418 = vunpack.c.0.s8 %v417
        %v419 = vlaneseq
        %v420 = vshrl.u32 %v419, 7
        %v421 = vsub.s32 %v418, %v420
        %v422 = vrot.slane %v408, %v421
        %v424 = vunpack.c.l.s4 1983009808
        %v425 = vunpack.c.0.s8 %v424
        %v426 = vlaneseq
        %v427 = vshrl.u32 %v426, 7
        %v428 = vsub.s32 %v425, %v427
        %v429 = vrot.slane %v415, %v428
        %v430 = vcombine.high %v422, %v422
        %v431 = vcombine.high %v429, %v429
        %vm432 = vcmask 31744
        %v434 = vsel %vm432, %v413, 0
        %vm436 = vcmask 1041408
        %v438 = vsel %vm436, %v422, 0
        %v441 = vsel %vm436, %v430, 0
        %v444 = vsel %vm436, %v429, 0
        %v447 = vsel %vm436, %v431, 0
        %449 = vmatprep.subr.bf16.mxu0 0
        %450 = vmatpush1.bf16.msra.mxu0 0
        %451 = vmatprep.subr.bf16.mxu0 0
        %452 = vmatpush1.bf16.msra.mxu0 0
        %453 = vmatprep.subr.bf16.mxu0 0
        %454 = vmatpush1.bf16.msra.mxu0 0
        %455 = vmatprep.subr.bf16.mxu0 0
        %456 = vmatpush1.bf16.msra.mxu0 0
        %457 = vmatprep.subr.bf16.mxu0 0
        %458 = vmatpush1.bf16.msra.mxu0 0
        %459 = vmatprep.subr.bf16.mxu0 0
        %460 = vmatpush1.bf16.msra.mxu0 0
        %461 = vmatprep.subr.bf16.mxu0 0
        %462 = vmatpush1.bf16.msra.mxu0 0
        %463 = vmatprep.subr.bf16.mxu0 %v441
        %464 = vmatpush1.bf16.msra.mxu0 %v438
        %465 = vmatprep.subr.bf16.mxu0 0
        %466 = vmatpush2.bf16.msra.mxu0 0
        %467 = vmatprep.subr.bf16.mxu0 0
        %468 = vmatpush2.bf16.msra.mxu0 0
        %469 = vmatprep.subr.bf16.mxu0 0
        %470 = vmatpush2.bf16.msra.mxu0 0
        %471 = vmatprep.subr.bf16.mxu0 0
        %472 = vmatpush2.bf16.msra.mxu0 0
        %473 = vmatprep.subr.bf16.mxu0 0
        %474 = vmatpush2.bf16.msra.mxu0 0
        %475 = vmatprep.subr.bf16.mxu0 0
        %476 = vmatpush2.bf16.msra.mxu0 0
        %477 = vmatprep.subr.bf16.mxu0 0
        %478 = vmatpush2.bf16.msra.mxu0 0
        %479 = vmatprep.subr.bf16.mxu0 0
        %480 = vmatpush2.bf16.msra.mxu0 0
        %481 = vmatprep.mubr.bf16.mxu0 0
        %482 = vmatmul.mubr.bf16.gmra.mxu0 %v434
        %v483 = vpop.f32.mrf.mxu0
        %v484 = vadd.f32 %v398, %v483
        %v485 = vpop.f32.mrf.mxu0
        %v486 = vadd.f32 %v399, %v485
        %v487 = vpop.f32.mrf.mxu0
        %v488 = vadd.f32 %v402, %v487
        %v489 = vpop.f32.mrf.mxu0
        %v490 = vadd.f32 %v403, %v489
        %491 = vdwg.mxu0
        %492 = vmatprep.subr.bf16.mxu0 0
        %493 = vmatpush1.bf16.msra.mxu0 0
        %494 = vmatprep.subr.bf16.mxu0 0
        %495 = vmatpush1.bf16.msra.mxu0 0
        %496 = vmatprep.subr.bf16.mxu0 0
        %497 = vmatpush1.bf16.msra.mxu0 0
        %498 = vmatprep.subr.bf16.mxu0 0
        %499 = vmatpush1.bf16.msra.mxu0 0
        %500 = vmatprep.subr.bf16.mxu0 0
        %501 = vmatpush1.bf16.msra.mxu0 0
        %502 = vmatprep.subr.bf16.mxu0 0
        %503 = vmatpush1.bf16.msra.mxu0 0
        %504 = vmatprep.subr.bf16.mxu0 0
        %505 = vmatpush1.bf16.msra.mxu0 0
        %506 = vmatprep.subr.bf16.mxu0 %v447
        %507 = vmatpush1.bf16.msra.mxu0 %v444
        %508 = vmatprep.subr.bf16.mxu0 0
        %509 = vmatpush2.bf16.msra.mxu0 0
        %510 = vmatprep.subr.bf16.mxu0 0
        %511 = vmatpush2.bf16.msra.mxu0 0
        %512 = vmatprep.subr.bf16.mxu0 0
        %513 = vmatpush2.bf16.msra.mxu0 0
        %514 = vmatprep.subr.bf16.mxu0 0
        %515 = vmatpush2.bf16.msra.mxu0 0
        %516 = vmatprep.subr.bf16.mxu0 0
        %517 = vmatpush2.bf16.msra.mxu0 0
        %518 = vmatprep.subr.bf16.mxu0 0
        %519 = vmatpush2.bf16.msra.mxu0 0
        %520 = vmatprep.subr.bf16.mxu0 0
        %521 = vmatpush2.bf16.msra.mxu0 0
        %522 = vmatprep.subr.bf16.mxu0 0
        %523 = vmatpush2.bf16.msra.mxu0 0
        %524 = vmatprep.mubr.bf16.mxu0 0
        %525 = vmatmul.mubr.bf16.gmra.mxu0 %v434
        %v526 = vpop.f32.mrf.mxu0
        %v527 = vadd.f32 %v400, %v526
        %v528 = vpop.f32.mrf.mxu0
        %v529 = vadd.f32 %v401, %v528
        %v530 = vpop.f32.mrf.mxu0
        %v531 = vadd.f32 %v404, %v530
        %v532 = vpop.f32.mrf.mxu0
        %v533 = vadd.f32 %v405, %v532
        %534 = vdwg.mxu0
        %v535 = vmax.f32 %v484, 0.0
        %v536 = vmax.f32 %v486, 0.0
        %v537 = vmax.f32 %v527, 0.0
        %v538 = vmax.f32 %v529, 0.0
        %v539 = vmax.f32 %v488, 0.0
        %v540 = vmax.f32 %v490, 0.0
        %v541 = vmax.f32 %v531, 0.0
        %v542 = vmax.f32 %v533, 0.0
        %v543 = vpack.c.bf16 %v539, %v535
        %v544 = vpack.c.bf16 %v540, %v536
        %v545 = vpack.c.bf16 %v541, %v537
        %v546 = vpack.c.bf16 %v542, %v538
        %v551 = vunpack.c.l.b16 %v543
        %v552 = vunpack.c.l.b16 %v544
        %v553 = vunpack.c.l.b16 %v545
        %v554 = vunpack.c.l.b16 %v546
        %v555 = vunpack.c.h.b16 %v543
        %v556 = vunpack.c.h.b16 %v544
        %v557 = vunpack.c.h.b16 %v545
        %v558 = vunpack.c.h.b16 %v546
        %v559 = vpack.c.b16 %v552, %v551
        %v560 = vpack.c.b16 %v554, %v553
        %v561 = vpack.c.b16 %v556, %v555
        %v562 = vpack.c.b16 %v558, %v557
        %567 = vst [vmem:[%s301] sm:$0xff] %v559
        %568 = vst [vmem:[%s301 + $0x8] sm:$0xff] %v560
        %569 = vst [vmem:[%s301 + $0x10] sm:$0xff] %v561
        %570 = vst [vmem:[%s301 + $0x18] sm:$0xff] %v562
        %s571 = sand.u32 %s166, 1
        %s572 = sand.u32 %s166, 1
        %s573 = smul.addr %s572, 32
        %s574 = scalar_lea.vmem [#allocation3], %s573
        // Predicated region
        $region68: #{_lambda_.15} parent=62 // pred_check
          %p575 = pneg %p176
        $region69: #{_lambda_.15} parent=62 // pred_check_branch
          %577 = sbr.rel (%p575) target = $region71
        $region70: #{_lambda_.15} parent=62 // pred_region
          %s578 = smul.u32 4, %s17
          %s579 = smul.addr %s578, 4
          %s580 = scalar_lea.vmem %s6, %s579
          // Predicated region
          $region72: #{_lambda_.15} parent=70 // pred_check
            _
          $region73: #{_lambda_.15} parent=70 // pred_check_branch
            %582 = sbr.rel (0) target = $region75
          $region74: #{_lambda_.15} parent=70 // pred_region
            // Predicated region
            $region76: #{_lambda_.15} parent=74 // pred_check
              _
            $region77: #{_lambda_.15} parent=74 // pred_check_branch
              %584 = sbr.rel (0) target = $region79
            $region78: #{_lambda_.15} parent=74 // pred_region
              loop: start=0, step=1, limit=1
              $region80: #{_lambda_.15} parent=78 // loop_pre_header
                _
              $region81: #{_lambda_.15} parent=78 // loop_header
                %s586 = sphi 0, %s590
                %p587 = scmp.ge.s32.totalorder %s586, 1
                %s591 = sphi %s574, %s574
                %s592 = sphi %s580, %s580
              $region82: #{_lambda_.15} parent=78 // loop_header_branch
                %589 = sbr.rel (%p587) target = $region86
              $region83: #{_lambda_.15} parent=78 // loop_body
                %v593 = vld [vmem:[%s591] sm:$0xff]
                %594 = vst [vmem:[%s592] sm:$0xff] %v593
                %v595 = vld [vmem:[%s591 + $0x8] sm:$0xff]
                %596 = vst [vmem:[%s592 + $0x8] sm:$0xff] %v595
                %v597 = vld [vmem:[%s591 + $0x10] sm:$0xff]
                %598 = vst [vmem:[%s592 + $0x20] sm:$0xff] %v597
                %v599 = vld [vmem:[%s591 + $0x18] sm:$0xff]
                %600 = vst [vmem:[%s592 + $0x28] sm:$0xff] %v599
              $region84: #{_lambda_.15} parent=78 // loop_footer
                %s590 = sadd.s32 1, %s586
              $region85: #{_lambda_.15} parent=78 // loop_footer_branch
                %585 = sbr.rel target = $region81
              $region86: #{_lambda_.15} parent=78 // loop_exit
                _
            $region79: #{_lambda_.15} parent=74 // pred_fallthru
              _
            // Predicated region
            $region87: #{_lambda_.15} parent=74 // pred_check
              _
            $region88: #{_lambda_.15} parent=74 // pred_check_branch
              %602 = sbr.rel target = $region90
            $region89: #{_lambda_.15} parent=74 // pred_region
              _
            $region90: #{_lambda_.15} parent=74 // pred_fallthru
              _
          $region75: #{_lambda_.15} parent=70 // pred_fallthru
            _
          %603 = vnop
        $region71: #{_lambda_.15} parent=62 // pred_fallthru
          _
      $region63: #{_lambda_.15} parent=5 // pred_fallthru
        _
      %p604 = scmp.le.s32.totalorder 2, %s12
      // Predicated region
      $region91: #{_lambda_.15} parent=5 // pred_check
        %p605 = pneg %p604
      $region92: #{_lambda_.15} parent=5 // pred_check_branch
        %607 = sbr.rel (%p605) target = $region94
      $region93: #{_lambda_.15} parent=5 // pred_region
        %s608 = ssub.s32 %s12, 2
        // Predicated region
        $region95: #{_lambda_.15} parent=93 // pred_check
          %p609 = pneg %p182
        $region96: #{_lambda_.15} parent=93 // pred_check_branch
          %611 = sbr.rel (%p609) target = $region98
        $region97: #{_lambda_.15} parent=93 // pred_region
          %s612 = sand.u32 %s167, 1
          %s613 = sand.u32 %s167, 1
          %s614 = smul.addr %s613, 32
          %s615 = scalar_lea.vmem [#allocation3], %s614
        $region98: #{_lambda_.15} parent=93 // pred_fallthru
          _
      $region94: #{_lambda_.15} parent=5 // pred_fallthru
        _
    $region6: #{_lambda_.15} parent=1 // loop_footer
      %s16 = sadd.s32 1, %s12
    $region7: #{_lambda_.15} parent=1 // loop_footer_branch
      %11 = sbr.rel target = $region3
    $region8: #{_lambda_.15} parent=1 // loop_exit
      _

// kernel: _lambda_.16
$region0: #{_lambda_.16}
  #allocation0 [shape = 'u32[]', space=smem, size = 0x4, offset = 0x4, fixed_abs, tag = 'smem constant byte address 0x4 - core index']
  #allocation1 [shape = 'u32[144,128]{1,0:T(1,128)}', space=vmem, size = 0x12000, scoped, tag = 'internal scratch']
  %s0 = inlined_call_operand.vmem [shape: bf16[16,1024], index: 0, kind: input, shape index: {}]
  %s1 = inlined_call_operand.vmem [shape: bf16[4,16], index: 1, kind: input, shape index: {}]
  %s2 = inlined_call_operand.vmem [shape: bf16[4,1024], index: 2, kind: output, shape index: {0}]
  %s3 = inlined_call_operand.vmem [shape: f32[4,256], index: 3, kind: output, shape index: {1}]
  %4 = xla_tuple %s2, %s3
  %s5 = sld [smem:[#allocation0]]
  $region72: #{_lambda_.16} parent=0
    _
  %s7 = ssub.s32 1, %s5
  %s8 = scalar_select 0, %s7, %s5
  $region1: #{_lambda_.16} parent=0
    #allocation2 [shape = 'u8[32768]{0}', space=vmem, size = 0x8000, scoped, tag = 'input window, operand 0']
    loop: start=0, step=1, limit=4
    $region2: #{_lambda_.16} parent=1 // loop_pre_header
      _
    $region3: #{_lambda_.16} parent=1 // loop_header
      %s10 = sphi 0, %s14
      %p11 = scmp.ge.s32.totalorder %s10, 4
      %s20 = sphi 0, %s22
      %s23 = sphi 0, %s20
      %s24 = sphi 0, %s23
      %s40 = sphi 0, %s24
      %s44 = sphi 0, %s44
      %s46 = sphi 0, %s44
      %s47 = sphi 0, %s46
      %s61 = sphi 0, %s47
      %s67 = sphi 0, %s69
      %s70 = sphi 0, %s67
      %s71 = sphi 0, %s70
      %s87 = sphi 0, %s71
      %s93 = sphi 0, %s95
      %s96 = sphi 0, %s93
      %s97 = sphi 0, %s96
      %s113 = sphi 0, %s97
    $region4: #{_lambda_.16} parent=1 // loop_header_branch
      %13 = sbr.rel (%p11) target = $region8
    $region5: #{_lambda_.16} parent=1 // loop_body
      %s15 = ssub.s32 %s10, 1
      %s16 = ssub.s32 %s10, 2
      %s17 = sadd.s32 %s10, 1
      %s18 = ssub.s32 %s10, %s17
      %p19 = scmp.eq.s32.totalorder %s18, 0
      %s21 = sadd.s32 %s20, 1
      %s22 = scalar_select %p19, %s20, %s21
      %p25 = pneg %p19
      %p26 = scmp.eq.s32.totalorder %s10, 1
      %p27 = por %p25, %p26
      %p28 = scmp.ne.s32.totalorder %s20, %s23
      %p29 = scmp.eq.s32.totalorder %s10, 0
      %p30 = por %p28, %p29
      %p31 = scmp.ne.s32.totalorder %s20, %s23
      %p32 = scmp.eq.s32.totalorder %s15, 1
      %p33 = por %p31, %p32
      %p34 = scmp.ne.s32.totalorder %s23, %s24
      %p35 = scmp.eq.s32.totalorder %s15, 0
      %p36 = por %p34, %p35
      %p37 = scmp.ne.s32.totalorder %s23, %s24
      %p38 = scmp.eq.s32.totalorder %s16, 1
      %p39 = por %p37, %p38
      %p41 = scmp.ne.s32.totalorder %s24, %s40
      %p42 = scmp.eq.s32.totalorder %s16, 0
      %p43 = por %p41, %p42
      %s45 = sadd.s32 %s44, 1
      %p48 = scmp.eq.s32.totalorder %s10, 1
      %p49 = scmp.ne.s32.totalorder %s44, %s46
      %p50 = scmp.eq.s32.totalorder %s10, 0
      %p51 = por %p49, %p50
      %p52 = scmp.ne.s32.totalorder %s44, %s46
      %p53 = scmp.eq.s32.totalorder %s15, 1
      %p54 = por %p52, %p53
      %p55 = scmp.ne.s32.totalorder %s46, %s47
      %p56 = scmp.eq.s32.totalorder %s15, 0
      %p57 = por %p55, %p56
      %p58 = scmp.ne.s32.totalorder %s46, %s47
      %p59 = scmp.eq.s32.totalorder %s16, 1
      %p60 = por %p58, %p59
      %p62 = scmp.ne.s32.totalorder %s47, %s61
      %p63 = scmp.eq.s32.totalorder %s16, 0
      %p64 = por %p62, %p63
      %s65 = ssub.s32 %s10, %s17
      %p66 = scmp.eq.s32.totalorder %s65, 0
      %s68 = sadd.s32 %s67, 1
      %s69 = scalar_select %p66, %s67, %s68
      %p72 = pneg %p66
      %p73 = scmp.eq.s32.totalorder %s10, 1
      %p74 = por %p72, %p73
      %p75 = scmp.ne.s32.totalorder %s67, %s70
      %p76 = scmp.eq.s32.totalorder %s10, 0
      %p77 = por %p75, %p76
      %p78 = scmp.ne.s32.totalorder %s67, %s70
      %p79 = scmp.eq.s32.totalorder %s15, 1
      %p80 = por %p78, %p79
      %p81 = scmp.ne.s32.totalorder %s70, %s71
      %p82 = scmp.eq.s32.totalorder %s15, 0
      %p83 = por %p81, %p82
      %p84 = scmp.ne.s32.totalorder %s70, %s71
      %p85 = scmp.eq.s32.totalorder %s16, 1
      %p86 = por %p84, %p85
      %p88 = scmp.ne.s32.totalorder %s71, %s87
      %p89 = scmp.eq.s32.totalorder %s16, 0
      %p90 = por %p88, %p89
      %s91 = ssub.s32 %s10, %s17
      %p92 = scmp.eq.s32.totalorder %s91, 0
      %s94 = sadd.s32 %s93, 1
      %s95 = scalar_select %p92, %s93, %s94
      %p98 = pneg %p92
      %p99 = scmp.eq.s32.totalorder %s10, 1
      %p100 = por %p98, %p99
      %p101 = scmp.ne.s32.totalorder %s93, %s96
      %p102 = scmp.eq.s32.totalorder %s10, 0
      %p103 = por %p101, %p102
      %p104 = scmp.ne.s32.totalorder %s93, %s96
      %p105 = scmp.eq.s32.totalorder %s15, 1
      %p106 = por %p104, %p105
      %p107 = scmp.ne.s32.totalorder %s96, %s97
      %p108 = scmp.eq.s32.totalorder %s15, 0
      %p109 = por %p107, %p108
      %p110 = scmp.ne.s32.totalorder %s96, %s97
      %p111 = scmp.eq.s32.totalorder %s16, 1
      %p112 = por %p110, %p111
      %p114 = scmp.ne.s32.totalorder %s97, %s113
      %p115 = scmp.eq.s32.totalorder %s16, 0
      %p116 = por %p114, %p115
      %p117 = scmp.le.s32.totalorder 1, %s10
      %p118 = scmp.lt.s32.totalorder %s10, 3
      %p119 = pnand %p117, %p118
      %p120 = pneg %p119
      // Predicated region
      $region9: #{_lambda_.16} parent=5 // pred_check
        _
      $region10: #{_lambda_.16} parent=5 // pred_check_branch
        %122 = sbr.rel (%p119) target = $region12
      $region11: #{_lambda_.16} parent=5 // pred_region
        %s123 = ssub.s32 %s10, 1
        // Predicated region
        $region13: #{_lambda_.16} parent=11 // pred_check
          %p124 = pneg %p57
        $region14: #{_lambda_.16} parent=11 // pred_check_branch
          %126 = sbr.rel (%p124) target = $region16
        $region15: #{_lambda_.16} parent=11 // pred_region
          _
        $region16: #{_lambda_.16} parent=11 // pred_fallthru
          _
      $region12: #{_lambda_.16} parent=5 // pred_fallthru
        _
      %p127 = scmp.lt.s32.totalorder %s10, 2
      // Predicated region
      $region17: #{_lambda_.16} parent=5 // pred_check
        %p128 = pneg %p127
      $region18: #{_lambda_.16} parent=5 // pred_check_branch
        %130 = sbr.rel (%p128) target = $region20
      $region19: #{_lambda_.16} parent=5 // pred_region
        // Predicated region
        $region21: #{_lambda_.16} parent=19 // pred_check
          %p131 = pneg %p30
        $region22: #{_lambda_.16} parent=19 // pred_check_branch
          %133 = sbr.rel (%p131) target = $region24
        $region23: #{_lambda_.16} parent=19 // pred_region
          %s134 = sand.u32 %s20, 1
          %s135 = sand.u32 %s20, 1
          %s136 = smul.addr %s135, 32
          %s137 = scalar_lea.vmem [#allocation2], %s136
          %s138 = smul.u32 4, %s10
          %s139 = smul.addr %s138, 4
          %s140 = scalar_lea.vmem %s0, %s139
          // Predicated region
          $region25: #{_lambda_.16} parent=23 // pred_check
            _
          $region26: #{_lambda_.16} parent=23 // pred_check_branch
            %142 = sbr.rel (0) target = $region28
          $region27: #{_lambda_.16} parent=23 // pred_region
            // Predicated region
            $region29: #{_lambda_.16} parent=27 // pred_check
              _
            $region30: #{_lambda_.16} parent=27 // pred_check_branch
              %144 = sbr.rel (0) target = $region32
            $region31: #{_lambda_.16} parent=27 // pred_region
              loop: start=0, step=1, limit=1
              $region33: #{_lambda_.16} parent=31 // loop_pre_header
                _
              $region34: #{_lambda_.16} parent=31 // loop_header
                %s146 = sphi 0, %s150
                %p147 = scmp.ge.s32.totalorder %s146, 1
                %s151 = sphi %s140, %s140
                %s152 = sphi %s137, %s137
              $region35: #{_lambda_.16} parent=31 // loop_header_branch
                %149 = sbr.rel (%p147) target = $region39
              $region36: #{_lambda_.16} parent=31 // loop_body
                %v153 = vld [vmem:[%s151] sm:$0xff]
                %154 = vst [vmem:[%s152] sm:$0xff] %v153
                %v155 = vld [vmem:[%s151 + $0x8] sm:$0xff]
                %156 = vst [vmem:[%s152 + $0x8] sm:$0xff] %v155
                %v157 = vld [vmem:[%s151 + $0x20] sm:$0xff]
                %158 = vst [vmem:[%s152 + $0x10] sm:$0xff] %v157
                %v159 = vld [vmem:[%s151 + $0x28] sm:$0xff]
                %160 = vst [vmem:[%s152 + $0x18] sm:$0xff] %v159
              $region37: #{_lambda_.16} parent=31 // loop_footer
                %s150 = sadd.s32 1, %s146
              $region38: #{_lambda_.16} parent=31 // loop_footer_branch
                %145 = sbr.rel target = $region34
              $region39: #{_lambda_.16} parent=31 // loop_exit
                _
            $region32: #{_lambda_.16} parent=27 // pred_fallthru
              _
            // Predicated region
            $region40: #{_lambda_.16} parent=27 // pred_check
              _
            $region41: #{_lambda_.16} parent=27 // pred_check_branch
              %162 = sbr.rel target = $region43
            $region42: #{_lambda_.16} parent=27 // pred_region
              _
            $region43: #{_lambda_.16} parent=27 // pred_fallthru
              _
          $region28: #{_lambda_.16} parent=23 // pred_fallthru
            _
          %163 = vnop
        $region24: #{_lambda_.16} parent=19 // pred_fallthru
          _
      $region20: #{_lambda_.16} parent=5 // pred_fallthru
        _
      %p164 = scmp.le.s32.totalorder 1, %s10
      %p165 = scmp.lt.s32.totalorder %s10, 3
      %p166 = pnand %p164, %p165
      %p167 = pneg %p166
      // Predicated region
      $region44: #{_lambda_.16} parent=5 // pred_check
        _
      $region45: #{_lambda_.16} parent=5 // pred_check_branch
        %169 = sbr.rel (%p166) target = $region47
      $region46: #{_lambda_.16} parent=5 // pred_region
        %s170 = ssub.s32 %s10, 1
        %s171 = sand.u32 %s23, 1
        %s172 = sand.u32 %s23, 1
        %s173 = smul.addr %s172, 32
        %s174 = scalar_lea.vmem [#allocation2], %s173
        // Predicated region
        $region48: #{_lambda_.16} parent=46 // pred_check
          %p175 = pneg %p36
        $region49: #{_lambda_.16} parent=46 // pred_check_branch
          %177 = sbr.rel (%p175) target = $region51
        $region50: #{_lambda_.16} parent=46 // pred_region
          _
        $region51: #{_lambda_.16} parent=46 // pred_fallthru
          _
        %s178 = sand.u32 %s23, 1
        %s179 = sand.u32 %s23, 1
        %s180 = smul.addr %s179, 32
        %s181 = scalar_lea.vmem [#allocation2], %s180
        %p182 = pneg %p36
        %p183 = pneg %p33
        %p184 = pneg %p57
        %p185 = pneg %p54
        %p186 = pneg %p83
        %p187 = pneg %p80
        %s188 = smul.u32 4, %s15
        %p189 = scmp.lt.s32.totalorder %s188, 7
        %s190 = scalar_select %p189, %s188, 7
        %s191 = smul.addr %s190, 2
        %s192 = scalar_lea.vmem %s2, %s191
        %p193 = pneg %p109
        %p194 = pneg %p106
        %p195 = scmp.lt.s32.totalorder %s15, 1
        %s196 = scalar_select %p195, %s15, 1
        %s197 = smul.addr %s196, 4
        %s198 = scalar_lea.vmem %s3, %s197
        %s199 = smul.u32 4, %s15
        %s200 = smul.u32 4, %s15
        %p201 = scmp.lt.s32.totalorder %s200, 7
        %s202 = scalar_select %p201, %s200, 7
        %s203 = smul.addr %s202, 2
        %s204 = scalar_lea.vmem %s2, %s203
        %s205 = smul.u32 4, %s15
        %p206 = scmp.lt.s32.totalorder %s15, 1
        %s207 = scalar_select %p206, %s15, 1
        %s208 = smul.addr %s207, 4
        %s209 = scalar_lea.vmem %s3, %s208
        %v211 = vld [vmem:[%s1] sm:$0x3]
        %v212 = vld [vmem:[%s174] sm:$0xff]
        %v213 = vld [vmem:[%s174 + $0x8] sm:$0xff]
        %v214 = vld [vmem:[%s174 + $0x10] sm:$0xff]
        %v215 = vld [vmem:[%s174 + $0x18] sm:$0xff]
        %v220 = vunpack.c.l.b16 %v212
        %v221 = vunpack.c.h.b16 %v212
        %v222 = vunpack.c.l.b16 %v213
        %v223 = vunpack.c.h.b16 %v213
        %v224 = vunpack.c.l.b16 %v214
        %v225 = vunpack.c.h.b16 %v214
        %v226 = vunpack.c.l.b16 %v215
        %v227 = vunpack.c.h.b16 %v215
        %v228 = vpack.c.b16 %v224, %v220
        %v229 = vpack.c.b16 %v225, %v221
        %v230 = vpack.c.b16 %v226, %v222
        %v231 = vpack.c.b16 %v227, %v223
        %vm236 = vcmask 130048
        %v238 = vsel %vm236, %v211, 0
        %240 = vmatprep.subr.bf16.mxu0 0
        %241 = vmatpush1.bf16.msra.mxu0 0
        %242 = vmatprep.subr.bf16.mxu0 0
        %243 = vmatpush1.bf16.msra.mxu0 0
        %244 = vmatprep.subr.bf16.mxu0 0
        %245 = vmatpush1.bf16.msra.mxu0 0
        %246 = vmatprep.subr.bf16.mxu0 0
        %247 = vmatpush1.bf16.msra.mxu0 0
        %248 = vmatprep.subr.bf16.mxu0 0
        %249 = vmatpush1.bf16.msra.mxu0 0
        %250 = vmatprep.subr.bf16.mxu0 0
        %251 = vmatpush1.bf16.msra.mxu0 0
        %252 = vmatprep.subr.bf16.mxu0 0
        %253 = vmatpush1.bf16.msra.mxu0 0
        %254 = vmatprep.subr.bf16.mxu0 %v229
        %255 = vmatpush1.bf16.msra.mxu0 %v228
        %256 = vmatprep.subr.bf16.mxu0 0
        %257 = vmatpush2.bf16.msra.mxu0 0
        %258 = vmatprep.subr.bf16.mxu0 0
        %259 = vmatpush2.bf16.msra.mxu0 0
        %260 = vmatprep.subr.bf16.mxu0 0
        %261 = vmatpush2.bf16.msra.mxu0 0
        %262 = vmatprep.subr.bf16.mxu0 0
        %263 = vmatpush2.bf16.msra.mxu0 0
        %264 = vmatprep.subr.bf16.mxu0 0
        %265 = vmatpush2.bf16.msra.mxu0 0
        %266 = vmatprep.subr.bf16.mxu0 0
        %267 = vmatpush2.bf16.msra.mxu0 0
        %268 = vmatprep.subr.bf16.mxu0 0
        %269 = vmatpush2.bf16.msra.mxu0 0
        %270 = vmatprep.subr.bf16.mxu0 0
        %271 = vmatpush2.bf16.msra.mxu0 0
        %272 = vmatprep.mubr.bf16.mxu0 0
        %273 = vmatmul.mubr.bf16.gmra.mxu0 %v238
        %v274 = vpop.f32.mrf.mxu0
        %v275 = vadd.f32 0.0, %v274
        %v276 = vpop.f32.mrf.mxu0
        %v277 = vadd.f32 0.0, %v276
        %v278 = vpop.f32.mrf.mxu0
        %v279 = vpop.f32.mrf.mxu0
        %280 = vdwg.mxu0
        %281 = vmatprep.subr.bf16.mxu0 0
        %282 = vmatpush1.bf16.msra.mxu0 0
        %283 = vmatprep.subr.bf16.mxu0 0
        %284 = vmatpush1.bf16.msra.mxu0 0
        %285 = vmatprep.subr.bf16.mxu0 0
        %286 = vmatpush1.bf16.msra.mxu0 0
        %287 = vmatprep.subr.bf16.mxu0 0
        %288 = vmatpush1.bf16.msra.mxu0 0
        %289 = vmatprep.subr.bf16.mxu0 0
        %290 = vmatpush1.bf16.msra.mxu0 0
        %291 = vmatprep.subr.bf16.mxu0 0
        %292 = vmatpush1.bf16.msra.mxu0 0
        %293 = vmatprep.subr.bf16.mxu0 0
        %294 = vmatpush1.bf16.msra.mxu0 0
        %295 = vmatprep.subr.bf16.mxu0 %v231
        %296 = vmatpush1.bf16.msra.mxu0 %v230
        %297 = vmatprep.subr.bf16.mxu0 0
        %298 = vmatpush2.bf16.msra.mxu0 0
        %299 = vmatprep.subr.bf16.mxu0 0
        %300 = vmatpush2.bf16.msra.mxu0 0
        %301 = vmatprep.subr.bf16.mxu0 0
        %302 = vmatpush2.bf16.msra.mxu0 0
        %303 = vmatprep.subr.bf16.mxu0 0
        %304 = vmatpush2.bf16.msra.mxu0 0
        %305 = vmatprep.subr.bf16.mxu0 0
        %306 = vmatpush2.bf16.msra.mxu0 0
        %307 = vmatprep.subr.bf16.mxu0 0
        %308 = vmatpush2.bf16.msra.mxu0 0
        %309 = vmatprep.subr.bf16.mxu0 0
        %310 = vmatpush2.bf16.msra.mxu0 0
        %311 = vmatprep.subr.bf16.mxu0 0
        %312 = vmatpush2.bf16.msra.mxu0 0
        %313 = vmatprep.mubr.bf16.mxu0 0
        %314 = vmatmul.mubr.bf16.gmra.mxu0 %v238
        %v315 = vpop.f32.mrf.mxu0
        %v316 = vadd.f32 0.0, %v315
        %v317 = vpop.f32.mrf.mxu0
        %v318 = vadd.f32 0.0, %v317
        %v319 = vpop.f32.mrf.mxu0
        %v320 = vpop.f32.mrf.mxu0
        %321 = vdwg.mxu0
        %v322 = vpack.c.bf16 %v275, %v275
        %v323 = vpack.c.bf16 %v277, %v277
        %v324 = vpack.c.bf16 %v316, %v316
        %v325 = vpack.c.bf16 %v318, %v318
        %v330 = vcombine.low %v322, %v323
        %v331 = vcombine.low %v324, %v325
        %v333 = vunpack.c.l.s4 1983009808
        %v334 = vunpack.c.0.s8 %v333
        %v335 = vlaneseq
        %v336 = vshrl.u32 %v335, 7
        %v337 = vsub.s32 %v334, %v336
        %v338 = vrot.slane %v330, %v337
        %v340 = vunpack.c.l.s4 1983009808
        %v341 = vunpack.c.0.s8 %v340
        %v342 = vlaneseq
        %v343 = vshrl.u32 %v342, 7
        %v344 = vsub.s32 %v341, %v343
        %v345 = vrot.slane %v331, %v344
        %v346 = vcombine.low %v338, %v345
        %348 = vst [vmem:[%s204] sm:$0xff] %v346
        %vm349 = vcmask 1043456
        %v350 = vsel %vm349, %v275, 0.0
        %v351 = vsel %vm349, %v277, 0.0
        %v352 = vadd.f32 %v350, %v351
        %v353 = vsel %vm349, %v316, 0.0
        %v354 = vadd.f32 %v352, %v353
        %v355 = vsel %vm349, %v318, 0.0
        %v356 = vadd.f32 %v354, %v355
        %357 = vadd.xlane.f32.xlu0 %v356
        %v358 = vpop.xlane.xlu0 %357
        %v359 = vmul.f32 %v275, %v275
        %v360 = vmul.f32 %v277, %v277
        %v361 = vmul.f32 %v316, %v316
        %v362 = vmul.f32 %v318, %v318
        %v363 = vsel %vm349, %v359, 0.0
        %v364 = vsel %vm349, %v360, 0.0
        %v365 = vadd.f32 %v363, %v364
        %v366 = vsel %vm349, %v361, 0.0
        %v367 = vadd.f32 %v365, %v366
        %v368 = vsel %vm349, %v362, 0.0
        %v369 = vadd.f32 %v367, %v368
        %370 = vadd.xlane.f32.xlu0 %v369
        %v371 = vpop.xlane.xlu0 %370
        %v372 = vlaneseq
        %v373 = vand.u32 %v372, 127
        %vm374 = vcmp.eq.s32.totalorder %v373, 0
        %vm375 = vcmp.eq.s32.totalorder %v373, 1
        %v376 = vsel %vm375, %v371, 0.0
        %v377 = vsel %vm374, %v358, %v376
        %378 = vst [vmem:[%s209] sm:$0xf] %v377
        %s379 = smul.u32 4, %s15
        %p380 = scmp.lt.s32.totalorder %s379, 7
        %s381 = scalar_select %p380, %s379, 7
        %s382 = smul.addr %s381, 2
        %s383 = scalar_lea.vmem %s2, %s382
        %p384 = scmp.lt.s32.totalorder %s15, 1
        %s385 = scalar_select %p384, %s15, 1
        %s386 = smul.addr %s385, 4
        %s387 = scalar_lea.vmem %s3, %s386
        // Predicated region
        $region52: #{_lambda_.16} parent=46 // pred_check
          %p388 = pneg %p80
        $region53: #{_lambda_.16} parent=46 // pred_check_branch
          %390 = sbr.rel (%p388) target = $region55
        $region54: #{_lambda_.16} parent=46 // pred_region
          %s391 = smul.u32 4, %s15
        $region55: #{_lambda_.16} parent=46 // pred_fallthru
          _
        // Predicated region
        $region56: #{_lambda_.16} parent=46 // pred_check
          %p392 = pneg %p106
        $region57: #{_lambda_.16} parent=46 // pred_check_branch
          %394 = sbr.rel (%p392) target = $region59
        $region58: #{_lambda_.16} parent=46 // pred_region
          _
        $region59: #{_lambda_.16} parent=46 // pred_fallthru
          _
      $region47: #{_lambda_.16} parent=5 // pred_fallthru
        _
      %p395 = scmp.le.s32.totalorder 2, %s10
      // Predicated region
      $region60: #{_lambda_.16} parent=5 // pred_check
        %p396 = pneg %p395
      $region61: #{_lambda_.16} parent=5 // pred_check_branch
        %398 = sbr.rel (%p396) target = $region63
      $region62: #{_lambda_.16} parent=5 // pred_region
        %s399 = ssub.s32 %s10, 2
        // Predicated region
        $region64: #{_lambda_.16} parent=62 // pred_check
          %p400 = pneg %p86
        $region65: #{_lambda_.16} parent=62 // pred_check_branch
          %402 = sbr.rel (%p400) target = $region67
        $region66: #{_lambda_.16} parent=62 // pred_region
          %s403 = smul.u32 4, %s16
          %p404 = scmp.lt.s32.totalorder %s403, 7
          %s405 = scalar_select %p404, %s403, 7
          %s406 = smul.addr %s405, 2
          %s407 = scalar_lea.vmem %s2, %s406
        $region67: #{_lambda_.16} parent=62 // pred_fallthru
          _
        // Predicated region
        $region68: #{_lambda_.16} parent=62 // pred_check
          %p408 = pneg %p112
        $region69: #{_lambda_.16} parent=62 // pred_check_branch
          %410 = sbr.rel (%p408) target = $region71
        $region70: #{_lambda_.16} parent=62 // pred_region
          %p411 = scmp.lt.s32.totalorder %s16, 1
          %s412 = scalar_select %p411, %s16, 1
          %s413 = smul.addr %s412, 4
          %s414 = scalar_lea.vmem %s3, %s413
        $region71: #{_lambda_.16} parent=62 // pred_fallthru
          _
      $region63: #{_lambda_.16} parent=5 // pred_fallthru
        _
    $region6: #{_lambda_.16} parent=1 // loop_footer
      %s14 = sadd.s32 1, %s10
    $region7: #{_lambda_.16} parent=1 // loop_footer_branch
      %9 = sbr.rel target = $region3
    $region8: #{_lambda_.16} parent=1 // loop_exit
      _

// kernel: _lambda_.19
$region0: #{_lambda_.19}
  #allocation0 [shape = 'u32[]', space=smem, size = 0x4, offset = 0x4, fixed_abs, tag = 'smem constant byte address 0x4 - core index']
  #allocation1 [shape = 'u32[144,128]{1,0:T(1,128)}', space=vmem, size = 0x12000, scoped, tag = 'internal scratch']
  %s0 = inlined_call_operand.vmem [shape: bf16[16,1024], index: 0, kind: input, shape index: {}]
  %s1 = inlined_call_operand.vmem [shape: bf16[16,1024], index: 1, kind: input, shape index: {}]
  %s2 = inlined_call_operand.vmem [shape: f32[16,1], index: 2, kind: input, shape index: {}]
  %s3 = inlined_call_operand.vmem [shape: f32[16,1], index: 3, kind: input, shape index: {}]
  %s4 = inlined_call_operand.vmem [shape: f32[1,1024], index: 4, kind: input, shape index: {}]
  %s5 = inlined_call_operand.vmem [shape: bf16[16,1024], index: 5, kind: output, shape index: {}]
  %s6 = sld [smem:[#allocation0]]
  $region118: #{_lambda_.19} parent=0
    _
  %s8 = ssub.s32 1, %s6
  %s9 = scalar_select 0, %s8, %s6
  $region1: #{_lambda_.19} parent=0
    #allocation2 [shape = 'u8[32768]{0}', space=vmem, size = 0x8000, scoped, tag = 'input window, operand 0']
    #allocation3 [shape = 'u8[32768]{0}', space=vmem, size = 0x8000, scoped, tag = 'input window, operand 1']
    #allocation4 [shape = 'u8[32768]{0}', space=vmem, size = 0x8000, scoped, tag = 'output window, operand 0']
    loop: start=0, step=1, limit=4
    $region2: #{_lambda_.19} parent=1 // loop_pre_header
      _
    $region3: #{_lambda_.19} parent=1 // loop_header
      %s11 = sphi 0, %s15
      %p12 = scmp.ge.s32.totalorder %s11, 4
      %s21 = sphi 0, %s23
      %s24 = sphi 0, %s21
      %s25 = sphi 0, %s24
      %s41 = sphi 0, %s25
      %s47 = sphi 0, %s49
      %s50 = sphi 0, %s47
      %s51 = sphi 0, %s50
      %s67 = sphi 0, %s51
      %s71 = sphi 0, %s71
      %s73 = sphi 0, %s71
      %s74 = sphi 0, %s73
      %s88 = sphi 0, %s74
      %s92 = sphi 0, %s92
      %s94 = sphi 0, %s92
      %s95 = sphi 0, %s94
      %s109 = sphi 0, %s95
      %s115 = sphi 0, %s117
      %s118 = sphi 0, %s115
      %s119 = sphi 0, %s118
      %s135 = sphi 0, %s119
      %s141 = sphi 0, %s143
      %s144 = sphi 0, %s141
      %s145 = sphi 0, %s144
      %s161 = sphi 0, %s145
    $region4: #{_lambda_.19} parent=1 // loop_header_branch
      %14 = sbr.rel (%p12) target = $region8
    $region5: #{_lambda_.19} parent=1 // loop_body
      %s16 = ssub.s32 %s11, 1
      %s17 = ssub.s32 %s11, 2
      %s18 = sadd.s32 %s11, 1
      %s19 = ssub.s32 %s11, %s18
      %p20 = scmp.eq.s32.totalorder %s19, 0
      %s22 = sadd.s32 %s21, 1
      %s23 = scalar_select %p20, %s21, %s22
      %p26 = pneg %p20
      %p27 = scmp.eq.s32.totalorder %s11, 1
      %p28 = por %p26, %p27
      %p29 = scmp.ne.s32.totalorder %s21, %s24
      %p30 = scmp.eq.s32.totalorder %s11, 0
      %p31 = por %p29, %p30
      %p32 = scmp.ne.s32.totalorder %s21, %s24
      %p33 = scmp.eq.s32.totalorder %s16, 1
      %p34 = por %p32, %p33
      %p35 = scmp.ne.s32.totalorder %s24, %s25
      %p36 = scmp.eq.s32.totalorder %s16, 0
      %p37 = por %p35, %p36
      %p38 = scmp.ne.s32.totalorder %s24, %s25
      %p39 = scmp.eq.s32.totalorder %s17, 1
      %p40 = por %p38, %p39
      %p42 = scmp.ne.s32.totalorder %s25, %s41
      %p43 = scmp.eq.s32.totalorder %s17, 0
      %p44 = por %p42, %p43
      %s45 = ssub.s32 %s11, %s18
      %p46 = scmp.eq.s32.totalorder %s45, 0
      %s48 = sadd.s32 %s47, 1
      %s49 = scalar_select %p46, %s47, %s48
      %p52 = pneg %p46
      %p53 = scmp.eq.s32.totalorder %s11, 1
      %p54 = por %p52, %p53
      %p55 = scmp.ne.s32.totalorder %s47, %s50
      %p56 = scmp.eq.s32.totalorder %s11, 0
      %p57 = por %p55, %p56
      %p58 = scmp.ne.s32.totalorder %s47, %s50
      %p59 = scmp.eq.s32.totalorder %s16, 1
      %p60 = por %p58, %p59
      %p61 = scmp.ne.s32.totalorder %s50, %s51
      %p62 = scmp.eq.s32.totalorder %s16, 0
      %p63 = por %p61, %p62
      %p64 = scmp.ne.s32.totalorder %s50, %s51
      %p65 = scmp.eq.s32.totalorder %s17, 1
      %p66 = por %p64, %p65
      %p68 = scmp.ne.s32.totalorder %s51, %s67
      %p69 = scmp.eq.s32.totalorder %s17, 0
      %p70 = por %p68, %p69
      %s72 = sadd.s32 %s71, 1
      %p75 = scmp.eq.s32.totalorder %s11, 1
      %p76 = scmp.ne.s32.totalorder %s71, %s73
      %p77 = scmp.eq.s32.totalorder %s11, 0
      %p78 = por %p76, %p77
      %p79 = scmp.ne.s32.totalorder %s71, %s73
      %p80 = scmp.eq.s32.totalorder %s16, 1
      %p81 = por %p79, %p80
      %p82 = scmp.ne.s32.totalorder %s73, %s74
      %p83 = scmp.eq.s32.totalorder %s16, 0
      %p84 = por %p82, %p83
      %p85 = scmp.ne.s32.totalorder %s73, %s74
      %p86 = scmp.eq.s32.totalorder %s17, 1
      %p87 = por %p85, %p86
      %p89 = scmp.ne.s32.totalorder %s74, %s88
      %p90 = scmp.eq.s32.totalorder %s17, 0
      %p91 = por %p89, %p90
      %s93 = sadd.s32 %s92, 1
      %p96 = scmp.eq.s32.totalorder %s11, 1
      %p97 = scmp.ne.s32.totalorder %s92, %s94
      %p98 = scmp.eq.s32.totalorder %s11, 0
      %p99 = por %p97, %p98
      %p100 = scmp.ne.s32.totalorder %s92, %s94
      %p101 = scmp.eq.s32.totalorder %s16, 1
      %p102 = por %p100, %p101
      %p103 = scmp.ne.s32.totalorder %s94, %s95
      %p104 = scmp.eq.s32.totalorder %s16, 0
      %p105 = por %p103, %p104
      %p106 = scmp.ne.s32.totalorder %s94, %s95
      %p107 = scmp.eq.s32.totalorder %s17, 1
      %p108 = por %p106, %p107
      %p110 = scmp.ne.s32.totalorder %s95, %s109
      %p111 = scmp.eq.s32.totalorder %s17, 0
      %p112 = por %p110, %p111
      %s113 = ssub.s32 %s11, %s18
      %p114 = scmp.eq.s32.totalorder %s113, 0
      %s116 = sadd.s32 %s115, 1
      %s117 = scalar_select %p114, %s115, %s116
      %p120 = pneg %p114
      %p121 = scmp.eq.s32.totalorder %s11, 1
      %p122 = por %p120, %p121
      %p123 = scmp.ne.s32.totalorder %s115, %s118
      %p124 = scmp.eq.s32.totalorder %s11, 0
      %p125 = por %p123, %p124
      %p126 = scmp.ne.s32.totalorder %s115, %s118
      %p127 = scmp.eq.s32.totalorder %s16, 1
      %p128 = por %p126, %p127
      %p129 = scmp.ne.s32.totalorder %s118, %s119
      %p130 = scmp.eq.s32.totalorder %s16, 0
      %p131 = por %p129, %p130
      %p132 = scmp.ne.s32.totalorder %s118, %s119
      %p133 = scmp.eq.s32.totalorder %s17, 1
      %p134 = por %p132, %p133
      %p136 = scmp.ne.s32.totalorder %s119, %s135
      %p137 = scmp.eq.s32.totalorder %s17, 0
      %p138 = por %p136, %p137
      %s139 = ssub.s32 %s11, %s18
      %p140 = scmp.eq.s32.totalorder %s139, 0
      %s142 = sadd.s32 %s141, 1
      %s143 = scalar_select %p140, %s141, %s142
      %p146 = pneg %p140
      %p147 = scmp.eq.s32.totalorder %s11, 1
      %p148 = por %p146, %p147
      %p149 = scmp.ne.s32.totalorder %s141, %s144
      %p150 = scmp.eq.s32.totalorder %s11, 0
      %p151 = por %p149, %p150
      %p152 = scmp.ne.s32.totalorder %s141, %s144
      %p153 = scmp.eq.s32.totalorder %s16, 1
      %p154 = por %p152, %p153
      %p155 = scmp.ne.s32.totalorder %s144, %s145
      %p156 = scmp.eq.s32.totalorder %s16, 0
      %p157 = por %p155, %p156
      %p158 = scmp.ne.s32.totalorder %s144, %s145
      %p159 = scmp.eq.s32.totalorder %s17, 1
      %p160 = por %p158, %p159
      %p162 = scmp.ne.s32.totalorder %s145, %s161
      %p163 = scmp.eq.s32.totalorder %s17, 0
      %p164 = por %p162, %p163
      %p165 = scmp.le.s32.totalorder 1, %s11
      %p166 = scmp.lt.s32.totalorder %s11, 3
      %p167 = pnand %p165, %p166
      %p168 = pneg %p167
      // Predicated region
      $region9: #{_lambda_.19} parent=5 // pred_check
        _
      $region10: #{_lambda_.19} parent=5 // pred_check_branch
        %170 = sbr.rel (%p167) target = $region12
      $region11: #{_lambda_.19} parent=5 // pred_region
        %s171 = ssub.s32 %s11, 1
        // Predicated region
        $region13: #{_lambda_.19} parent=11 // pred_check
          %p172 = pneg %p84
        $region14: #{_lambda_.19} parent=11 // pred_check_branch
          %174 = sbr.rel (%p172) target = $region16
        $region15: #{_lambda_.19} parent=11 // pred_region
          _
        $region16: #{_lambda_.19} parent=11 // pred_fallthru
          _
        // Predicated region
        $region17: #{_lambda_.19} parent=11 // pred_check
          %p175 = pneg %p105
        $region18: #{_lambda_.19} parent=11 // pred_check_branch
          %177 = sbr.rel (%p175) target = $region20
        $region19: #{_lambda_.19} parent=11 // pred_region
          _
        $region20: #{_lambda_.19} parent=11 // pred_fallthru
          _
      $region12: #{_lambda_.19} parent=5 // pred_fallthru
        _
      %p178 = scmp.lt.s32.totalorder %s11, 2
      // Predicated region
      $region21: #{_lambda_.19} parent=5 // pred_check
        %p179 = pneg %p178
      $region22: #{_lambda_.19} parent=5 // pred_check_branch
        %181 = sbr.rel (%p179) target = $region24
      $region23: #{_lambda_.19} parent=5 // pred_region
        // Predicated region
        $region25: #{_lambda_.19} parent=23 // pred_check
          %p182 = pneg %p31
        $region26: #{_lambda_.19} parent=23 // pred_check_branch
          %184 = sbr.rel (%p182) target = $region28
        $region27: #{_lambda_.19} parent=23 // pred_region
          %s185 = sand.u32 %s21, 1
          %s186 = sand.u32 %s21, 1
          %s187 = smul.addr %s186, 32
          %s188 = scalar_lea.vmem [#allocation2], %s187
          %s189 = smul.u32 4, %s11
          %s190 = smul.addr %s189, 4
          %s191 = scalar_lea.vmem %s0, %s190
          // Predicated region
          $region29: #{_lambda_.19} parent=27 // pred_check
            _
          $region30: #{_lambda_.19} parent=27 // pred_check_branch
            %193 = sbr.rel (0) target = $region32
          $region31: #{_lambda_.19} parent=27 // pred_region
            // Predicated region
            $region33: #{_lambda_.19} parent=31 // pred_check
              _
            $region34: #{_lambda_.19} parent=31 // pred_check_branch
              %195 = sbr.rel (0) target = $region36
            $region35: #{_lambda_.19} parent=31 // pred_region
              loop: start=0, step=1, limit=1
              $region37: #{_lambda_.19} parent=35 // loop_pre_header
                _
              $region38: #{_lambda_.19} parent=35 // loop_header
                %s197 = sphi 0, %s201
                %p198 = scmp.ge.s32.totalorder %s197, 1
                %s202 = sphi %s191, %s191
                %s203 = sphi %s188, %s188
              $region39: #{_lambda_.19} parent=35 // loop_header_branch
                %200 = sbr.rel (%p198) target = $region43
              $region40: #{_lambda_.19} parent=35 // loop_body
                %v204 = vld [vmem:[%s202] sm:$0xff]
                %205 = vst [vmem:[%s203] sm:$0xff] %v204
                %v206 = vld [vmem:[%s202 + $0x8] sm:$0xff]
                %207 = vst [vmem:[%s203 + $0x8] sm:$0xff] %v206
                %v208 = vld [vmem:[%s202 + $0x20] sm:$0xff]
                %209 = vst [vmem:[%s203 + $0x10] sm:$0xff] %v208
                %v210 = vld [vmem:[%s202 + $0x28] sm:$0xff]
                %211 = vst [vmem:[%s203 + $0x18] sm:$0xff] %v210
              $region41: #{_lambda_.19} parent=35 // loop_footer
                %s201 = sadd.s32 1, %s197
              $region42: #{_lambda_.19} parent=35 // loop_footer_branch
                %196 = sbr.rel target = $region38
              $region43: #{_lambda_.19} parent=35 // loop_exit
                _
            $region36: #{_lambda_.19} parent=31 // pred_fallthru
              _
            // Predicated region
            $region44: #{_lambda_.19} parent=31 // pred_check
              _
            $region45: #{_lambda_.19} parent=31 // pred_check_branch
              %213 = sbr.rel target = $region47
            $region46: #{_lambda_.19} parent=31 // pred_region
              _
            $region47: #{_lambda_.19} parent=31 // pred_fallthru
              _
          $region32: #{_lambda_.19} parent=27 // pred_fallthru
            _
          %214 = vnop
        $region28: #{_lambda_.19} parent=23 // pred_fallthru
          _
        // Predicated region
        $region48: #{_lambda_.19} parent=23 // pred_check
          %p215 = pneg %p57
        $region49: #{_lambda_.19} parent=23 // pred_check_branch
          %217 = sbr.rel (%p215) target = $region51
        $region50: #{_lambda_.19} parent=23 // pred_region
          %s218 = sand.u32 %s47, 1
          %s219 = sand.u32 %s47, 1
          %s220 = smul.addr %s219, 32
          %s221 = scalar_lea.vmem [#allocation3], %s220
          %s222 = smul.u32 4, %s11
          %s223 = smul.addr %s222, 4
          %s224 = scalar_lea.vmem %s1, %s223
          // Predicated region
          $region52: #{_lambda_.19} parent=50 // pred_check
            _
          $region53: #{_lambda_.19} parent=50 // pred_check_branch
            %226 = sbr.rel (0) target = $region55
          $region54: #{_lambda_.19} parent=50 // pred_region
            // Predicated region
            $region56: #{_lambda_.19} parent=54 // pred_check
              _
            $region57: #{_lambda_.19} parent=54 // pred_check_branch
              %228 = sbr.rel (0) target = $region59
            $region58: #{_lambda_.19} parent=54 // pred_region
              loop: start=0, step=1, limit=1
              $region60: #{_lambda_.19} parent=58 // loop_pre_header
                _
              $region61: #{_lambda_.19} parent=58 // loop_header
                %s230 = sphi 0, %s234
                %p231 = scmp.ge.s32.totalorder %s230, 1
                %s235 = sphi %s224, %s224
                %s236 = sphi %s221, %s221
              $region62: #{_lambda_.19} parent=58 // loop_header_branch
                %233 = sbr.rel (%p231) target = $region66
              $region63: #{_lambda_.19} parent=58 // loop_body
                %v237 = vld [vmem:[%s235] sm:$0xff]
                %238 = vst [vmem:[%s236] sm:$0xff] %v237
                %v239 = vld [vmem:[%s235 + $0x8] sm:$0xff]
                %240 = vst [vmem:[%s236 + $0x8] sm:$0xff] %v239
                %v241 = vld [vmem:[%s235 + $0x20] sm:$0xff]
                %242 = vst [vmem:[%s236 + $0x10] sm:$0xff] %v241
                %v243 = vld [vmem:[%s235 + $0x28] sm:$0xff]
                %244 = vst [vmem:[%s236 + $0x18] sm:$0xff] %v243
              $region64: #{_lambda_.19} parent=58 // loop_footer
                %s234 = sadd.s32 1, %s230
              $region65: #{_lambda_.19} parent=58 // loop_footer_branch
                %229 = sbr.rel target = $region61
              $region66: #{_lambda_.19} parent=58 // loop_exit
                _
            $region59: #{_lambda_.19} parent=54 // pred_fallthru
              _
            // Predicated region
            $region67: #{_lambda_.19} parent=54 // pred_check
              _
            $region68: #{_lambda_.19} parent=54 // pred_check_branch
              %246 = sbr.rel target = $region70
            $region69: #{_lambda_.19} parent=54 // pred_region
              _
            $region70: #{_lambda_.19} parent=54 // pred_fallthru
              _
          $region55: #{_lambda_.19} parent=50 // pred_fallthru
            _
          %247 = vnop
        $region51: #{_lambda_.19} parent=23 // pred_fallthru
          _
        // Predicated region
        $region71: #{_lambda_.19} parent=23 // pred_check
          %p248 = pneg %p125
        $region72: #{_lambda_.19} parent=23 // pred_check_branch
          %250 = sbr.rel (%p248) target = $region74
        $region73: #{_lambda_.19} parent=23 // pred_region
          %s251 = smul.u32 4, %s11
          %p252 = scmp.lt.s32.totalorder %s251, 7
          %s253 = scalar_select %p252, %s251, 7
          %s254 = scalar_lea.vmem %s4, %s253
          %s255 = smul.u32 4, %s11
        $region74: #{_lambda_.19} parent=23 // pred_fallthru
          _
      $region24: #{_lambda_.19} parent=5 // pred_fallthru
        _
      %p256 = scmp.le.s32.totalorder 1, %s11
      %p257 = scmp.lt.s32.totalorder %s11, 3
      %p258 = pnand %p256, %p257
      %p259 = pneg %p258
      // Predicated region
      $region75: #{_lambda_.19} parent=5 // pred_check
        _
      $region76: #{_lambda_.19} parent=5 // pred_check_branch
        %261 = sbr.rel (%p258) target = $region78
      $region77: #{_lambda_.19} parent=5 // pred_region
        %s262 = ssub.s32 %s11, 1
        %s263 = sand.u32 %s24, 1
        %s264 = sand.u32 %s24, 1
        %s265 = smul.addr %s264, 32
        %s266 = scalar_lea.vmem [#allocation2], %s265
        // Predicated region
        $region79: #{_lambda_.19} parent=77 // pred_check
          %p267 = pneg %p37
        $region80: #{_lambda_.19} parent=77 // pred_check_branch
          %269 = sbr.rel (%p267) target = $region82
        $region81: #{_lambda_.19} parent=77 // pred_region
          _
        $region82: #{_lambda_.19} parent=77 // pred_fallthru
          _
        %s270 = sand.u32 %s50, 1
        %s271 = sand.u32 %s50, 1
        %s272 = smul.addr %s271, 32
        %s273 = scalar_lea.vmem [#allocation3], %s272
        // Predicated region
        $region83: #{_lambda_.19} parent=77 // pred_check
          %p274 = pneg %p63
        $region84: #{_lambda_.19} parent=77 // pred_check_branch
          %276 = sbr.rel (%p274) target = $region86
        $region85: #{_lambda_.19} parent=77 // pred_region
          _
        $region86: #{_lambda_.19} parent=77 // pred_fallthru
          _
        %s277 = sand.u32 %s24, 1
        %s278 = sand.u32 %s24, 1
        %s279 = smul.addr %s278, 32
        %s280 = scalar_lea.vmem [#allocation2], %s279
        %p281 = pneg %p37
        %p282 = pneg %p34
        %s283 = sand.u32 %s50, 1
        %s284 = sand.u32 %s50, 1
        %s285 = smul.addr %s284, 32
        %s286 = scalar_lea.vmem [#allocation3], %s285
        %p287 = pneg %p63
        %p288 = pneg %p60
        %p289 = pneg %p84
        %p290 = pneg %p81
        %p291 = pneg %p105
        %p292 = pneg %p102
        %s293 = smul.u32 4, %s16
        %p294 = scmp.lt.s32.totalorder %s293, 7
        %s295 = scalar_select %p294, %s293, 7
        %s296 = scalar_lea.vmem %s4, %s295
        %p297 = pneg %p131
        %p298 = pneg %p128
        %p299 = pneg %p157
        %p300 = pneg %p154
        %s301 = sand.u32 %s144, 1
        %s302 = sand.u32 %s144, 1
        %s303 = smul.addr %s302, 32
        %s304 = scalar_lea.vmem [#allocation4], %s303
        %s305 = smul.u32 4, %s16
        %s306 = smul.u32 4, %s16
        %s307 = smul.u32 4, %s16
        %p308 = scmp.lt.s32.totalorder %s307, 7
        %s309 = scalar_select %p308, %s307, 7
        %s310 = scalar_lea.vmem %s4, %s309
        %s311 = smul.u32 4, %s16
        %s312 = smul.u32 4, %s16
        %v313 = vld [vmem:[%s2] sm:$0xff]
        %v314 = vld [vmem:[%s2 + $0x8] sm:$0xff]
        %v315 = vld [vmem:[%s266] sm:$0xff]
        %v316 = vld [vmem:[%s266 + $0x8] sm:$0xff]
        %v317 = vld [vmem:[%s266 + $0x10] sm:$0xff]
        %v318 = vld [vmem:[%s266 + $0x18] sm:$0xff]
        %v319 = vunpack.c.l.bf16 %v315
        %v320 = vunpack.c.h.bf16 %v315
        %v321 = vunpack.c.l.bf16 %v316
        %v322 = vunpack.c.h.bf16 %v316
        %v323 = vunpack.c.l.bf16 %v317
        %v324 = vunpack.c.h.bf16 %v317
        %v325 = vunpack.c.l.bf16 %v318
        %v326 = vunpack.c.h.bf16 %v318
        %328 = vset.pattern.permute.xlu0 0
        %329 = vperm.xlu0 %328, %v313
        %v330 = vpop.permute.xlu0 %329
        %333 = vset.pattern.permute.xlu0 0
        %334 = vperm.xlu0 %333, %v314
        %v335 = vpop.permute.xlu0 %334
        %v337 = vmul.f32 %v330, %v319
        %v338 = vmul.f32 %v330, %v320
        %v339 = vmul.f32 %v330, %v321
        %v340 = vmul.f32 %v330, %v322
        %v341 = vmul.f32 %v335, %v323
        %v342 = vmul.f32 %v335, %v324
        %v343 = vmul.f32 %v335, %v325
        %v344 = vmul.f32 %v335, %v326
        %v345 = vld [vmem:[%s3] sm:$0xff]
        %v346 = vld [vmem:[%s3 + $0x8] sm:$0xff]
        %v347 = vld [vmem:[%s310] sm:$0xf]
        %349 = vset.pattern.permute.xlu0 0
        %350 = vperm.xlu0 %349, %v345
        %v351 = vpop.permute.xlu0 %350
        %354 = vset.pattern.permute.xlu0 0
        %355 = vperm.xlu0 %354, %v346
        %v356 = vpop.permute.xlu0 %355
        %v359 = vlaneseq
        %v360 = vshrl.u32 %v359, 7
        %v361 = vsub.s32 0, %v360
        %v362 = vrot.slane %v347, %v361
        %v363 = vlaneseq
        %v364 = vshrl.u32 %v363, 7
        %v365 = vsub.s32 1, %v364
        %v366 = vrot.slane %v347, %v365
        %v367 = vlaneseq
        %v368 = vshrl.u32 %v367, 7
        %v369 = vsub.s32 2, %v368
        %v370 = vrot.slane %v347, %v369
        %v371 = vlaneseq
        %v372 = vshrl.u32 %v371, 7
        %v373 = vsub.s32 3, %v372
        %v374 = vrot.slane %v347, %v373
        %v379 = vmul.f32 %v351, %v362
        %v380 = vmul.f32 %v351, %v366
        %v381 = vmul.f32 %v351, %v370
        %v382 = vmul.f32 %v351, %v374
        %v383 = vmul.f32 %v356, %v362
        %v384 = vmul.f32 %v356, %v366
        %v385 = vmul.f32 %v356, %v370
        %v386 = vmul.f32 %v356, %v374
        %v387 = vadd.f32 %v337, %v379
        %v388 = vadd.f32 %v338, %v380
        %v389 = vadd.f32 %v339, %v381
        %v390 = vadd.f32 %v340, %v382
        %v391 = vadd.f32 %v341, %v383
        %v392 = vadd.f32 %v342, %v384
        %v393 = vadd.f32 %v343, %v385
        %v394 = vadd.f32 %v344, %v386
        %v395 = vmax.f32 %v387, 0.0
        %v396 = vmax.f32 %v388, 0.0
        %v397 = vmax.f32 %v389, 0.0
        %v398 = vmax.f32 %v390, 0.0
        %v399 = vmax.f32 %v391, 0.0
        %v400 = vmax.f32 %v392, 0.0
        %v401 = vmax.f32 %v393, 0.0
        %v402 = vmax.f32 %v394, 0.0
        %v403 = vld [vmem:[%s273] sm:$0xff]
        %v404 = vld [vmem:[%s273 + $0x8] sm:$0xff]
        %v405 = vld [vmem:[%s273 + $0x10] sm:$0xff]
        %v406 = vld [vmem:[%s273 + $0x18] sm:$0xff]
        %v407 = vunpack.c.l.bf16 %v403
        %v408 = vunpack.c.h.bf16 %v403
        %v409 = vunpack.c.l.bf16 %v404
        %v410 = vunpack.c.h.bf16 %v404
        %v411 = vunpack.c.l.bf16 %v405
        %v412 = vunpack.c.h.bf16 %v405
        %v413 = vunpack.c.l.bf16 %v406
        %v414 = vunpack.c.h.bf16 %v406
        %v415 = vadd.f32 %v407, %v395
        %v416 = vadd.f32 %v408, %v396
        %v417 = vadd.f32 %v409, %v397
        %v418 = vadd.f32 %v410, %v398
        %v419 = vadd.f32 %v411, %v399
        %v420 = vadd.f32 %v412, %v400
        %v421 = vadd.f32 %v413, %v401
        %v422 = vadd.f32 %v414, %v402
        %v423 = vmax.f32 %v415, 0.0
        %v424 = vmax.f32 %v416, 0.0
        %v425 = vmax.f32 %v417, 0.0
        %v426 = vmax.f32 %v418, 0.0
        %v427 = vmax.f32 %v419, 0.0
        %v428 = vmax.f32 %v420, 0.0
        %v429 = vmax.f32 %v421, 0.0
        %v430 = vmax.f32 %v422, 0.0
        %v431 = vpack.c.bf16 %v427, %v423
        %v432 = vpack.c.bf16 %v428, %v424
        %v433 = vpack.c.bf16 %v429, %v425
        %v434 = vpack.c.bf16 %v430, %v426
        %v439 = vunpack.c.l.b16 %v431
        %v440 = vunpack.c.l.b16 %v432
        %v441 = vunpack.c.l.b16 %v433
        %v442 = vunpack.c.l.b16 %v434
        %v443 = vunpack.c.h.b16 %v431
        %v444 = vunpack.c.h.b16 %v432
        %v445 = vunpack.c.h.b16 %v433
        %v446 = vunpack.c.h.b16 %v434
        %v447 = vpack.c.b16 %v440, %v439
        %v448 = vpack.c.b16 %v442, %v441
        %v449 = vpack.c.b16 %v444, %v443
        %v450 = vpack.c.b16 %v446, %v445
        %455 = vst [vmem:[%s304] sm:$0xff] %v447
        %456 = vst [vmem:[%s304 + $0x8] sm:$0xff] %v448
        %457 = vst [vmem:[%s304 + $0x10] sm:$0xff] %v449
        %458 = vst [vmem:[%s304 + $0x18] sm:$0xff] %v450
        %s459 = sand.u32 %s144, 1
        %s460 = sand.u32 %s144, 1
        %s461 = smul.addr %s460, 32
        %s462 = scalar_lea.vmem [#allocation4], %s461
        // Predicated region
        $region87: #{_lambda_.19} parent=77 // pred_check
          %p463 = pneg %p154
        $region88: #{_lambda_.19} parent=77 // pred_check_branch
          %465 = sbr.rel (%p463) target = $region90
        $region89: #{_lambda_.19} parent=77 // pred_region
          %s466 = smul.u32 4, %s16
          %s467 = smul.addr %s466, 4
          %s468 = scalar_lea.vmem %s5, %s467
          // Predicated region
          $region91: #{_lambda_.19} parent=89 // pred_check
            _
          $region92: #{_lambda_.19} parent=89 // pred_check_branch
            %470 = sbr.rel (0) target = $region94
          $region93: #{_lambda_.19} parent=89 // pred_region
            // Predicated region
            $region95: #{_lambda_.19} parent=93 // pred_check
              _
            $region96: #{_lambda_.19} parent=93 // pred_check_branch
              %472 = sbr.rel (0) target = $region98
            $region97: #{_lambda_.19} parent=93 // pred_region
              loop: start=0, step=1, limit=1
              $region99: #{_lambda_.19} parent=97 // loop_pre_header
                _
              $region100: #{_lambda_.19} parent=97 // loop_header
                %s474 = sphi 0, %s478
                %p475 = scmp.ge.s32.totalorder %s474, 1
                %s479 = sphi %s462, %s462
                %s480 = sphi %s468, %s468
              $region101: #{_lambda_.19} parent=97 // loop_header_branch
                %477 = sbr.rel (%p475) target = $region105
              $region102: #{_lambda_.19} parent=97 // loop_body
                %v481 = vld [vmem:[%s479] sm:$0xff]
                %482 = vst [vmem:[%s480] sm:$0xff] %v481
                %v483 = vld [vmem:[%s479 + $0x8] sm:$0xff]
                %484 = vst [vmem:[%s480 + $0x8] sm:$0xff] %v483
                %v485 = vld [vmem:[%s479 + $0x10] sm:$0xff]
                %486 = vst [vmem:[%s480 + $0x20] sm:$0xff] %v485
                %v487 = vld [vmem:[%s479 + $0x18] sm:$0xff]
                %488 = vst [vmem:[%s480 + $0x28] sm:$0xff] %v487
              $region103: #{_lambda_.19} parent=97 // loop_footer
                %s478 = sadd.s32 1, %s474
              $region104: #{_lambda_.19} parent=97 // loop_footer_branch
                %473 = sbr.rel target = $region100
              $region105: #{_lambda_.19} parent=97 // loop_exit
                _
            $region98: #{_lambda_.19} parent=93 // pred_fallthru
              _
            // Predicated region
            $region106: #{_lambda_.19} parent=93 // pred_check
              _
            $region107: #{_lambda_.19} parent=93 // pred_check_branch
              %490 = sbr.rel target = $region109
            $region108: #{_lambda_.19} parent=93 // pred_region
              _
            $region109: #{_lambda_.19} parent=93 // pred_fallthru
              _
          $region94: #{_lambda_.19} parent=89 // pred_fallthru
            _
          %491 = vnop
        $region90: #{_lambda_.19} parent=77 // pred_fallthru
          _
      $region78: #{_lambda_.19} parent=5 // pred_fallthru
        _
      %p492 = scmp.le.s32.totalorder 2, %s11
      // Predicated region
      $region110: #{_lambda_.19} parent=5 // pred_check
        %p493 = pneg %p492
      $region111: #{_lambda_.19} parent=5 // pred_check_branch
        %495 = sbr.rel (%p493) target = $region113
      $region112: #{_lambda_.19} parent=5 // pred_region
        %s496 = ssub.s32 %s11, 2
        // Predicated region
        $region114: #{_lambda_.19} parent=112 // pred_check
          %p497 = pneg %p160
        $region115: #{_lambda_.19} parent=112 // pred_check_branch
          %499 = sbr.rel (%p497) target = $region117
        $region116: #{_lambda_.19} parent=112 // pred_region
          %s500 = sand.u32 %s145, 1
          %s501 = sand.u32 %s145, 1
          %s502 = smul.addr %s501, 32
          %s503 = scalar_lea.vmem [#allocation4], %s502
        $region117: #{_lambda_.19} parent=112 // pred_fallthru
          _
      $region113: #{_lambda_.19} parent=5 // pred_fallthru
        _
    $region6: #{_lambda_.19} parent=1 // loop_footer
      %s15 = sadd.s32 1, %s11
    $region7: #{_lambda_.19} parent=1 // loop_footer_branch
      %10 = sbr.rel target = $region3
    $region8: #{_lambda_.19} parent=1 // loop_exit
      _

// kernel: _lambda_.21
$region0: #{_lambda_.21}
  #allocation0 [shape = 'u32[]', space=smem, size = 0x4, offset = 0x4, fixed_abs, tag = 'smem constant byte address 0x4 - core index']
  #allocation1 [shape = 'u32[144,128]{1,0:T(1,128)}', space=vmem, size = 0x12000, scoped, tag = 'internal scratch']
  %s0 = inlined_call_operand.vmem [shape: bf16[108,256], index: 0, kind: input, shape index: {}]
  %s1 = inlined_call_operand.vmem [shape: bf16[4,108], index: 1, kind: input, shape index: {}]
  %s2 = inlined_call_operand.vmem [shape: bf16[4,256], index: 2, kind: output, shape index: {0}]
  %s3 = inlined_call_operand.vmem [shape: f32[4,256], index: 3, kind: output, shape index: {1}]
  %4 = xla_tuple %s2, %s3
  %s5 = sld [smem:[#allocation0]]
  $region90: #{_lambda_.21} parent=0
    _
  %s7 = ssub.s32 1, %s5
  %s8 = scalar_select 0, %s7, %s5
  $region1: #{_lambda_.21} parent=0
    #allocation2 [shape = 'u8[57344]{0}', space=vmem, size = 0xe000, scoped, tag = 'input window, operand 0']
    loop: start=0, step=1, limit=4
    $region2: #{_lambda_.21} parent=1 // loop_pre_header
      _
    $region3: #{_lambda_.21} parent=1 // loop_header
      %s10 = sphi 0, %s14
      %p11 = scmp.ge.s32.totalorder %s10, 4
      %s20 = sphi 0, %s22
      %s23 = sphi 0, %s20
      %s24 = sphi 0, %s23
      %s40 = sphi 0, %s24
      %s44 = sphi 0, %s44
      %s46 = sphi 0, %s44
      %s47 = sphi 0, %s46
      %s61 = sphi 0, %s47
      %s67 = sphi 0, %s69
      %s70 = sphi 0, %s67
      %s71 = sphi 0, %s70
      %s87 = sphi 0, %s71
      %s93 = sphi 0, %s95
      %s96 = sphi 0, %s93
      %s97 = sphi 0, %s96
      %s113 = sphi 0, %s97
    $region4: #{_lambda_.21} parent=1 // loop_header_branch
      %13 = sbr.rel (%p11) target = $region8
    $region5: #{_lambda_.21} parent=1 // loop_body
      %s15 = ssub.s32 %s10, 1
      %s16 = ssub.s32 %s10, 2
      %s17 = sadd.s32 %s10, 1
      %s18 = ssub.s32 %s10, %s17
      %p19 = scmp.eq.s32.totalorder %s18, 0
      %s21 = sadd.s32 %s20, 1
      %s22 = scalar_select %p19, %s20, %s21
      %p25 = pneg %p19
      %p26 = scmp.eq.s32.totalorder %s10, 1
      %p27 = por %p25, %p26
      %p28 = scmp.ne.s32.totalorder %s20, %s23
      %p29 = scmp.eq.s32.totalorder %s10, 0
      %p30 = por %p28, %p29
      %p31 = scmp.ne.s32.totalorder %s20, %s23
      %p32 = scmp.eq.s32.totalorder %s15, 1
      %p33 = por %p31, %p32
      %p34 = scmp.ne.s32.totalorder %s23, %s24
      %p35 = scmp.eq.s32.totalorder %s15, 0
      %p36 = por %p34, %p35
      %p37 = scmp.ne.s32.totalorder %s23, %s24
      %p38 = scmp.eq.s32.totalorder %s16, 1
      %p39 = por %p37, %p38
      %p41 = scmp.ne.s32.totalorder %s24, %s40
      %p42 = scmp.eq.s32.totalorder %s16, 0
      %p43 = por %p41, %p42
      %s45 = sadd.s32 %s44, 1
      %p48 = scmp.eq.s32.totalorder %s10, 1
      %p49 = scmp.ne.s32.totalorder %s44, %s46
      %p50 = scmp.eq.s32.totalorder %s10, 0
      %p51 = por %p49, %p50
      %p52 = scmp.ne.s32.totalorder %s44, %s46
      %p53 = scmp.eq.s32.totalorder %s15, 1
      %p54 = por %p52, %p53
      %p55 = scmp.ne.s32.totalorder %s46, %s47
      %p56 = scmp.eq.s32.totalorder %s15, 0
      %p57 = por %p55, %p56
      %p58 = scmp.ne.s32.totalorder %s46, %s47
      %p59 = scmp.eq.s32.totalorder %s16, 1
      %p60 = por %p58, %p59
      %p62 = scmp.ne.s32.totalorder %s47, %s61
      %p63 = scmp.eq.s32.totalorder %s16, 0
      %p64 = por %p62, %p63
      %s65 = ssub.s32 %s10, %s17
      %p66 = scmp.eq.s32.totalorder %s65, 0
      %s68 = sadd.s32 %s67, 1
      %s69 = scalar_select %p66, %s67, %s68
      %p72 = pneg %p66
      %p73 = scmp.eq.s32.totalorder %s10, 1
      %p74 = por %p72, %p73
      %p75 = scmp.ne.s32.totalorder %s67, %s70
      %p76 = scmp.eq.s32.totalorder %s10, 0
      %p77 = por %p75, %p76
      %p78 = scmp.ne.s32.totalorder %s67, %s70
      %p79 = scmp.eq.s32.totalorder %s15, 1
      %p80 = por %p78, %p79
      %p81 = scmp.ne.s32.totalorder %s70, %s71
      %p82 = scmp.eq.s32.totalorder %s15, 0
      %p83 = por %p81, %p82
      %p84 = scmp.ne.s32.totalorder %s70, %s71
      %p85 = scmp.eq.s32.totalorder %s16, 1
      %p86 = por %p84, %p85
      %p88 = scmp.ne.s32.totalorder %s71, %s87
      %p89 = scmp.eq.s32.totalorder %s16, 0
      %p90 = por %p88, %p89
      %s91 = ssub.s32 %s10, %s17
      %p92 = scmp.eq.s32.totalorder %s91, 0
      %s94 = sadd.s32 %s93, 1
      %s95 = scalar_select %p92, %s93, %s94
      %p98 = pneg %p92
      %p99 = scmp.eq.s32.totalorder %s10, 1
      %p100 = por %p98, %p99
      %p101 = scmp.ne.s32.totalorder %s93, %s96
      %p102 = scmp.eq.s32.totalorder %s10, 0
      %p103 = por %p101, %p102
      %p104 = scmp.ne.s32.totalorder %s93, %s96
      %p105 = scmp.eq.s32.totalorder %s15, 1
      %p106 = por %p104, %p105
      %p107 = scmp.ne.s32.totalorder %s96, %s97
      %p108 = scmp.eq.s32.totalorder %s15, 0
      %p109 = por %p107, %p108
      %p110 = scmp.ne.s32.totalorder %s96, %s97
      %p111 = scmp.eq.s32.totalorder %s16, 1
      %p112 = por %p110, %p111
      %p114 = scmp.ne.s32.totalorder %s97, %s113
      %p115 = scmp.eq.s32.totalorder %s16, 0
      %p116 = por %p114, %p115
      %p117 = scmp.le.s32.totalorder 1, %s10
      %p118 = scmp.lt.s32.totalorder %s10, 3
      %p119 = pnand %p117, %p118
      %p120 = pneg %p119
      // Predicated region
      $region9: #{_lambda_.21} parent=5 // pred_check
        _
      $region10: #{_lambda_.21} parent=5 // pred_check_branch
        %122 = sbr.rel (%p119) target = $region12
      $region11: #{_lambda_.21} parent=5 // pred_region
        %s123 = ssub.s32 %s10, 1
        // Predicated region
        $region13: #{_lambda_.21} parent=11 // pred_check
          %p124 = pneg %p57
        $region14: #{_lambda_.21} parent=11 // pred_check_branch
          %126 = sbr.rel (%p124) target = $region16
        $region15: #{_lambda_.21} parent=11 // pred_region
          _
        $region16: #{_lambda_.21} parent=11 // pred_fallthru
          _
      $region12: #{_lambda_.21} parent=5 // pred_fallthru
        _
      %p127 = scmp.lt.s32.totalorder %s10, 2
      // Predicated region
      $region17: #{_lambda_.21} parent=5 // pred_check
        %p128 = pneg %p127
      $region18: #{_lambda_.21} parent=5 // pred_check_branch
        %130 = sbr.rel (%p128) target = $region20
      $region19: #{_lambda_.21} parent=5 // pred_region
        // Predicated region
        $region21: #{_lambda_.21} parent=19 // pred_check
          %p131 = pneg %p30
        $region22: #{_lambda_.21} parent=19 // pred_check_branch
          %133 = sbr.rel (%p131) target = $region24
        $region23: #{_lambda_.21} parent=19 // pred_region
          %s134 = sand.u32 %s20, 1
          %s135 = sand.u32 %s20, 1
          %s136 = smul.addr %s135, 56
          %s137 = scalar_lea.vmem [#allocation2], %s136
          %s138 = smul.addr %s10, 4
          %s139 = scalar_lea.vmem %s0, %s138
          // Predicated region
          $region25: #{_lambda_.21} parent=23 // pred_check
            _
          $region26: #{_lambda_.21} parent=23 // pred_check_branch
            %141 = sbr.rel (0) target = $region28
          $region27: #{_lambda_.21} parent=23 // pred_region
            // Predicated region
            $region29: #{_lambda_.21} parent=27 // pred_check
              _
            $region30: #{_lambda_.21} parent=27 // pred_check_branch
              %143 = sbr.rel target = $region32
            $region31: #{_lambda_.21} parent=27 // pred_region
              // Predicated region
              $region44: #{_lambda_.21} parent=31 // pred_check
                _
              $region45: #{_lambda_.21} parent=31 // pred_check_branch
                %185 = sbr.rel (0) target = $region47
              $region46: #{_lambda_.21} parent=31 // pred_region
                loop: start=0, step=1, limit=1
                $region48: #{_lambda_.21} parent=46 // loop_pre_header
                  _
                $region49: #{_lambda_.21} parent=46 // loop_header
                  %s187 = sphi 0, %s191
                  %p188 = scmp.ge.s32.totalorder %s187, 1
                  %s192 = sphi %s139, %s139
                  %s193 = sphi %s137, %s137
                $region50: #{_lambda_.21} parent=46 // loop_header_branch
                  %190 = sbr.rel (%p188) target = $region54
                $region51: #{_lambda_.21} parent=46 // loop_body
                  _
                $region52: #{_lambda_.21} parent=46 // loop_footer
                  %s191 = sadd.s32 1, %s187
                $region53: #{_lambda_.21} parent=46 // loop_footer_branch
                  %186 = sbr.rel target = $region49
                $region54: #{_lambda_.21} parent=46 // loop_exit
                  _
                %s195 = ssub.s32 16, 1
                loop: start=0, step=1, limit=1
                $region55: #{_lambda_.21} parent=46 // loop_pre_header
                  _
                $region56: #{_lambda_.21} parent=46 // loop_header
                  %s197 = sphi 0, %s201
                  %p198 = scmp.ge.s32.totalorder %s197, 1
                  %s202 = sphi %s139, %s139
                  %s203 = sphi %s137, %s137
                $region57: #{_lambda_.21} parent=46 // loop_header_branch
                  %200 = sbr.rel (%p198) target = $region61
                $region58: #{_lambda_.21} parent=46 // loop_body
                  %v204 = vld [vmem:[%s202] sm:%s195]
                  %205 = vst [vmem:[%s203] sm:%s195] %v204
                  %v206 = vld [vmem:[%s202 + $0x8] sm:%s195]
                  %207 = vst [vmem:[%s203 + $0x4] sm:%s195] %v206
                  %v208 = vld [vmem:[%s202 + $0x10] sm:%s195]
                  %209 = vst [vmem:[%s203 + $0x8] sm:%s195] %v208
                  %v210 = vld [vmem:[%s202 + $0x18] sm:%s195]
                  %211 = vst [vmem:[%s203 + $0xc] sm:%s195] %v210
                  %v212 = vld [vmem:[%s202 + $0x20] sm:%s195]
                  %213 = vst [vmem:[%s203 + $0x10] sm:%s195] %v212
                  %v214 = vld [vmem:[%s202 + $0x28] sm:%s195]
                  %215 = vst [vmem:[%s203 + $0x14] sm:%s195] %v214
                  %v216 = vld [vmem:[%s202 + $0x30] sm:%s195]
                  %217 = vst [vmem:[%s203 + $0x18] sm:%s195] %v216
                  %v218 = vld [vmem:[%s202 + $0x38] sm:%s195]
                  %219 = vst [vmem:[%s203 + $0x1c] sm:%s195] %v218
                  %v220 = vld [vmem:[%s202 + $0x40] sm:%s195]
                  %221 = vst [vmem:[%s203 + $0x20] sm:%s195] %v220
                  %v222 = vld [vmem:[%s202 + $0x48] sm:%s195]
                  %223 = vst [vmem:[%s203 + $0x24] sm:%s195] %v222
                  %v224 = vld [vmem:[%s202 + $0x50] sm:%s195]
                  %225 = vst [vmem:[%s203 + $0x28] sm:%s195] %v224
                  %v226 = vld [vmem:[%s202 + $0x58] sm:%s195]
                  %227 = vst [vmem:[%s203 + $0x2c] sm:%s195] %v226
                  %v228 = vld [vmem:[%s202 + $0x60] sm:%s195]
                  %229 = vst [vmem:[%s203 + $0x30] sm:%s195] %v228
                  %v230 = vld [vmem:[%s202 + $0x68] sm:%s195]
                  %231 = vst [vmem:[%s203 + $0x34] sm:%s195] %v230
                $region59: #{_lambda_.21} parent=46 // loop_footer
                  %s201 = sadd.s32 1, %s197
                $region60: #{_lambda_.21} parent=46 // loop_footer_branch
                  %196 = sbr.rel target = $region56
                $region61: #{_lambda_.21} parent=46 // loop_exit
                  _
              $region47: #{_lambda_.21} parent=31 // pred_fallthru
                _
            $region32: #{_lambda_.21} parent=27 // pred_fallthru
              _
            // Predicated region
            $region33: #{_lambda_.21} parent=27 // pred_check
              _
            $region34: #{_lambda_.21} parent=27 // pred_check_branch
              %145 = sbr.rel (0) target = $region36
            $region35: #{_lambda_.21} parent=27 // pred_region
              %s147 = ssub.s32 16, 1
              loop: start=0, step=1, limit=1
              $region37: #{_lambda_.21} parent=35 // loop_pre_header
                _
              $region38: #{_lambda_.21} parent=35 // loop_header
                %s149 = sphi 0, %s153
                %p150 = scmp.ge.s32.totalorder %s149, 1
                %s154 = sphi %s139, %s139
                %s155 = sphi %s137, %s137
              $region39: #{_lambda_.21} parent=35 // loop_header_branch
                %152 = sbr.rel (%p150) target = $region43
              $region40: #{_lambda_.21} parent=35 // loop_body
                %v156 = vld [vmem:[%s154] sm:%s147]
                %157 = vst [vmem:[%s155] sm:%s147] %v156
                %v158 = vld [vmem:[%s154 + $0x8] sm:%s147]
                %159 = vst [vmem:[%s155 + $0x4] sm:%s147] %v158
                %v160 = vld [vmem:[%s154 + $0x10] sm:%s147]
                %161 = vst [vmem:[%s155 + $0x8] sm:%s147] %v160
                %v162 = vld [vmem:[%s154 + $0x18] sm:%s147]
                %163 = vst [vmem:[%s155 + $0xc] sm:%s147] %v162
                %v164 = vld [vmem:[%s154 + $0x20] sm:%s147]
                %165 = vst [vmem:[%s155 + $0x10] sm:%s147] %v164
                %v166 = vld [vmem:[%s154 + $0x28] sm:%s147]
                %167 = vst [vmem:[%s155 + $0x14] sm:%s147] %v166
                %v168 = vld [vmem:[%s154 + $0x30] sm:%s147]
                %169 = vst [vmem:[%s155 + $0x18] sm:%s147] %v168
                %v170 = vld [vmem:[%s154 + $0x38] sm:%s147]
                %171 = vst [vmem:[%s155 + $0x1c] sm:%s147] %v170
                %v172 = vld [vmem:[%s154 + $0x40] sm:%s147]
                %173 = vst [vmem:[%s155 + $0x20] sm:%s147] %v172
                %v174 = vld [vmem:[%s154 + $0x48] sm:%s147]
                %175 = vst [vmem:[%s155 + $0x24] sm:%s147] %v174
                %v176 = vld [vmem:[%s154 + $0x50] sm:%s147]
                %177 = vst [vmem:[%s155 + $0x28] sm:%s147] %v176
                %v178 = vld [vmem:[%s154 + $0x58] sm:%s147]
                %179 = vst [vmem:[%s155 + $0x2c] sm:%s147] %v178
                %v180 = vld [vmem:[%s154 + $0x60] sm:%s147]
                %181 = vst [vmem:[%s155 + $0x30] sm:%s147] %v180
                %v182 = vld [vmem:[%s154 + $0x68] sm:%s147]
                %183 = vst [vmem:[%s155 + $0x34] sm:%s147] %v182
              $region41: #{_lambda_.21} parent=35 // loop_footer
                %s153 = sadd.s32 1, %s149
              $region42: #{_lambda_.21} parent=35 // loop_footer_branch
                %148 = sbr.rel target = $region38
              $region43: #{_lambda_.21} parent=35 // loop_exit
                _
            $region36: #{_lambda_.21} parent=27 // pred_fallthru
              _
          $region28: #{_lambda_.21} parent=23 // pred_fallthru
            _
          %232 = vnop
        $region24: #{_lambda_.21} parent=19 // pred_fallthru
          _
      $region20: #{_lambda_.21} parent=5 // pred_fallthru
        _
      %p233 = scmp.le.s32.totalorder 1, %s10
      %p234 = scmp.lt.s32.totalorder %s10, 3
      %p235 = pnand %p233, %p234
      %p236 = pneg %p235
      // Predicated region
      $region62: #{_lambda_.21} parent=5 // pred_check
        _
      $region63: #{_lambda_.21} parent=5 // pred_check_branch
        %238 = sbr.rel (%p235) target = $region65
      $region64: #{_lambda_.21} parent=5 // pred_region
        %s239 = ssub.s32 %s10, 1
        %s240 = sand.u32 %s23, 1
        %s241 = sand.u32 %s23, 1
        %s242 = smul.addr %s241, 56
        %s243 = scalar_lea.vmem [#allocation2], %s242
        // Predicated region
        $region66: #{_lambda_.21} parent=64 // pred_check
          %p244 = pneg %p36
        $region67: #{_lambda_.21} parent=64 // pred_check_branch
          %246 = sbr.rel (%p244) target = $region69
        $region68: #{_lambda_.21} parent=64 // pred_region
          _
        $region69: #{_lambda_.21} parent=64 // pred_fallthru
          _
        %s247 = sand.u32 %s23, 1
        %s248 = sand.u32 %s23, 1
        %s249 = smul.addr %s248, 56
        %s250 = scalar_lea.vmem [#allocation2], %s249
        %p251 = pneg %p36
        %p252 = pneg %p33
        %p253 = pneg %p57
        %p254 = pneg %p54
        %p255 = pneg %p83
        %p256 = pneg %p80
        %p257 = scmp.lt.s32.totalorder %s15, 1
        %s258 = scalar_select %p257, %s15, 1
        %s259 = smul.addr %s258, 2
        %s260 = scalar_lea.vmem %s2, %s259
        %p261 = pneg %p109
        %p262 = pneg %p106
        %p263 = scmp.lt.s32.totalorder %s15, 1
        %s264 = scalar_select %p263, %s15, 1
        %s265 = smul.addr %s264, 4
        %s266 = scalar_lea.vmem %s3, %s265
        %p267 = scmp.lt.s32.totalorder %s15, 1
        %s268 = scalar_select %p267, %s15, 1
        %s269 = smul.addr %s268, 2
        %s270 = scalar_lea.vmem %s2, %s269
        %p271 = scmp.lt.s32.totalorder %s15, 1
        %s272 = scalar_select %p271, %s15, 1
        %s273 = smul.addr %s272, 4
        %s274 = scalar_lea.vmem %s3, %s273
        %v276 = vld [vmem:[%s1] sm:$0x3]
        %v277 = vld [vmem:[%s243] sm:$0xf]
        %v278 = vld [vmem:[%s243 + $0x4] sm:$0xf]
        %v279 = vld [vmem:[%s243 + $0x8] sm:$0xf]
        %v280 = vld [vmem:[%s243 + $0xc] sm:$0xf]
        %v281 = vld [vmem:[%s243 + $0x10] sm:$0xf]
        %v282 = vld [vmem:[%s243 + $0x14] sm:$0xf]
        %v283 = vld [vmem:[%s243 + $0x18] sm:$0xf]
        %v284 = vld [vmem:[%s243 + $0x1c] sm:$0xf]
        %v285 = vld [vmem:[%s243 + $0x20] sm:$0xf]
        %v286 = vld [vmem:[%s243 + $0x24] sm:$0xf]
        %v287 = vld [vmem:[%s243 + $0x28] sm:$0xf]
        %v288 = vld [vmem:[%s243 + $0x2c] sm:$0xf]
        %v289 = vld [vmem:[%s243 + $0x30] sm:$0xf]
        %v290 = vld [vmem:[%s243 + $0x34] sm:$0x3]
        %v305 = vunpack.c.l.b16 %v277
        %v306 = vunpack.c.l.b16 %v278
        %v307 = vunpack.c.l.b16 %v279
        %v308 = vunpack.c.l.b16 %v280
        %v309 = vunpack.c.l.b16 %v281
        %v310 = vunpack.c.l.b16 %v282
        %v311 = vunpack.c.l.b16 %v283
        %v312 = vunpack.c.l.b16 %v284
        %v313 = vunpack.c.l.b16 %v285
        %v314 = vunpack.c.l.b16 %v286
        %v315 = vunpack.c.l.b16 %v287
        %v316 = vunpack.c.l.b16 %v288
        %v317 = vunpack.c.l.b16 %v289
        %v318 = vunpack.c.l.b16 %v290
        %v319 = vpack.c.b16 %v306, %v305
        %v320 = vpack.c.b16 %v308, %v307
        %v321 = vpack.c.b16 %v310, %v309
        %v322 = vpack.c.b16 %v312, %v311
        %v323 = vpack.c.b16 %v314, %v313
        %v324 = vpack.c.b16 %v316, %v315
        %v325 = vpack.c.b16 %v318, %v317
        %vm332 = vcmask 883712
        %v334 = vsel %vm332, %v276, 0
        %vm336 = vcmask 1045504
        %v338 = vsel %vm336, %v325, 0
        %340 = vmatprep.subr.bf16.mxu0 0
        %341 = vmatpush1.bf16.msra.mxu0 0
        %342 = vmatprep.subr.bf16.mxu0 0
        %343 = vmatpush1.bf16.msra.mxu0 %v338
        %344 = vmatprep.subr.bf16.mxu0 0
        %345 = vmatpush1.bf16.msra.mxu0 %v324
        %346 = vmatprep.subr.bf16.mxu0 0
        %347 = vmatpush1.bf16.msra.mxu0 %v323
        %348 = vmatprep.subr.bf16.mxu0 0
        %349 = vmatpush1.bf16.msra.mxu0 %v322
        %350 = vmatprep.subr.bf16.mxu0 0
        %351 = vmatpush1.bf16.msra.mxu0 %v321
        %352 = vmatprep.subr.bf16.mxu0 0
        %353 = vmatpush1.bf16.msra.mxu0 %v320
        %354 = vmatprep.subr.bf16.mxu0 0
        %355 = vmatpush1.bf16.msra.mxu0 %v319
        %356 = vmatprep.subr.bf16.mxu0 0
        %357 = vmatpush2.bf16.msra.mxu0 0
        %358 = vmatprep.subr.bf16.mxu0 0
        %359 = vmatpush2.bf16.msra.mxu0 0
        %360 = vmatprep.subr.bf16.mxu0 0
        %361 = vmatpush2.bf16.msra.mxu0 0
        %362 = vmatprep.subr.bf16.mxu0 0
        %363 = vmatpush2.bf16.msra.mxu0 0
        %364 = vmatprep.subr.bf16.mxu0 0
        %365 = vmatpush2.bf16.msra.mxu0 0
        %366 = vmatprep.subr.bf16.mxu0 0
        %367 = vmatpush2.bf16.msra.mxu0 0
        %368 = vmatprep.subr.bf16.mxu0 0
        %369 = vmatpush2.bf16.msra.mxu0 0
        %370 = vmatprep.subr.bf16.mxu0 0
        %371 = vmatpush2.bf16.msra.mxu0 0
        %372 = vmatprep.mubr.bf16.mxu0 0
        %373 = vmatmul.mubr.bf16.gmra.mxu0 %v334
        %v374 = vpop.f32.mrf.mxu0
        %v375 = vadd.f32 0.0, %v374
        %v376 = vpop.f32.mrf.mxu0
        %v377 = vpop.f32.mrf.mxu0
        %v378 = vpop.f32.mrf.mxu0
        %379 = vdwg.mxu0
        %v380 = vpack.c.bf16 %v375, %v375
        %381 = vst [vmem:[%s270] sm:$0x3] %v380
        %vm382 = vcmask 1043456
        %v383 = vsel %vm382, %v375, 0.0
        %384 = vadd.xlane.f32.xlu0 %v383
        %v385 = vpop.xlane.xlu0 %384
        %v386 = vmul.f32 %v375, %v375
        %v387 = vsel %vm382, %v386, 0.0
        %388 = vadd.xlane.f32.xlu0 %v387
        %v389 = vpop.xlane.xlu0 %388
        %v390 = vlaneseq
        %v391 = vand.u32 %v390, 127
        %vm392 = vcmp.eq.s32.totalorder %v391, 0
        %vm393 = vcmp.eq.s32.totalorder %v391, 1
        %v394 = vsel %vm393, %v389, 0.0
        %v395 = vsel %vm392, %v385, %v394
        %396 = vst [vmem:[%s274] sm:$0xf] %v395
        %p397 = scmp.lt.s32.totalorder %s15, 1
        %s398 = scalar_select %p397, %s15, 1
        %s399 = smul.addr %s398, 2
        %s400 = scalar_lea.vmem %s2, %s399
        %p401 = scmp.lt.s32.totalorder %s15, 1
        %s402 = scalar_select %p401, %s15, 1
        %s403 = smul.addr %s402, 4
        %s404 = scalar_lea.vmem %s3, %s403
        // Predicated region
        $region70: #{_lambda_.21} parent=64 // pred_check
          %p405 = pneg %p80
        $region71: #{_lambda_.21} parent=64 // pred_check_branch
          %407 = sbr.rel (%p405) target = $region73
        $region72: #{_lambda_.21} parent=64 // pred_region
          _
        $region73: #{_lambda_.21} parent=64 // pred_fallthru
          _
        // Predicated region
        $region74: #{_lambda_.21} parent=64 // pred_check
          %p408 = pneg %p106
        $region75: #{_lambda_.21} parent=64 // pred_check_branch
          %410 = sbr.rel (%p408) target = $region77
        $region76: #{_lambda_.21} parent=64 // pred_region
          _
        $region77: #{_lambda_.21} parent=64 // pred_fallthru
          _
      $region65: #{_lambda_.21} parent=5 // pred_fallthru
        _
      %p411 = scmp.le.s32.totalorder 2, %s10
      // Predicated region
      $region78: #{_lambda_.21} parent=5 // pred_check
        %p412 = pneg %p411
      $region79: #{_lambda_.21} parent=5 // pred_check_branch
        %414 = sbr.rel (%p412) target = $region81
      $region80: #{_lambda_.21} parent=5 // pred_region
        %s415 = ssub.s32 %s10, 2
        // Predicated region
        $region82: #{_lambda_.21} parent=80 // pred_check
          %p416 = pneg %p86
        $region83: #{_lambda_.21} parent=80 // pred_check_branch
          %418 = sbr.rel (%p416) target = $region85
        $region84: #{_lambda_.21} parent=80 // pred_region
          %p419 = scmp.lt.s32.totalorder %s16, 1
          %s420 = scalar_select %p419, %s16, 1
          %s421 = smul.addr %s420, 2
          %s422 = scalar_lea.vmem %s2, %s421
        $region85: #{_lambda_.21} parent=80 // pred_fallthru
          _
        // Predicated region
        $region86: #{_lambda_.21} parent=80 // pred_check
          %p423 = pneg %p112
        $region87: #{_lambda_.21} parent=80 // pred_check_branch
          %425 = sbr.rel (%p423) target = $region89
        $region88: #{_lambda_.21} parent=80 // pred_region
          %p426 = scmp.lt.s32.totalorder %s16, 1
          %s427 = scalar_select %p426, %s16, 1
          %s428 = smul.addr %s427, 4
          %s429 = scalar_lea.vmem %s3, %s428
        $region89: #{_lambda_.21} parent=80 // pred_fallthru
          _
      $region81: #{_lambda_.21} parent=5 // pred_fallthru
        _
    $region6: #{_lambda_.21} parent=1 // loop_footer
      %s14 = sadd.s32 1, %s10
    $region7: #{_lambda_.21} parent=1 // loop_footer_branch
      %9 = sbr.rel target = $region3
    $region8: #{_lambda_.21} parent=1 // loop_exit
      _

// kernel: _lambda_.22
$region0: #{_lambda_.22}
  #allocation0 [shape = 'u32[]', space=smem, size = 0x4, offset = 0x4, fixed_abs, tag = 'smem constant byte address 0x4 - core index']
  #allocation1 [shape = 'u32[144,128]{1,0:T(1,128)}', space=vmem, size = 0x12000, scoped, tag = 'internal scratch']
  %s0 = inlined_call_operand.vmem [shape: bf16[4,256], index: 0, kind: input, shape index: {}]
  %s1 = inlined_call_operand.vmem [shape: bf16[16,4], index: 1, kind: input, shape index: {}]
  %s2 = inlined_call_operand.vmem [shape: f32[4,1], index: 2, kind: input, shape index: {}]
  %s3 = inlined_call_operand.vmem [shape: f32[4,1], index: 3, kind: input, shape index: {}]
  %s4 = inlined_call_operand.vmem [shape: f32[1,256], index: 4, kind: input, shape index: {}]
  %s5 = inlined_call_operand.vmem [shape: bf16[16,256], index: 5, kind: output, shape index: {0}]
  %s6 = inlined_call_operand.vmem [shape: f32[16,256], index: 6, kind: output, shape index: {1}]
  %7 = xla_tuple %s5, %s6
  %s8 = sld [smem:[#allocation0]]
  $region132: #{_lambda_.22} parent=0
    _
  %s10 = ssub.s32 1, %s8
  %s11 = scalar_select 0, %s10, %s8
  $region1: #{_lambda_.22} parent=0
    #allocation2 [shape = 'u8[8192]{0}', space=vmem, size = 0x2000, scoped, tag = 'output window, operand 0']
    #allocation3 [shape = 'u8[16384]{0}', space=vmem, size = 0x4000, scoped, tag = 'output window, operand 1']
    loop: start=0, step=1, limit=4
    $region2: #{_lambda_.22} parent=1 // loop_pre_header
      _
    $region3: #{_lambda_.22} parent=1 // loop_header
      %s13 = sphi 0, %s17
      %p14 = scmp.ge.s32.totalorder %s13, 4
      %s23 = sphi 0, %s25
      %s26 = sphi 0, %s23
      %s27 = sphi 0, %s26
      %s43 = sphi 0, %s27
      %s47 = sphi 0, %s47
      %s49 = sphi 0, %s47
      %s50 = sphi 0, %s49
      %s64 = sphi 0, %s50
      %s68 = sphi 0, %s68
      %s70 = sphi 0, %s68
      %s71 = sphi 0, %s70
      %s85 = sphi 0, %s71
      %s89 = sphi 0, %s89
      %s91 = sphi 0, %s89
      %s92 = sphi 0, %s91
      %s106 = sphi 0, %s92
      %s112 = sphi 0, %s114
      %s115 = sphi 0, %s112
      %s116 = sphi 0, %s115
      %s132 = sphi 0, %s116
      %s138 = sphi 0, %s140
      %s141 = sphi 0, %s138
      %s142 = sphi 0, %s141
      %s158 = sphi 0, %s142
      %s164 = sphi 0, %s166
      %s167 = sphi 0, %s164
      %s168 = sphi 0, %s167
      %s184 = sphi 0, %s168
    $region4: #{_lambda_.22} parent=1 // loop_header_branch
      %16 = sbr.rel (%p14) target = $region8
    $region5: #{_lambda_.22} parent=1 // loop_body
      %s18 = ssub.s32 %s13, 1
      %s19 = ssub.s32 %s13, 2
      %s20 = sadd.s32 %s13, 1
      %s21 = ssub.s32 %s13, %s20
      %p22 = scmp.eq.s32.totalorder %s21, 0
      %s24 = sadd.s32 %s23, 1
      %s25 = scalar_select %p22, %s23, %s24
      %p28 = pneg %p22
      %p29 = scmp.eq.s32.totalorder %s13, 1
      %p30 = por %p28, %p29
      %p31 = scmp.ne.s32.totalorder %s23, %s26
      %p32 = scmp.eq.s32.totalorder %s13, 0
      %p33 = por %p31, %p32
      %p34 = scmp.ne.s32.totalorder %s23, %s26
      %p35 = scmp.eq.s32.totalorder %s18, 1
      %p36 = por %p34, %p35
      %p37 = scmp.ne.s32.totalorder %s26, %s27
      %p38 = scmp.eq.s32.totalorder %s18, 0
      %p39 = por %p37, %p38
      %p40 = scmp.ne.s32.totalorder %s26, %s27
      %p41 = scmp.eq.s32.totalorder %s19, 1
      %p42 = por %p40, %p41
      %p44 = scmp.ne.s32.totalorder %s27, %s43
      %p45 = scmp.eq.s32.totalorder %s19, 0
      %p46 = por %p44, %p45
      %s48 = sadd.s32 %s47, 1
      %p51 = scmp.eq.s32.totalorder %s13, 1
      %p52 = scmp.ne.s32.totalorder %s47, %s49
      %p53 = scmp.eq.s32.totalorder %s13, 0
      %p54 = por %p52, %p53
      %p55 = scmp.ne.s32.totalorder %s47, %s49
      %p56 = scmp.eq.s32.totalorder %s18, 1
      %p57 = por %p55, %p56
      %p58 = scmp.ne.s32.totalorder %s49, %s50
      %p59 = scmp.eq.s32.totalorder %s18, 0
      %p60 = por %p58, %p59
      %p61 = scmp.ne.s32.totalorder %s49, %s50
      %p62 = scmp.eq.s32.totalorder %s19, 1
      %p63 = por %p61, %p62
      %p65 = scmp.ne.s32.totalorder %s50, %s64
      %p66 = scmp.eq.s32.totalorder %s19, 0
      %p67 = por %p65, %p66
      %s69 = sadd.s32 %s68, 1
      %p72 = scmp.eq.s32.totalorder %s13, 1
      %p73 = scmp.ne.s32.totalorder %s68, %s70
      %p74 = scmp.eq.s32.totalorder %s13, 0
      %p75 = por %p73, %p74
      %p76 = scmp.ne.s32.totalorder %s68, %s70
      %p77 = scmp.eq.s32.totalorder %s18, 1
      %p78 = por %p76, %p77
      %p79 = scmp.ne.s32.totalorder %s70, %s71
      %p80 = scmp.eq.s32.totalorder %s18, 0
      %p81 = por %p79, %p80
      %p82 = scmp.ne.s32.totalorder %s70, %s71
      %p83 = scmp.eq.s32.totalorder %s19, 1
      %p84 = por %p82, %p83
      %p86 = scmp.ne.s32.totalorder %s71, %s85
      %p87 = scmp.eq.s32.totalorder %s19, 0
      %p88 = por %p86, %p87
      %s90 = sadd.s32 %s89, 1
      %p93 = scmp.eq.s32.totalorder %s13, 1
      %p94 = scmp.ne.s32.totalorder %s89, %s91
      %p95 = scmp.eq.s32.totalorder %s13, 0
      %p96 = por %p94, %p95
      %p97 = scmp.ne.s32.totalorder %s89, %s91
      %p98 = scmp.eq.s32.totalorder %s18, 1
      %p99 = por %p97, %p98
      %p100 = scmp.ne.s32.totalorder %s91, %s92
      %p101 = scmp.eq.s32.totalorder %s18, 0
      %p102 = por %p100, %p101
      %p103 = scmp.ne.s32.totalorder %s91, %s92
      %p104 = scmp.eq.s32.totalorder %s19, 1
      %p105 = por %p103, %p104
      %p107 = scmp.ne.s32.totalorder %s92, %s106
      %p108 = scmp.eq.s32.totalorder %s19, 0
      %p109 = por %p107, %p108
      %s110 = ssub.s32 %s13, %s20
      %p111 = scmp.eq.s32.totalorder %s110, 0
      %s113 = sadd.s32 %s112, 1
      %s114 = scalar_select %p111, %s112, %s113
      %p117 = pneg %p111
      %p118 = scmp.eq.s32.totalorder %s13, 1
      %p119 = por %p117, %p118
      %p120 = scmp.ne.s32.totalorder %s112, %s115
      %p121 = scmp.eq.s32.totalorder %s13, 0
      %p122 = por %p120, %p121
      %p123 = scmp.ne.s32.totalorder %s112, %s115
      %p124 = scmp.eq.s32.totalorder %s18, 1
      %p125 = por %p123, %p124
      %p126 = scmp.ne.s32.totalorder %s115, %s116
      %p127 = scmp.eq.s32.totalorder %s18, 0
      %p128 = por %p126, %p127
      %p129 = scmp.ne.s32.totalorder %s115, %s116
      %p130 = scmp.eq.s32.totalorder %s19, 1
      %p131 = por %p129, %p130
      %p133 = scmp.ne.s32.totalorder %s116, %s132
      %p134 = scmp.eq.s32.totalorder %s19, 0
      %p135 = por %p133, %p134
      %s136 = ssub.s32 %s13, %s20
      %p137 = scmp.eq.s32.totalorder %s136, 0
      %s139 = sadd.s32 %s138, 1
      %s140 = scalar_select %p137, %s138, %s139
      %p143 = pneg %p137
      %p144 = scmp.eq.s32.totalorder %s13, 1
      %p145 = por %p143, %p144
      %p146 = scmp.ne.s32.totalorder %s138, %s141
      %p147 = scmp.eq.s32.totalorder %s13, 0
      %p148 = por %p146, %p147
      %p149 = scmp.ne.s32.totalorder %s138, %s141
      %p150 = scmp.eq.s32.totalorder %s18, 1
      %p151 = por %p149, %p150
      %p152 = scmp.ne.s32.totalorder %s141, %s142
      %p153 = scmp.eq.s32.totalorder %s18, 0
      %p154 = por %p152, %p153
      %p155 = scmp.ne.s32.totalorder %s141, %s142
      %p156 = scmp.eq.s32.totalorder %s19, 1
      %p157 = por %p155, %p156
      %p159 = scmp.ne.s32.totalorder %s142, %s158
      %p160 = scmp.eq.s32.totalorder %s19, 0
      %p161 = por %p159, %p160
      %s162 = ssub.s32 %s13, %s20
      %p163 = scmp.eq.s32.totalorder %s162, 0
      %s165 = sadd.s32 %s164, 1
      %s166 = scalar_select %p163, %s164, %s165
      %p169 = pneg %p163
      %p170 = scmp.eq.s32.totalorder %s13, 1
      %p171 = por %p169, %p170
      %p172 = scmp.ne.s32.totalorder %s164, %s167
      %p173 = scmp.eq.s32.totalorder %s13, 0
      %p174 = por %p172, %p173
      %p175 = scmp.ne.s32.totalorder %s164, %s167
      %p176 = scmp.eq.s32.totalorder %s18, 1
      %p177 = por %p175, %p176
      %p178 = scmp.ne.s32.totalorder %s167, %s168
      %p179 = scmp.eq.s32.totalorder %s18, 0
      %p180 = por %p178, %p179
      %p181 = scmp.ne.s32.totalorder %s167, %s168
      %p182 = scmp.eq.s32.totalorder %s19, 1
      %p183 = por %p181, %p182
      %p185 = scmp.ne.s32.totalorder %s168, %s184
      %p186 = scmp.eq.s32.totalorder %s19, 0
      %p187 = por %p185, %p186
      %p188 = scmp.le.s32.totalorder 1, %s13
      %p189 = scmp.lt.s32.totalorder %s13, 3
      %p190 = pnand %p188, %p189
      %p191 = pneg %p190
      // Predicated region
      $region9: #{_lambda_.22} parent=5 // pred_check
        _
      $region10: #{_lambda_.22} parent=5 // pred_check_branch
        %193 = sbr.rel (%p190) target = $region12
      $region11: #{_lambda_.22} parent=5 // pred_region
        %s194 = ssub.s32 %s13, 1
        // Predicated region
        $region13: #{_lambda_.22} parent=11 // pred_check
          %p195 = pneg %p60
        $region14: #{_lambda_.22} parent=11 // pred_check_branch
          %197 = sbr.rel (%p195) target = $region16
        $region15: #{_lambda_.22} parent=11 // pred_region
          _
        $region16: #{_lambda_.22} parent=11 // pred_fallthru
          _
        // Predicated region
        $region17: #{_lambda_.22} parent=11 // pred_check
          %p198 = pneg %p81
        $region18: #{_lambda_.22} parent=11 // pred_check_branch
          %200 = sbr.rel (%p198) target = $region20
        $region19: #{_lambda_.22} parent=11 // pred_region
          _
        $region20: #{_lambda_.22} parent=11 // pred_fallthru
          _
        // Predicated region
        $region21: #{_lambda_.22} parent=11 // pred_check
          %p201 = pneg %p102
        $region22: #{_lambda_.22} parent=11 // pred_check_branch
          %203 = sbr.rel (%p201) target = $region24
        $region23: #{_lambda_.22} parent=11 // pred_region
          _
        $region24: #{_lambda_.22} parent=11 // pred_fallthru
          _
      $region12: #{_lambda_.22} parent=5 // pred_fallthru
        _
      %p204 = scmp.lt.s32.totalorder %s13, 2
      // Predicated region
      $region25: #{_lambda_.22} parent=5 // pred_check
        %p205 = pneg %p204
      $region26: #{_lambda_.22} parent=5 // pred_check_branch
        %207 = sbr.rel (%p205) target = $region28
      $region27: #{_lambda_.22} parent=5 // pred_region
        // Predicated region
        $region29: #{_lambda_.22} parent=27 // pred_check
          %p208 = pneg %p33
        $region30: #{_lambda_.22} parent=27 // pred_check_branch
          %210 = sbr.rel (%p208) target = $region32
        $region31: #{_lambda_.22} parent=27 // pred_region
          %p211 = scmp.lt.s32.totalorder %s13, 1
          %s212 = scalar_select %p211, %s13, 1
          %s213 = smul.addr %s212, 2
          %s214 = scalar_lea.vmem %s0, %s213
        $region32: #{_lambda_.22} parent=27 // pred_fallthru
          _
        // Predicated region
        $region33: #{_lambda_.22} parent=27 // pred_check
          %p215 = pneg %p122
        $region34: #{_lambda_.22} parent=27 // pred_check_branch
          %217 = sbr.rel (%p215) target = $region36
        $region35: #{_lambda_.22} parent=27 // pred_region
          %p218 = scmp.lt.s32.totalorder %s13, 1
          %s219 = scalar_select %p218, %s13, 1
          %s220 = scalar_lea.vmem %s4, %s219
        $region36: #{_lambda_.22} parent=27 // pred_fallthru
          _
      $region28: #{_lambda_.22} parent=5 // pred_fallthru
        _
      %p221 = scmp.le.s32.totalorder 1, %s13
      %p222 = scmp.lt.s32.totalorder %s13, 3
      %p223 = pnand %p221, %p222
      %p224 = pneg %p223
      // Predicated region
      $region37: #{_lambda_.22} parent=5 // pred_check
        _
      $region38: #{_lambda_.22} parent=5 // pred_check_branch
        %226 = sbr.rel (%p223) target = $region40
      $region39: #{_lambda_.22} parent=5 // pred_region
        %s227 = ssub.s32 %s13, 1
        %p228 = scmp.lt.s32.totalorder %s18, 1
        %s229 = scalar_select %p228, %s18, 1
        %s230 = smul.addr %s229, 2
        %s231 = scalar_lea.vmem %s0, %s230
        %p232 = pneg %p39
        %p233 = pneg %p36
        %p234 = pneg %p60
        %p235 = pneg %p57
        %p236 = pneg %p81
        %p237 = pneg %p78
        %p238 = pneg %p102
        %p239 = pneg %p99
        %p240 = scmp.lt.s32.totalorder %s18, 1
        %s241 = scalar_select %p240, %s18, 1
        %s242 = scalar_lea.vmem %s4, %s241
        %p243 = pneg %p128
        %p244 = pneg %p125
        %p245 = pneg %p154
        %p246 = pneg %p151
        %s247 = sand.u32 %s141, 1
        %s248 = sand.u32 %s141, 1
        %s249 = smul.addr %s248, 8
        %s250 = scalar_lea.vmem [#allocation2], %s249
        %p251 = pneg %p180
        %p252 = pneg %p177
        %s253 = sand.u32 %s167, 1
        %s254 = sand.u32 %s167, 1
        %s255 = smul.addr %s254, 16
        %s256 = scalar_lea.vmem [#allocation3], %s255
        %p257 = scmp.lt.s32.totalorder %s18, 1
        %s258 = scalar_select %p257, %s18, 1
        %s259 = smul.addr %s258, 2
        %s260 = scalar_lea.vmem %s0, %s259
        %p261 = scmp.lt.s32.totalorder %s18, 1
        %s262 = scalar_select %p261, %s18, 1
        %s263 = scalar_lea.vmem %s4, %s262
        %v265 = vld [vmem:[%s2] sm:$0xf]
        %v266 = vld [vmem:[%s260] sm:$0x3]
        %v267 = vunpack.c.l.bf16 %v266
        %269 = vset.pattern.permute.xlu0 0
        %270 = vperm.xlu0 %269, %v265
        %v271 = vpop.permute.xlu0 %270
        %v273 = vmul.f32 %v271, %v267
        %v274 = vld [vmem:[%s3] sm:$0xf]
        %v275 = vld [vmem:[%s263] sm:$0x1]
        %277 = vset.pattern.permute.xlu0 0
        %278 = vperm.xlu0 %277, %v274
        %v279 = vpop.permute.xlu0 %278
        %v282 = vlaneseq
        %v283 = vshrl.u32 %v282, 7
        %v284 = vsub.s32 0, %v283
        %v285 = vrot.slane %v275, %v284
        %v287 = vmul.f32 %v279, %v285
        %v288 = vadd.f32 %v273, %v287
        %v289 = vmax.f32 %v288, 0.0
        %v290 = vld [vmem:[%s1] sm:$0xf]
        %v291 = vld [vmem:[%s1 + $0x4] sm:$0xf]
        %v292 = vpack.c.bf16 %v289, %v289
        %v295 = vunpack.c.l.b16 %v290
        %v296 = vunpack.c.l.b16 %v291
        %v297 = vpack.c.b16 %v296, %v295
        %vm298 = vcmask 31744
        %v300 = vsel %vm298, %v297, 0
        %vm302 = vcmask 1041408
        %v304 = vsel %vm302, %v292, 0
        %306 = vmatprep.subr.bf16.mxu0 0
        %307 = vmatpush1.bf16.msra.mxu0 0
        %308 = vmatprep.subr.bf16.mxu0 0
        %309 = vmatpush1.bf16.msra.mxu0 0
        %310 = vmatprep.subr.bf16.mxu0 0
        %311 = vmatpush1.bf16.msra.mxu0 0
        %312 = vmatprep.subr.bf16.mxu0 0
        %313 = vmatpush1.bf16.msra.mxu0 0
        %314 = vmatprep.subr.bf16.mxu0 0
        %315 = vmatpush1.bf16.msra.mxu0 0
        %316 = vmatprep.subr.bf16.mxu0 0
        %317 = vmatpush1.bf16.msra.mxu0 0
        %318 = vmatprep.subr.bf16.mxu0 0
        %319 = vmatpush1.bf16.msra.mxu0 0
        %320 = vmatprep.subr.bf16.mxu0 0
        %321 = vmatpush1.bf16.msra.mxu0 %v304
        %322 = vmatprep.subr.bf16.mxu0 0
        %323 = vmatpush2.bf16.msra.mxu0 0
        %324 = vmatprep.subr.bf16.mxu0 0
        %325 = vmatpush2.bf16.msra.mxu0 0
        %326 = vmatprep.subr.bf16.mxu0 0
        %327 = vmatpush2.bf16.msra.mxu0 0
        %328 = vmatprep.subr.bf16.mxu0 0
        %329 = vmatpush2.bf16.msra.mxu0 0
        %330 = vmatprep.subr.bf16.mxu0 0
        %331 = vmatpush2.bf16.msra.mxu0 0
        %332 = vmatprep.subr.bf16.mxu0 0
        %333 = vmatpush2.bf16.msra.mxu0 0
        %334 = vmatprep.subr.bf16.mxu0 0
        %335 = vmatpush2.bf16.msra.mxu0 0
        %336 = vmatprep.subr.bf16.mxu0 0
        %337 = vmatpush2.bf16.msra.mxu0 0
        %338 = vmatprep.mubr.bf16.mxu0 0
        %339 = vmatmul.mubr.bf16.gmra.mxu0 %v300
        %v340 = vpop.f32.mrf.mxu0
        %v341 = vadd.f32 0.0, %v340
        %v342 = vpop.f32.mrf.mxu0
        %v343 = vpop.f32.mrf.mxu0
        %v344 = vadd.f32 0.0, %v343
        %v345 = vpop.f32.mrf.mxu0
        %346 = vdwg.mxu0
        %v347 = vpack.c.bf16 %v344, %v341
        %v349 = vunpack.c.l.b16 %v347
        %v350 = vunpack.c.h.b16 %v347
        %v351 = vpack.c.b16 %v349, %v349
        %v352 = vpack.c.b16 %v350, %v350
        %355 = vst [vmem:[%s250] sm:$0xf] %v351
        %356 = vst [vmem:[%s250 + $0x4] sm:$0xf] %v352
        %357 = vadd.xlane.f32.xlu0 %v341
        %v358 = vpop.xlane.xlu0 %357
        %359 = vadd.xlane.f32.xlu0 %v344
        %v360 = vpop.xlane.xlu0 %359
        %v361 = vmul.f32 %v341, %v341
        %v362 = vmul.f32 %v344, %v344
        %363 = vadd.xlane.f32.xlu0 %v361
        %v364 = vpop.xlane.xlu0 %363
        %365 = vadd.xlane.f32.xlu0 %v362
        %v366 = vpop.xlane.xlu0 %365
        %v367 = vlaneseq
        %v368 = vand.u32 %v367, 127
        %vm369 = vcmp.eq.s32.totalorder %v368, 0
        %vm370 = vcmp.eq.s32.totalorder %v368, 1
        %v371 = vsel %vm370, %v364, 0.0
        %v372 = vsel %vm370, %v366, 0.0
        %v373 = vsel %vm369, %v358, %v371
        %v374 = vsel %vm369, %v360, %v372
        %375 = vst [vmem:[%s256] sm:$0xff] %v373
        %376 = vst [vmem:[%s256 + $0x8] sm:$0xff] %v374
        %s377 = sand.u32 %s141, 1
        %s378 = sand.u32 %s141, 1
        %s379 = smul.addr %s378, 8
        %s380 = scalar_lea.vmem [#allocation2], %s379
        %s381 = sand.u32 %s167, 1
        %s382 = sand.u32 %s167, 1
        %s383 = smul.addr %s382, 16
        %s384 = scalar_lea.vmem [#allocation3], %s383
        // Predicated region
        $region41: #{_lambda_.22} parent=39 // pred_check
          %p385 = pneg %p151
        $region42: #{_lambda_.22} parent=39 // pred_check_branch
          %387 = sbr.rel (%p385) target = $region44
        $region43: #{_lambda_.22} parent=39 // pred_region
          %s388 = smul.addr %s18, 4
          %s389 = scalar_lea.vmem %s5, %s388
          // Predicated region
          $region45: #{_lambda_.22} parent=43 // pred_check
            _
          $region46: #{_lambda_.22} parent=43 // pred_check_branch
            %391 = sbr.rel (0) target = $region48
          $region47: #{_lambda_.22} parent=43 // pred_region
            // Predicated region
            $region49: #{_lambda_.22} parent=47 // pred_check
              _
            $region50: #{_lambda_.22} parent=47 // pred_check_branch
              %393 = sbr.rel target = $region52
            $region51: #{_lambda_.22} parent=47 // pred_region
              // Predicated region
              $region64: #{_lambda_.22} parent=51 // pred_check
                _
              $region65: #{_lambda_.22} parent=51 // pred_check_branch
                %411 = sbr.rel (0) target = $region67
              $region66: #{_lambda_.22} parent=51 // pred_region
                loop: start=0, step=1, limit=1
                $region68: #{_lambda_.22} parent=66 // loop_pre_header
                  _
                $region69: #{_lambda_.22} parent=66 // loop_header
                  %s413 = sphi 0, %s417
                  %p414 = scmp.ge.s32.totalorder %s413, 1
                  %s418 = sphi %s380, %s380
                  %s419 = sphi %s389, %s389
                $region70: #{_lambda_.22} parent=66 // loop_header_branch
                  %416 = sbr.rel (%p414) target = $region74
                $region71: #{_lambda_.22} parent=66 // loop_body
                  _
                $region72: #{_lambda_.22} parent=66 // loop_footer
                  %s417 = sadd.s32 1, %s413
                $region73: #{_lambda_.22} parent=66 // loop_footer_branch
                  %412 = sbr.rel target = $region69
                $region74: #{_lambda_.22} parent=66 // loop_exit
                  _
                %s421 = ssub.s32 16, 1
                loop: start=0, step=1, limit=1
                $region75: #{_lambda_.22} parent=66 // loop_pre_header
                  _
                $region76: #{_lambda_.22} parent=66 // loop_header
                  %s423 = sphi 0, %s427
                  %p424 = scmp.ge.s32.totalorder %s423, 1
                  %s428 = sphi %s380, %s380
                  %s429 = sphi %s389, %s389
                $region77: #{_lambda_.22} parent=66 // loop_header_branch
                  %426 = sbr.rel (%p424) target = $region81
                $region78: #{_lambda_.22} parent=66 // loop_body
                  %v430 = vld [vmem:[%s428] sm:%s421]
                  %431 = vst [vmem:[%s429] sm:%s421] %v430
                  %v432 = vld [vmem:[%s428 + $0x4] sm:%s421]
                  %433 = vst [vmem:[%s429 + $0x8] sm:%s421] %v432
                $region79: #{_lambda_.22} parent=66 // loop_footer
                  %s427 = sadd.s32 1, %s423
                $region80: #{_lambda_.22} parent=66 // loop_footer_branch
                  %422 = sbr.rel target = $region76
                $region81: #{_lambda_.22} parent=66 // loop_exit
                  _
              $region67: #{_lambda_.22} parent=51 // pred_fallthru
                _
            $region52: #{_lambda_.22} parent=47 // pred_fallthru
              _
            // Predicated region
            $region53: #{_lambda_.22} parent=47 // pred_check
              _
            $region54: #{_lambda_.22} parent=47 // pred_check_branch
              %395 = sbr.rel (0) target = $region56
            $region55: #{_lambda_.22} parent=47 // pred_region
              %s397 = ssub.s32 16, 1
              loop: start=0, step=1, limit=1
              $region57: #{_lambda_.22} parent=55 // loop_pre_header
                _
              $region58: #{_lambda_.22} parent=55 // loop_header
                %s399 = sphi 0, %s403
                %p400 = scmp.ge.s32.totalorder %s399, 1
                %s404 = sphi %s380, %s380
                %s405 = sphi %s389, %s389
              $region59: #{_lambda_.22} parent=55 // loop_header_branch
                %402 = sbr.rel (%p400) target = $region63
              $region60: #{_lambda_.22} parent=55 // loop_body
                %v406 = vld [vmem:[%s404] sm:%s397]
                %407 = vst [vmem:[%s405] sm:%s397] %v406
                %v408 = vld [vmem:[%s404 + $0x4] sm:%s397]
                %409 = vst [vmem:[%s405 + $0x8] sm:%s397] %v408
              $region61: #{_lambda_.22} parent=55 // loop_footer
                %s403 = sadd.s32 1, %s399
              $region62: #{_lambda_.22} parent=55 // loop_footer_branch
                %398 = sbr.rel target = $region58
              $region63: #{_lambda_.22} parent=55 // loop_exit
                _
            $region56: #{_lambda_.22} parent=47 // pred_fallthru
              _
          $region48: #{_lambda_.22} parent=43 // pred_fallthru
            _
          %434 = vnop
        $region44: #{_lambda_.22} parent=39 // pred_fallthru
          _
        // Predicated region
        $region82: #{_lambda_.22} parent=39 // pred_check
          %p435 = pneg %p177
        $region83: #{_lambda_.22} parent=39 // pred_check_branch
          %437 = sbr.rel (%p435) target = $region85
        $region84: #{_lambda_.22} parent=39 // pred_region
          %s438 = smul.addr %s18, 8
          %s439 = scalar_lea.vmem %s6, %s438
          // Predicated region
          $region86: #{_lambda_.22} parent=84 // pred_check
            _
          $region87: #{_lambda_.22} parent=84 // pred_check_branch
            %441 = sbr.rel (0) target = $region89
          $region88: #{_lambda_.22} parent=84 // pred_region
            // Predicated region
            $region90: #{_lambda_.22} parent=88 // pred_check
              _
            $region91: #{_lambda_.22} parent=88 // pred_check_branch
              %443 = sbr.rel (0) target = $region93
            $region92: #{_lambda_.22} parent=88 // pred_region
              // Predicated region
              $region105: #{_lambda_.22} parent=92 // pred_check
                _
              $region106: #{_lambda_.22} parent=92 // pred_check_branch
                %461 = sbr.rel (0) target = $region108
              $region107: #{_lambda_.22} parent=92 // pred_region
                loop: start=0, step=1, limit=1
                $region109: #{_lambda_.22} parent=107 // loop_pre_header
                  _
                $region110: #{_lambda_.22} parent=107 // loop_header
                  %s463 = sphi 0, %s467
                  %p464 = scmp.ge.s32.totalorder %s463, 1
                  %s468 = sphi %s384, %s384
                  %s469 = sphi %s439, %s439
                $region111: #{_lambda_.22} parent=107 // loop_header_branch
                  %466 = sbr.rel (%p464) target = $region115
                $region112: #{_lambda_.22} parent=107 // loop_body
                  %v470 = vld [vmem:[%s468] sm:$0xff]
                  %471 = vst [vmem:[%s469] sm:$0xff] %v470
                  %v472 = vld [vmem:[%s468 + $0x8] sm:$0xff]
                  %473 = vst [vmem:[%s469 + $0x10] sm:$0xff] %v472
                $region113: #{_lambda_.22} parent=107 // loop_footer
                  %s467 = sadd.s32 1, %s463
                $region114: #{_lambda_.22} parent=107 // loop_footer_branch
                  %462 = sbr.rel target = $region110
                $region115: #{_lambda_.22} parent=107 // loop_exit
                  _
              $region108: #{_lambda_.22} parent=92 // pred_fallthru
                _
              // Predicated region
              $region116: #{_lambda_.22} parent=92 // pred_check
                _
              $region117: #{_lambda_.22} parent=92 // pred_check_branch
                %475 = sbr.rel target = $region119
              $region118: #{_lambda_.22} parent=92 // pred_region
                _
              $region119: #{_lambda_.22} parent=92 // pred_fallthru
                _
            $region93: #{_lambda_.22} parent=88 // pred_fallthru
              _
            // Predicated region
            $region94: #{_lambda_.22} parent=88 // pred_check
              _
            $region95: #{_lambda_.22} parent=88 // pred_check_branch
              %445 = sbr.rel target = $region97
            $region96: #{_lambda_.22} parent=88 // pred_region
              %s447 = ssub.s32 256, 1
              loop: start=0, step=1, limit=1
              $region98: #{_lambda_.22} parent=96 // loop_pre_header
                _
              $region99: #{_lambda_.22} parent=96 // loop_header
                %s449 = sphi 0, %s453
                %p450 = scmp.ge.s32.totalorder %s449, 1
                %s454 = sphi %s384, %s384
                %s455 = sphi %s439, %s439
              $region100: #{_lambda_.22} parent=96 // loop_header_branch
                %452 = sbr.rel (%p450) target = $region104
              $region101: #{_lambda_.22} parent=96 // loop_body
                %v456 = vld [vmem:[%s454] sm:%s447]
                %457 = vst [vmem:[%s455] sm:%s447] %v456
                %v458 = vld [vmem:[%s454 + $0x8] sm:%s447]
                %459 = vst [vmem:[%s455 + $0x10] sm:%s447] %v458
              $region102: #{_lambda_.22} parent=96 // loop_footer
                %s453 = sadd.s32 1, %s449
              $region103: #{_lambda_.22} parent=96 // loop_footer_branch
                %448 = sbr.rel target = $region99
              $region104: #{_lambda_.22} parent=96 // loop_exit
                _
            $region97: #{_lambda_.22} parent=88 // pred_fallthru
              _
          $region89: #{_lambda_.22} parent=84 // pred_fallthru
            _
          %476 = vnop
        $region85: #{_lambda_.22} parent=39 // pred_fallthru
          _
      $region40: #{_lambda_.22} parent=5 // pred_fallthru
        _
      %p477 = scmp.le.s32.totalorder 2, %s13
      // Predicated region
      $region120: #{_lambda_.22} parent=5 // pred_check
        %p478 = pneg %p477
      $region121: #{_lambda_.22} parent=5 // pred_check_branch
        %480 = sbr.rel (%p478) target = $region123
      $region122: #{_lambda_.22} parent=5 // pred_region
        %s481 = ssub.s32 %s13, 2
        // Predicated region
        $region124: #{_lambda_.22} parent=122 // pred_check
          %p482 = pneg %p157
        $region125: #{_lambda_.22} parent=122 // pred_check_branch
          %484 = sbr.rel (%p482) target = $region127
        $region126: #{_lambda_.22} parent=122 // pred_region
          %s485 = sand.u32 %s142, 1
          %s486 = sand.u32 %s142, 1
          %s487 = smul.addr %s486, 8
          %s488 = scalar_lea.vmem [#allocation2], %s487
        $region127: #{_lambda_.22} parent=122 // pred_fallthru
          _
        // Predicated region
        $region128: #{_lambda_.22} parent=122 // pred_check
          %p489 = pneg %p183
        $region129: #{_lambda_.22} parent=122 // pred_check_branch
          %491 = sbr.rel (%p489) target = $region131
        $region130: #{_lambda_.22} parent=122 // pred_region
          %s492 = sand.u32 %s168, 1
          %s493 = sand.u32 %s168, 1
          %s494 = smul.addr %s493, 16
          %s495 = scalar_lea.vmem [#allocation3], %s494
        $region131: #{_lambda_.22} parent=122 // pred_fallthru
          _
      $region123: #{_lambda_.22} parent=5 // pred_fallthru
        _
    $region6: #{_lambda_.22} parent=1 // loop_footer
      %s17 = sadd.s32 1, %s13
    $region7: #{_lambda_.22} parent=1 // loop_footer_branch
      %12 = sbr.rel target = $region3
    $region8: #{_lambda_.22} parent=1 // loop_exit
      _

// kernel: _lambda_.23
$region0: #{_lambda_.23}
  #allocation0 [shape = 'u32[]', space=smem, size = 0x4, offset = 0x4, fixed_abs, tag = 'smem constant byte address 0x4 - core index']
  #allocation1 [shape = 'u32[144,128]{1,0:T(1,128)}', space=vmem, size = 0x12000, scoped, tag = 'internal scratch']
  %s0 = inlined_call_operand.vmem [shape: bf16[16,256], index: 0, kind: input, shape index: {}]
  %s1 = inlined_call_operand.vmem [shape: bf16[16,256], index: 1, kind: input, shape index: {}]
  %s2 = inlined_call_operand.vmem [shape: f32[16,1], index: 2, kind: input, shape index: {}]
  %s3 = inlined_call_operand.vmem [shape: f32[16,1], index: 3, kind: input, shape index: {}]
  %s4 = inlined_call_operand.vmem [shape: f32[1,256], index: 4, kind: input, shape index: {}]
  %s5 = inlined_call_operand.vmem [shape: bf16[16,256], index: 5, kind: output, shape index: {}]
  %s6 = sld [smem:[#allocation0]]
  $region172: #{_lambda_.23} parent=0
    _
  %s8 = ssub.s32 1, %s6
  %s9 = scalar_select 0, %s8, %s6
  $region1: #{_lambda_.23} parent=0
    #allocation2 [shape = 'u8[8192]{0}', space=vmem, size = 0x2000, scoped, tag = 'input window, operand 0']
    #allocation3 [shape = 'u8[8192]{0}', space=vmem, size = 0x2000, scoped, tag = 'input window, operand 1']
    #allocation4 [shape = 'u8[8192]{0}', space=vmem, size = 0x2000, scoped, tag = 'output window, operand 0']
    loop: start=0, step=1, limit=4
    $region2: #{_lambda_.23} parent=1 // loop_pre_header
      _
    $region3: #{_lambda_.23} parent=1 // loop_header
      %s11 = sphi 0, %s15
      %p12 = scmp.ge.s32.totalorder %s11, 4
      %s21 = sphi 0, %s23
      %s24 = sphi 0, %s21
      %s25 = sphi 0, %s24
      %s41 = sphi 0, %s25
      %s47 = sphi 0, %s49
      %s50 = sphi 0, %s47
      %s51 = sphi 0, %s50
      %s67 = sphi 0, %s51
      %s71 = sphi 0, %s71
      %s73 = sphi 0, %s71
      %s74 = sphi 0, %s73
      %s88 = sphi 0, %s74
      %s92 = sphi 0, %s92
      %s94 = sphi 0, %s92
      %s95 = sphi 0, %s94
      %s109 = sphi 0, %s95
      %s115 = sphi 0, %s117
      %s118 = sphi 0, %s115
      %s119 = sphi 0, %s118
      %s135 = sphi 0, %s119
      %s141 = sphi 0, %s143
      %s144 = sphi 0, %s141
      %s145 = sphi 0, %s144
      %s161 = sphi 0, %s145
    $region4: #{_lambda_.23} parent=1 // loop_header_branch
      %14 = sbr.rel (%p12) target = $region8
    $region5: #{_lambda_.23} parent=1 // loop_body
      %s16 = ssub.s32 %s11, 1
      %s17 = ssub.s32 %s11, 2
      %s18 = sadd.s32 %s11, 1
      %s19 = ssub.s32 %s11, %s18
      %p20 = scmp.eq.s32.totalorder %s19, 0
      %s22 = sadd.s32 %s21, 1
      %s23 = scalar_select %p20, %s21, %s22
      %p26 = pneg %p20
      %p27 = scmp.eq.s32.totalorder %s11, 1
      %p28 = por %p26, %p27
      %p29 = scmp.ne.s32.totalorder %s21, %s24
      %p30 = scmp.eq.s32.totalorder %s11, 0
      %p31 = por %p29, %p30
      %p32 = scmp.ne.s32.totalorder %s21, %s24
      %p33 = scmp.eq.s32.totalorder %s16, 1
      %p34 = por %p32, %p33
      %p35 = scmp.ne.s32.totalorder %s24, %s25
      %p36 = scmp.eq.s32.totalorder %s16, 0
      %p37 = por %p35, %p36
      %p38 = scmp.ne.s32.totalorder %s24, %s25
      %p39 = scmp.eq.s32.totalorder %s17, 1
      %p40 = por %p38, %p39
      %p42 = scmp.ne.s32.totalorder %s25, %s41
      %p43 = scmp.eq.s32.totalorder %s17, 0
      %p44 = por %p42, %p43
      %s45 = ssub.s32 %s11, %s18
      %p46 = scmp.eq.s32.totalorder %s45, 0
      %s48 = sadd.s32 %s47, 1
      %s49 = scalar_select %p46, %s47, %s48
      %p52 = pneg %p46
      %p53 = scmp.eq.s32.totalorder %s11, 1
      %p54 = por %p52, %p53
      %p55 = scmp.ne.s32.totalorder %s47, %s50
      %p56 = scmp.eq.s32.totalorder %s11, 0
      %p57 = por %p55, %p56
      %p58 = scmp.ne.s32.totalorder %s47, %s50
      %p59 = scmp.eq.s32.totalorder %s16, 1
      %p60 = por %p58, %p59
      %p61 = scmp.ne.s32.totalorder %s50, %s51
      %p62 = scmp.eq.s32.totalorder %s16, 0
      %p63 = por %p61, %p62
      %p64 = scmp.ne.s32.totalorder %s50, %s51
      %p65 = scmp.eq.s32.totalorder %s17, 1
      %p66 = por %p64, %p65
      %p68 = scmp.ne.s32.totalorder %s51, %s67
      %p69 = scmp.eq.s32.totalorder %s17, 0
      %p70 = por %p68, %p69
      %s72 = sadd.s32 %s71, 1
      %p75 = scmp.eq.s32.totalorder %s11, 1
      %p76 = scmp.ne.s32.totalorder %s71, %s73
      %p77 = scmp.eq.s32.totalorder %s11, 0
      %p78 = por %p76, %p77
      %p79 = scmp.ne.s32.totalorder %s71, %s73
      %p80 = scmp.eq.s32.totalorder %s16, 1
      %p81 = por %p79, %p80
      %p82 = scmp.ne.s32.totalorder %s73, %s74
      %p83 = scmp.eq.s32.totalorder %s16, 0
      %p84 = por %p82, %p83
      %p85 = scmp.ne.s32.totalorder %s73, %s74
      %p86 = scmp.eq.s32.totalorder %s17, 1
      %p87 = por %p85, %p86
      %p89 = scmp.ne.s32.totalorder %s74, %s88
      %p90 = scmp.eq.s32.totalorder %s17, 0
      %p91 = por %p89, %p90
      %s93 = sadd.s32 %s92, 1
      %p96 = scmp.eq.s32.totalorder %s11, 1
      %p97 = scmp.ne.s32.totalorder %s92, %s94
      %p98 = scmp.eq.s32.totalorder %s11, 0
      %p99 = por %p97, %p98
      %p100 = scmp.ne.s32.totalorder %s92, %s94
      %p101 = scmp.eq.s32.totalorder %s16, 1
      %p102 = por %p100, %p101
      %p103 = scmp.ne.s32.totalorder %s94, %s95
      %p104 = scmp.eq.s32.totalorder %s16, 0
      %p105 = por %p103, %p104
      %p106 = scmp.ne.s32.totalorder %s94, %s95
      %p107 = scmp.eq.s32.totalorder %s17, 1
      %p108 = por %p106, %p107
      %p110 = scmp.ne.s32.totalorder %s95, %s109
      %p111 = scmp.eq.s32.totalorder %s17, 0
      %p112 = por %p110, %p111
      %s113 = ssub.s32 %s11, %s18
      %p114 = scmp.eq.s32.totalorder %s113, 0
      %s116 = sadd.s32 %s115, 1
      %s117 = scalar_select %p114, %s115, %s116
      %p120 = pneg %p114
      %p121 = scmp.eq.s32.totalorder %s11, 1
      %p122 = por %p120, %p121
      %p123 = scmp.ne.s32.totalorder %s115, %s118
      %p124 = scmp.eq.s32.totalorder %s11, 0
      %p125 = por %p123, %p124
      %p126 = scmp.ne.s32.totalorder %s115, %s118
      %p127 = scmp.eq.s32.totalorder %s16, 1
      %p128 = por %p126, %p127
      %p129 = scmp.ne.s32.totalorder %s118, %s119
      %p130 = scmp.eq.s32.totalorder %s16, 0
      %p131 = por %p129, %p130
      %p132 = scmp.ne.s32.totalorder %s118, %s119
      %p133 = scmp.eq.s32.totalorder %s17, 1
      %p134 = por %p132, %p133
      %p136 = scmp.ne.s32.totalorder %s119, %s135
      %p137 = scmp.eq.s32.totalorder %s17, 0
      %p138 = por %p136, %p137
      %s139 = ssub.s32 %s11, %s18
      %p140 = scmp.eq.s32.totalorder %s139, 0
      %s142 = sadd.s32 %s141, 1
      %s143 = scalar_select %p140, %s141, %s142
      %p146 = pneg %p140
      %p147 = scmp.eq.s32.totalorder %s11, 1
      %p148 = por %p146, %p147
      %p149 = scmp.ne.s32.totalorder %s141, %s144
      %p150 = scmp.eq.s32.totalorder %s11, 0
      %p151 = por %p149, %p150
      %p152 = scmp.ne.s32.totalorder %s141, %s144
      %p153 = scmp.eq.s32.totalorder %s16, 1
      %p154 = por %p152, %p153
      %p155 = scmp.ne.s32.totalorder %s144, %s145
      %p156 = scmp.eq.s32.totalorder %s16, 0
      %p157 = por %p155, %p156
      %p158 = scmp.ne.s32.totalorder %s144, %s145
      %p159 = scmp.eq.s32.totalorder %s17, 1
      %p160 = por %p158, %p159
      %p162 = scmp.ne.s32.totalorder %s145, %s161
      %p163 = scmp.eq.s32.totalorder %s17, 0
      %p164 = por %p162, %p163
      %p165 = scmp.le.s32.totalorder 1, %s11
      %p166 = scmp.lt.s32.totalorder %s11, 3
      %p167 = pnand %p165, %p166
      %p168 = pneg %p167
      // Predicated region
      $region9: #{_lambda_.23} parent=5 // pred_check
        _
      $region10: #{_lambda_.23} parent=5 // pred_check_branch
        %170 = sbr.rel (%p167) target = $region12
      $region11: #{_lambda_.23} parent=5 // pred_region
        %s171 = ssub.s32 %s11, 1
        // Predicated region
        $region13: #{_lambda_.23} parent=11 // pred_check
          %p172 = pneg %p84
        $region14: #{_lambda_.23} parent=11 // pred_check_branch
          %174 = sbr.rel (%p172) target = $region16
        $region15: #{_lambda_.23} parent=11 // pred_region
          _
        $region16: #{_lambda_.23} parent=11 // pred_fallthru
          _
        // Predicated region
        $region17: #{_lambda_.23} parent=11 // pred_check
          %p175 = pneg %p105
        $region18: #{_lambda_.23} parent=11 // pred_check_branch
          %177 = sbr.rel (%p175) target = $region20
        $region19: #{_lambda_.23} parent=11 // pred_region
          _
        $region20: #{_lambda_.23} parent=11 // pred_fallthru
          _
      $region12: #{_lambda_.23} parent=5 // pred_fallthru
        _
      %p178 = scmp.lt.s32.totalorder %s11, 2
      // Predicated region
      $region21: #{_lambda_.23} parent=5 // pred_check
        %p179 = pneg %p178
      $region22: #{_lambda_.23} parent=5 // pred_check_branch
        %181 = sbr.rel (%p179) target = $region24
      $region23: #{_lambda_.23} parent=5 // pred_region
        // Predicated region
        $region25: #{_lambda_.23} parent=23 // pred_check
          %p182 = pneg %p31
        $region26: #{_lambda_.23} parent=23 // pred_check_branch
          %184 = sbr.rel (%p182) target = $region28
        $region27: #{_lambda_.23} parent=23 // pred_region
          %s185 = sand.u32 %s21, 1
          %s186 = sand.u32 %s21, 1
          %s187 = smul.addr %s186, 8
          %s188 = scalar_lea.vmem [#allocation2], %s187
          %s189 = smul.addr %s11, 4
          %s190 = scalar_lea.vmem %s0, %s189
          // Predicated region
          $region29: #{_lambda_.23} parent=27 // pred_check
            _
          $region30: #{_lambda_.23} parent=27 // pred_check_branch
            %192 = sbr.rel (0) target = $region32
          $region31: #{_lambda_.23} parent=27 // pred_region
            // Predicated region
            $region33: #{_lambda_.23} parent=31 // pred_check
              _
            $region34: #{_lambda_.23} parent=31 // pred_check_branch
              %194 = sbr.rel target = $region36
            $region35: #{_lambda_.23} parent=31 // pred_region
              // Predicated region
              $region48: #{_lambda_.23} parent=35 // pred_check
                _
              $region49: #{_lambda_.23} parent=35 // pred_check_branch
                %212 = sbr.rel (0) target = $region51
              $region50: #{_lambda_.23} parent=35 // pred_region
                loop: start=0, step=1, limit=1
                $region52: #{_lambda_.23} parent=50 // loop_pre_header
                  _
                $region53: #{_lambda_.23} parent=50 // loop_header
                  %s214 = sphi 0, %s218
                  %p215 = scmp.ge.s32.totalorder %s214, 1
                  %s219 = sphi %s190, %s190
                  %s220 = sphi %s188, %s188
                $region54: #{_lambda_.23} parent=50 // loop_header_branch
                  %217 = sbr.rel (%p215) target = $region58
                $region55: #{_lambda_.23} parent=50 // loop_body
                  _
                $region56: #{_lambda_.23} parent=50 // loop_footer
                  %s218 = sadd.s32 1, %s214
                $region57: #{_lambda_.23} parent=50 // loop_footer_branch
                  %213 = sbr.rel target = $region53
                $region58: #{_lambda_.23} parent=50 // loop_exit
                  _
                %s222 = ssub.s32 16, 1
                loop: start=0, step=1, limit=1
                $region59: #{_lambda_.23} parent=50 // loop_pre_header
                  _
                $region60: #{_lambda_.23} parent=50 // loop_header
                  %s224 = sphi 0, %s228
                  %p225 = scmp.ge.s32.totalorder %s224, 1
                  %s229 = sphi %s190, %s190
                  %s230 = sphi %s188, %s188
                $region61: #{_lambda_.23} parent=50 // loop_header_branch
                  %227 = sbr.rel (%p225) target = $region65
                $region62: #{_lambda_.23} parent=50 // loop_body
                  %v231 = vld [vmem:[%s229] sm:%s222]
                  %232 = vst [vmem:[%s230] sm:%s222] %v231
                  %v233 = vld [vmem:[%s229 + $0x8] sm:%s222]
                  %234 = vst [vmem:[%s230 + $0x4] sm:%s222] %v233
                $region63: #{_lambda_.23} parent=50 // loop_footer
                  %s228 = sadd.s32 1, %s224
                $region64: #{_lambda_.23} parent=50 // loop_footer_branch
                  %223 = sbr.rel target = $region60
                $region65: #{_lambda_.23} parent=50 // loop_exit
                  _
              $region51: #{_lambda_.23} parent=35 // pred_fallthru
                _
            $region36: #{_lambda_.23} parent=31 // pred_fallthru
              _
            // Predicated region
            $region37: #{_lambda_.23} parent=31 // pred_check
              _
            $region38: #{_lambda_.23} parent=31 // pred_check_branch
              %196 = sbr.rel (0) target = $region40
            $region39: #{_lambda_.23} parent=31 // pred_region
              %s198 = ssub.s32 16, 1
              loop: start=0, step=1, limit=1
              $region41: #{_lambda_.23} parent=39 // loop_pre_header
                _
              $region42: #{_lambda_.23} parent=39 // loop_header
                %s200 = sphi 0, %s204
                %p201 = scmp.ge.s32.totalorder %s200, 1
                %s205 = sphi %s190, %s190
                %s206 = sphi %s188, %s188
              $region43: #{_lambda_.23} parent=39 // loop_header_branch
                %203 = sbr.rel (%p201) target = $region47
              $region44: #{_lambda_.23} parent=39 // loop_body
                %v207 = vld [vmem:[%s205] sm:%s198]
                %208 = vst [vmem:[%s206] sm:%s198] %v207
                %v209 = vld [vmem:[%s205 + $0x8] sm:%s198]
                %210 = vst [vmem:[%s206 + $0x4] sm:%s198] %v209
              $region45: #{_lambda_.23} parent=39 // loop_footer
                %s204 = sadd.s32 1, %s200
              $region46: #{_lambda_.23} parent=39 // loop_footer_branch
                %199 = sbr.rel target = $region42
              $region47: #{_lambda_.23} parent=39 // loop_exit
                _
            $region40: #{_lambda_.23} parent=31 // pred_fallthru
              _
          $region32: #{_lambda_.23} parent=27 // pred_fallthru
            _
          %235 = vnop
        $region28: #{_lambda_.23} parent=23 // pred_fallthru
          _
        // Predicated region
        $region66: #{_lambda_.23} parent=23 // pred_check
          %p236 = pneg %p57
        $region67: #{_lambda_.23} parent=23 // pred_check_branch
          %238 = sbr.rel (%p236) target = $region69
        $region68: #{_lambda_.23} parent=23 // pred_region
          %s239 = sand.u32 %s47, 1
          %s240 = sand.u32 %s47, 1
          %s241 = smul.addr %s240, 8
          %s242 = scalar_lea.vmem [#allocation3], %s241
          %s243 = smul.addr %s11, 4
          %s244 = scalar_lea.vmem %s1, %s243
          // Predicated region
          $region70: #{_lambda_.23} parent=68 // pred_check
            _
          $region71: #{_lambda_.23} parent=68 // pred_check_branch
            %246 = sbr.rel (0) target = $region73
          $region72: #{_lambda_.23} parent=68 // pred_region
            // Predicated region
            $region74: #{_lambda_.23} parent=72 // pred_check
              _
            $region75: #{_lambda_.23} parent=72 // pred_check_branch
              %248 = sbr.rel target = $region77
            $region76: #{_lambda_.23} parent=72 // pred_region
              // Predicated region
              $region89: #{_lambda_.23} parent=76 // pred_check
                _
              $region90: #{_lambda_.23} parent=76 // pred_check_branch
                %266 = sbr.rel (0) target = $region92
              $region91: #{_lambda_.23} parent=76 // pred_region
                loop: start=0, step=1, limit=1
                $region93: #{_lambda_.23} parent=91 // loop_pre_header
                  _
                $region94: #{_lambda_.23} parent=91 // loop_header
                  %s268 = sphi 0, %s272
                  %p269 = scmp.ge.s32.totalorder %s268, 1
                  %s273 = sphi %s244, %s244
                  %s274 = sphi %s242, %s242
                $region95: #{_lambda_.23} parent=91 // loop_header_branch
                  %271 = sbr.rel (%p269) target = $region99
                $region96: #{_lambda_.23} parent=91 // loop_body
                  _
                $region97: #{_lambda_.23} parent=91 // loop_footer
                  %s272 = sadd.s32 1, %s268
                $region98: #{_lambda_.23} parent=91 // loop_footer_branch
                  %267 = sbr.rel target = $region94
                $region99: #{_lambda_.23} parent=91 // loop_exit
                  _
                %s276 = ssub.s32 16, 1
                loop: start=0, step=1, limit=1
                $region100: #{_lambda_.23} parent=91 // loop_pre_header
                  _
                $region101: #{_lambda_.23} parent=91 // loop_header
                  %s278 = sphi 0, %s282
                  %p279 = scmp.ge.s32.totalorder %s278, 1
                  %s283 = sphi %s244, %s244
                  %s284 = sphi %s242, %s242
                $region102: #{_lambda_.23} parent=91 // loop_header_branch
                  %281 = sbr.rel (%p279) target = $region106
                $region103: #{_lambda_.23} parent=91 // loop_body
                  %v285 = vld [vmem:[%s283] sm:%s276]
                  %286 = vst [vmem:[%s284] sm:%s276] %v285
                  %v287 = vld [vmem:[%s283 + $0x8] sm:%s276]
                  %288 = vst [vmem:[%s284 + $0x4] sm:%s276] %v287
                $region104: #{_lambda_.23} parent=91 // loop_footer
                  %s282 = sadd.s32 1, %s278
                $region105: #{_lambda_.23} parent=91 // loop_footer_branch
                  %277 = sbr.rel target = $region101
                $region106: #{_lambda_.23} parent=91 // loop_exit
                  _
              $region92: #{_lambda_.23} parent=76 // pred_fallthru
                _
            $region77: #{_lambda_.23} parent=72 // pred_fallthru
              _
            // Predicated region
            $region78: #{_lambda_.23} parent=72 // pred_check
              _
            $region79: #{_lambda_.23} parent=72 // pred_check_branch
              %250 = sbr.rel (0) target = $region81
            $region80: #{_lambda_.23} parent=72 // pred_region
              %s252 = ssub.s32 16, 1
              loop: start=0, step=1, limit=1
              $region82: #{_lambda_.23} parent=80 // loop_pre_header
                _
              $region83: #{_lambda_.23} parent=80 // loop_header
                %s254 = sphi 0, %s258
                %p255 = scmp.ge.s32.totalorder %s254, 1
                %s259 = sphi %s244, %s244
                %s260 = sphi %s242, %s242
              $region84: #{_lambda_.23} parent=80 // loop_header_branch
                %257 = sbr.rel (%p255) target = $region88
              $region85: #{_lambda_.23} parent=80 // loop_body
                %v261 = vld [vmem:[%s259] sm:%s252]
                %262 = vst [vmem:[%s260] sm:%s252] %v261
                %v263 = vld [vmem:[%s259 + $0x8] sm:%s252]
                %264 = vst [vmem:[%s260 + $0x4] sm:%s252] %v263
              $region86: #{_lambda_.23} parent=80 // loop_footer
                %s258 = sadd.s32 1, %s254
              $region87: #{_lambda_.23} parent=80 // loop_footer_branch
                %253 = sbr.rel target = $region83
              $region88: #{_lambda_.23} parent=80 // loop_exit
                _
            $region81: #{_lambda_.23} parent=72 // pred_fallthru
              _
          $region73: #{_lambda_.23} parent=68 // pred_fallthru
            _
          %289 = vnop
        $region69: #{_lambda_.23} parent=23 // pred_fallthru
          _
        // Predicated region
        $region107: #{_lambda_.23} parent=23 // pred_check
          %p290 = pneg %p125
        $region108: #{_lambda_.23} parent=23 // pred_check_branch
          %292 = sbr.rel (%p290) target = $region110
        $region109: #{_lambda_.23} parent=23 // pred_region
          %p293 = scmp.lt.s32.totalorder %s11, 1
          %s294 = scalar_select %p293, %s11, 1
          %s295 = scalar_lea.vmem %s4, %s294
        $region110: #{_lambda_.23} parent=23 // pred_fallthru
          _
      $region24: #{_lambda_.23} parent=5 // pred_fallthru
        _
      %p296 = scmp.le.s32.totalorder 1, %s11
      %p297 = scmp.lt.s32.totalorder %s11, 3
      %p298 = pnand %p296, %p297
      %p299 = pneg %p298
      // Predicated region
      $region111: #{_lambda_.23} parent=5 // pred_check
        _
      $region112: #{_lambda_.23} parent=5 // pred_check_branch
        %301 = sbr.rel (%p298) target = $region114
      $region113: #{_lambda_.23} parent=5 // pred_region
        %s302 = ssub.s32 %s11, 1
        %s303 = sand.u32 %s24, 1
        %s304 = sand.u32 %s24, 1
        %s305 = smul.addr %s304, 8
        %s306 = scalar_lea.vmem [#allocation2], %s305
        // Predicated region
        $region115: #{_lambda_.23} parent=113 // pred_check
          %p307 = pneg %p37
        $region116: #{_lambda_.23} parent=113 // pred_check_branch
          %309 = sbr.rel (%p307) target = $region118
        $region117: #{_lambda_.23} parent=113 // pred_region
          _
        $region118: #{_lambda_.23} parent=113 // pred_fallthru
          _
        %s310 = sand.u32 %s50, 1
        %s311 = sand.u32 %s50, 1
        %s312 = smul.addr %s311, 8
        %s313 = scalar_lea.vmem [#allocation3], %s312
        // Predicated region
        $region119: #{_lambda_.23} parent=113 // pred_check
          %p314 = pneg %p63
        $region120: #{_lambda_.23} parent=113 // pred_check_branch
          %316 = sbr.rel (%p314) target = $region122
        $region121: #{_lambda_.23} parent=113 // pred_region
          _
        $region122: #{_lambda_.23} parent=113 // pred_fallthru
          _
        %s317 = sand.u32 %s24, 1
        %s318 = sand.u32 %s24, 1
        %s319 = smul.addr %s318, 8
        %s320 = scalar_lea.vmem [#allocation2], %s319
        %p321 = pneg %p37
        %p322 = pneg %p34
        %s323 = sand.u32 %s50, 1
        %s324 = sand.u32 %s50, 1
        %s325 = smul.addr %s324, 8
        %s326 = scalar_lea.vmem [#allocation3], %s325
        %p327 = pneg %p63
        %p328 = pneg %p60
        %p329 = pneg %p84
        %p330 = pneg %p81
        %p331 = pneg %p105
        %p332 = pneg %p102
        %p333 = scmp.lt.s32.totalorder %s16, 1
        %s334 = scalar_select %p333, %s16, 1
        %s335 = scalar_lea.vmem %s4, %s334
        %p336 = pneg %p131
        %p337 = pneg %p128
        %p338 = pneg %p157
        %p339 = pneg %p154
        %s340 = sand.u32 %s144, 1
        %s341 = sand.u32 %s144, 1
        %s342 = smul.addr %s341, 8
        %s343 = scalar_lea.vmem [#allocation4], %s342
        %p344 = scmp.lt.s32.totalorder %s16, 1
        %s345 = scalar_select %p344, %s16, 1
        %s346 = scalar_lea.vmem %s4, %s345
        %v347 = vld [vmem:[%s2] sm:$0xff]
        %v348 = vld [vmem:[%s2 + $0x8] sm:$0xff]
        %v349 = vld [vmem:[%s306] sm:$0xf]
        %v350 = vld [vmem:[%s306 + $0x4] sm:$0xf]
        %v351 = vunpack.c.l.bf16 %v349
        %v352 = vunpack.c.l.bf16 %v350
        %354 = vset.pattern.permute.xlu0 0
        %355 = vperm.xlu0 %354, %v347
        %v356 = vpop.permute.xlu0 %355
        %359 = vset.pattern.permute.xlu0 0
        %360 = vperm.xlu0 %359, %v348
        %v361 = vpop.permute.xlu0 %360
        %v363 = vmul.f32 %v356, %v351
        %v364 = vmul.f32 %v361, %v352
        %v365 = vld [vmem:[%s3] sm:$0xff]
        %v366 = vld [vmem:[%s3 + $0x8] sm:$0xff]
        %v367 = vld [vmem:[%s346] sm:$0x1]
        %369 = vset.pattern.permute.xlu0 0
        %370 = vperm.xlu0 %369, %v365
        %v371 = vpop.permute.xlu0 %370
        %374 = vset.pattern.permute.xlu0 0
        %375 = vperm.xlu0 %374, %v366
        %v376 = vpop.permute.xlu0 %375
        %v379 = vlaneseq
        %v380 = vshrl.u32 %v379, 7
        %v381 = vsub.s32 0, %v380
        %v382 = vrot.slane %v367, %v381
        %v384 = vmul.f32 %v371, %v382
        %v385 = vmul.f32 %v376, %v382
        %v386 = vadd.f32 %v363, %v384
        %v387 = vadd.f32 %v364, %v385
        %v388 = vmax.f32 %v386, 0.0
        %v389 = vmax.f32 %v387, 0.0
        %v390 = vld [vmem:[%s313] sm:$0xf]
        %v391 = vld [vmem:[%s313 + $0x4] sm:$0xf]
        %v392 = vunpack.c.l.bf16 %v390
        %v393 = vunpack.c.l.bf16 %v391
        %v394 = vadd.f32 %v392, %v388
        %v395 = vadd.f32 %v393, %v389
        %v396 = vmax.f32 %v394, 0.0
        %v397 = vmax.f32 %v395, 0.0
        %v398 = vpack.c.bf16 %v397, %v396
        %v400 = vunpack.c.l.b16 %v398
        %v401 = vunpack.c.h.b16 %v398
        %v402 = vpack.c.b16 %v400, %v400
        %v403 = vpack.c.b16 %v401, %v401
        %406 = vst [vmem:[%s343] sm:$0xf] %v402
        %407 = vst [vmem:[%s343 + $0x4] sm:$0xf] %v403
        %s408 = sand.u32 %s144, 1
        %s409 = sand.u32 %s144, 1
        %s410 = smul.addr %s409, 8
        %s411 = scalar_lea.vmem [#allocation4], %s410
        // Predicated region
        $region123: #{_lambda_.23} parent=113 // pred_check
          %p412 = pneg %p154
        $region124: #{_lambda_.23} parent=113 // pred_check_branch
          %414 = sbr.rel (%p412) target = $region126
        $region125: #{_lambda_.23} parent=113 // pred_region
          %s415 = smul.addr %s16, 4
          %s416 = scalar_lea.vmem %s5, %s415
          // Predicated region
          $region127: #{_lambda_.23} parent=125 // pred_check
            _
          $region128: #{_lambda_.23} parent=125 // pred_check_branch
            %418 = sbr.rel (0) target = $region130
          $region129: #{_lambda_.23} parent=125 // pred_region
            // Predicated region
            $region131: #{_lambda_.23} parent=129 // pred_check
              _
            $region132: #{_lambda_.23} parent=129 // pred_check_branch
              %420 = sbr.rel target = $region134
            $region133: #{_lambda_.23} parent=129 // pred_region
              // Predicated region
              $region146: #{_lambda_.23} parent=133 // pred_check
                _
              $region147: #{_lambda_.23} parent=133 // pred_check_branch
                %438 = sbr.rel (0) target = $region149
              $region148: #{_lambda_.23} parent=133 // pred_region
                loop: start=0, step=1, limit=1
                $region150: #{_lambda_.23} parent=148 // loop_pre_header
                  _
                $region151: #{_lambda_.23} parent=148 // loop_header
                  %s440 = sphi 0, %s444
                  %p441 = scmp.ge.s32.totalorder %s440, 1
                  %s445 = sphi %s411, %s411
                  %s446 = sphi %s416, %s416
                $region152: #{_lambda_.23} parent=148 // loop_header_branch
                  %443 = sbr.rel (%p441) target = $region156
                $region153: #{_lambda_.23} parent=148 // loop_body
                  _
                $region154: #{_lambda_.23} parent=148 // loop_footer
                  %s444 = sadd.s32 1, %s440
                $region155: #{_lambda_.23} parent=148 // loop_footer_branch
                  %439 = sbr.rel target = $region151
                $region156: #{_lambda_.23} parent=148 // loop_exit
                  _
                %s448 = ssub.s32 16, 1
                loop: start=0, step=1, limit=1
                $region157: #{_lambda_.23} parent=148 // loop_pre_header
                  _
                $region158: #{_lambda_.23} parent=148 // loop_header
                  %s450 = sphi 0, %s454
                  %p451 = scmp.ge.s32.totalorder %s450, 1
                  %s455 = sphi %s411, %s411
                  %s456 = sphi %s416, %s416
                $region159: #{_lambda_.23} parent=148 // loop_header_branch
                  %453 = sbr.rel (%p451) target = $region163
                $region160: #{_lambda_.23} parent=148 // loop_body
                  %v457 = vld [vmem:[%s455] sm:%s448]
                  %458 = vst [vmem:[%s456] sm:%s448] %v457
                  %v459 = vld [vmem:[%s455 + $0x4] sm:%s448]
                  %460 = vst [vmem:[%s456 + $0x8] sm:%s448] %v459
                $region161: #{_lambda_.23} parent=148 // loop_footer
                  %s454 = sadd.s32 1, %s450
                $region162: #{_lambda_.23} parent=148 // loop_footer_branch
                  %449 = sbr.rel target = $region158
                $region163: #{_lambda_.23} parent=148 // loop_exit
                  _
              $region149: #{_lambda_.23} parent=133 // pred_fallthru
                _
            $region134: #{_lambda_.23} parent=129 // pred_fallthru
              _
            // Predicated region
            $region135: #{_lambda_.23} parent=129 // pred_check
              _
            $region136: #{_lambda_.23} parent=129 // pred_check_branch
              %422 = sbr.rel (0) target = $region138
            $region137: #{_lambda_.23} parent=129 // pred_region
              %s424 = ssub.s32 16, 1
              loop: start=0, step=1, limit=1
              $region139: #{_lambda_.23} parent=137 // loop_pre_header
                _
              $region140: #{_lambda_.23} parent=137 // loop_header
                %s426 = sphi 0, %s430
                %p427 = scmp.ge.s32.totalorder %s426, 1
                %s431 = sphi %s411, %s411
                %s432 = sphi %s416, %s416
              $region141: #{_lambda_.23} parent=137 // loop_header_branch
                %429 = sbr.rel (%p427) target = $region145
              $region142: #{_lambda_.23} parent=137 // loop_body
                %v433 = vld [vmem:[%s431] sm:%s424]
                %434 = vst [vmem:[%s432] sm:%s424] %v433
                %v435 = vld [vmem:[%s431 + $0x4] sm:%s424]
                %436 = vst [vmem:[%s432 + $0x8] sm:%s424] %v435
              $region143: #{_lambda_.23} parent=137 // loop_footer
                %s430 = sadd.s32 1, %s426
              $region144: #{_lambda_.23} parent=137 // loop_footer_branch
                %425 = sbr.rel target = $region140
              $region145: #{_lambda_.23} parent=137 // loop_exit
                _
            $region138: #{_lambda_.23} parent=129 // pred_fallthru
              _
          $region130: #{_lambda_.23} parent=125 // pred_fallthru
            _
          %461 = vnop
        $region126: #{_lambda_.23} parent=113 // pred_fallthru
          _
      $region114: #{_lambda_.23} parent=5 // pred_fallthru
        _
      %p462 = scmp.le.s32.totalorder 2, %s11
      // Predicated region
      $region164: #{_lambda_.23} parent=5 // pred_check
        %p463 = pneg %p462
      $region165: #{_lambda_.23} parent=5 // pred_check_branch
        %465 = sbr.rel (%p463) target = $region167
      $region166: #{_lambda_.23} parent=5 // pred_region
        %s466 = ssub.s32 %s11, 2
        // Predicated region
        $region168: #{_lambda_.23} parent=166 // pred_check
          %p467 = pneg %p160
        $region169: #{_lambda_.23} parent=166 // pred_check_branch
          %469 = sbr.rel (%p467) target = $region171
        $region170: #{_lambda_.23} parent=166 // pred_region
          %s470 = sand.u32 %s145, 1
          %s471 = sand.u32 %s145, 1
          %s472 = smul.addr %s471, 8
          %s473 = scalar_lea.vmem [#allocation4], %s472
        $region171: #{_lambda_.23} parent=166 // pred_fallthru
          _
      $region167: #{_lambda_.23} parent=5 // pred_fallthru
        _
    $region6: #{_lambda_.23} parent=1 // loop_footer
      %s15 = sadd.s32 1, %s11
    $region7: #{_lambda_.23} parent=1 // loop_footer_branch
      %10 = sbr.rel target = $region3
    $region8: #{_lambda_.23} parent=1 // loop_exit
      _

</llo_original>
